<compile_context>
chip_gen: v7x
topology: tpu7x:2x2x1
jax: 0.10.0
libtpu: 0.0.40
codegen_flags: <defaults>
</compile_context>

<pallas_src>
import functools

import jax
import jax.numpy as jnp
from jax.experimental import pallas as pl
from jax.experimental.pallas import tpu as pltpu

C_IN = 384
C_MID = 256
C_OUT = 256
BN_EPS = 1e-3


def _conv_stats_kernel(x_ref, w_ref, v_ref, ps_ref, pss_ref, *, tl, hw, needs_mask):
    # x_ref: (C_IN, TL), w_ref: (C_MID, C_IN)
    v = jnp.dot(w_ref[...], x_ref[...], preferred_element_type=jnp.float32)  # (C_MID, TL)
    v_ref[...] = v
    if needs_mask:
        lane = jax.lax.broadcasted_iota(jnp.int32, v.shape, 1) + pl.program_id(1) * tl
        v = jnp.where(lane < hw, v, 0.0)
    ps_ref[...] = jnp.sum(v, axis=1, keepdims=True)        # (C_MID, 1)
    pss_ref[...] = jnp.sum(v * v, axis=1, keepdims=True)   # (C_MID, 1)


def _bn_relu_conv_stats_kernel(v1_ref, s_ref, b_ref, w_ref, v4_ref, ps_ref, pss_ref,
                               *, tl, hw, needs_mask):
    # v1_ref: (C_MID, TL), s_ref/b_ref: (C_MID, 1), w_ref: (C_OUT, C_MID)
    v3 = jnp.maximum(v1_ref[...] * s_ref[...] + b_ref[...], 0.0)            # fused BN+ReLU
    v4 = jnp.dot(w_ref[...], v3, preferred_element_type=jnp.float32)        # (C_OUT, TL)
    v4_ref[...] = v4
    if needs_mask:
        lane = jax.lax.broadcasted_iota(jnp.int32, v4.shape, 1) + pl.program_id(1) * tl
        v4 = jnp.where(lane < hw, v4, 0.0)
    ps_ref[...] = jnp.sum(v4, axis=1, keepdims=True)
    pss_ref[...] = jnp.sum(v4 * v4, axis=1, keepdims=True)


def _bn_relu_kernel(v_ref, s_ref, b_ref, o_ref):
    o_ref[...] = jnp.maximum(v_ref[...] * s_ref[...] + b_ref[...], 0.0)


def _fold_bn(psum, psumsq, gamma, beta, count):
    """Fold batch statistics + affine into a single (C,1) scale/bias pair."""
    s = jnp.sum(psum, axis=(0, 1)).reshape(-1)
    ss = jnp.sum(psumsq, axis=(0, 1)).reshape(-1)
    mean = s / count
    # One-pass (E[x^2] - E[x]^2) biased variance; clamped >= 0 for safety.
    var = jnp.maximum(ss / count - mean * mean, 0.0)
    inv = gamma * jax.lax.rsqrt(var + BN_EPS)
    scale = inv.reshape(-1, 1)
    bias = (beta - mean * inv).reshape(-1, 1)
    return scale, bias


@jax.jit
def model_forward(x_nchw, w1, g1, b1, w2, g2, b2):
    """x_nchw: (N, 384, H, W) f32 -> (N, 256, H, W) f32 (train-mode BN)."""
    N, C, H, W = x_nchw.shape
    assert C == C_IN
    HW = H * W

    # NCHW -> (N, C, H*W): pure reshape, no transpose / extra HBM traffic.
    x = x_nchw.reshape(N, C_IN, HW)

    # torch conv weight (Cout, Cin, 1, 1) -> (Cout, Cin), used directly as LHS.
    w1m = w1.reshape(C_MID, C_IN)
    w2m = w2.reshape(C_OUT, C_MID)

    # Lane tile: 128-aligned, capped so double-buffered tiles stay small even
    # on v7x's 64 MiB VMEM (<~8 MiB total footprint per pass at TL=1024).
    TL = min(1024, -(-HW // 128) * 128)
    L = pl.cdiv(HW, TL)
    needs_mask = (HW % TL) != 0
    count = jnp.float32(N * HW)

    sem = pltpu.CompilerParams(dimension_semantics=("parallel", "parallel"))

    def act_spec(channels):
        return pl.BlockSpec((None, channels, TL), lambda n, l: (n, 0, l))

    def stats_spec(channels):
        return pl.BlockSpec((None, None, channels, 1), lambda n, l: (n, l, 0, 0))

    def param_spec(channels):
        return pl.BlockSpec((channels, 1), lambda n, l: (0, 0))

    # ---------------- pass 1: conv1 + BN1 partial statistics ----------------
    v1, ps1, pss1 = pl.pallas_call(
        functools.partial(_conv_stats_kernel, tl=TL, hw=HW, needs_mask=needs_mask),
        out_shape=(
            jax.ShapeDtypeStruct((N, C_MID, HW), jnp.float32),
            jax.ShapeDtypeStruct((N, L, C_MID, 1), jnp.float32),
            jax.ShapeDtypeStruct((N, L, C_MID, 1), jnp.float32),
        ),
        grid_spec=pltpu.PrefetchScalarGridSpec(
            num_scalar_prefetch=0,
            grid=(N, L),
            in_specs=[
                act_spec(C_IN),
                pl.BlockSpec((C_MID, C_IN), lambda n, l: (0, 0)),   # resident weights
            ],
            out_specs=[act_spec(C_MID), stats_spec(C_MID), stats_spec(C_MID)],
        ),
        compiler_params=sem,
        cost_estimate=pl.CostEstimate(
            flops=int(2 * N * HW * C_IN * C_MID),
            transcendentals=0,
            bytes_accessed=int(4 * (N * HW * (C_IN + C_MID) + C_IN * C_MID)),
        ),
    )(x, w1m)

    scale1, bias1 = _fold_bn(ps1, pss1, g1, b1, count)

    # --------- pass 2: fused BN1+ReLU -> conv2 + BN2 partial statistics ---------
    v4, ps2, pss2 = pl.pallas_call(
        functools.partial(_bn_relu_conv_stats_kernel, tl=TL, hw=HW, needs_mask=needs_mask),
        out_shape=(
            jax.ShapeDtypeStruct((N, C_OUT, HW), jnp.float32),
            jax.ShapeDtypeStruct((N, L, C_OUT, 1), jnp.float32),
            jax.ShapeDtypeStruct((N, L, C_OUT, 1), jnp.float32),
        ),
        grid_spec=pltpu.PrefetchScalarGridSpec(
            num_scalar_prefetch=0,
            grid=(N, L),
            in_specs=[
                act_spec(C_MID),
                param_spec(C_MID),
                param_spec(C_MID),
                pl.BlockSpec((C_OUT, C_MID), lambda n, l: (0, 0)),  # resident weights
            ],
            out_specs=[act_spec(C_OUT), stats_spec(C_OUT), stats_spec(C_OUT)],
        ),
        compiler_params=sem,
        cost_estimate=pl.CostEstimate(
            flops=int(2 * N * HW * C_MID * C_OUT + 3 * N * HW * C_MID),
            transcendentals=0,
            bytes_accessed=int(4 * (N * HW * (C_MID + C_OUT) + C_MID * C_OUT)),
        ),
    )(v1, scale1, bias1, w2m)

    scale2, bias2 = _fold_bn(ps2, pss2, g2, b2, count)

    # ---------------- pass 3: fused BN2 + ReLU ----------------
    out = pl.pallas_call(
        _bn_relu_kernel,
        out_shape=jax.ShapeDtypeStruct((N, C_OUT, HW), jnp.float32),
        grid_spec=pltpu.PrefetchScalarGridSpec(
            num_scalar_prefetch=0,
            grid=(N, L),
            in_specs=[act_spec(C_OUT), param_spec(C_OUT), param_spec(C_OUT)],
            out_specs=act_spec(C_OUT),
        ),
        compiler_params=sem,
        cost_estimate=pl.CostEstimate(
            flops=int(3 * N * HW * C_OUT),
            transcendentals=0,
            bytes_accessed=int(4 * 2 * N * HW * C_OUT),
        ),
    )(v4, scale2, bias2)

    # (N, C_OUT, H*W) -> NCHW: pure reshape, no transpose.
    return out.reshape(N, C_OUT, H, W)


if __name__ == "__main__":
    key = jax.random.PRNGKey(0)
    k_x, k_w1, k_w2 = jax.random.split(key, 3)

    # Small spatial size (channels fixed by the module: 384 -> 256 -> 256).
    N, H, W = 2, 16, 16
    x = jax.random.normal(k_x, (N, C_IN, H, W), dtype=jnp.float32)

    # Deterministic parameter init; PyTorch default BN affine: gamma=1, beta=0.
    w1 = jax.random.normal(k_w1, (C_MID, C_IN, 1, 1), dtype=jnp.float32) * (1.0 / C_IN) ** 0.5
    w2 = jax.random.normal(k_w2, (C_OUT, C_MID, 1, 1), dtype=jnp.float32) * (1.0 / C_MID) ** 0.5
    g1 = jnp.ones((C_MID,), dtype=jnp.float32)
    b1 = jnp.zeros((C_MID,), dtype=jnp.float32)
    g2 = jnp.ones((C_OUT,), dtype=jnp.float32)
    b2 = jnp.zeros((C_OUT,), dtype=jnp.float32)

    out = model_forward(x, w1, g1, b1, w2, g2, b2)
    jax.block_until_ready(out)

    # Pure-JAX reference (two-pass variance, like torch BN in train mode).
    def ref(x_nchw):
        x_mc = jnp.transpose(x_nchw, (0, 2, 3, 1)).reshape(-1, C_IN)
        v1 = x_mc @ w1.reshape(C_MID, C_IN).T
        m1 = v1.mean(0)
        vv1 = ((v1 - m1) ** 2).mean(0)
        v3 = jnp.maximum((v1 - m1) / jnp.sqrt(vv1 + BN_EPS) * g1 + b1, 0.0)
        v4 = v3 @ w2.reshape(C_OUT, C_MID).T
        m2 = v4.mean(0)
        vv2 = ((v4 - m2) ** 2).mean(0)
        v6 = jnp.maximum((v4 - m2) / jnp.sqrt(vv2 + BN_EPS) * g2 + b2, 0.0)
        return v6.reshape(N, H, W, C_OUT).transpose(0, 3, 1, 2)

    expected = ref(x)
    assert out.shape == (N, C_OUT, H, W)
    err = float(jnp.max(jnp.abs(out - expected)))
    assert jnp.allclose(out, expected, atol=2e-4, rtol=2e-4), err
    print("KERNEL_OK")
</pallas_src>

<mosaic_0001>
module attributes {stable_mosaic.version = 11 : i64} {
  func.func @_conv_stats_kernel(%arg0: i32, %arg1: i32, %arg2: memref<1x384x256xf32, #tpu.memory_space<vmem>>, %arg3: memref<256x384xf32, #tpu.memory_space<vmem>>, %arg4: memref<1x256x256xf32, #tpu.memory_space<vmem>>, %arg5: memref<1x1x256x1xf32, #tpu.memory_space<vmem>>, %arg6: memref<1x1x256x1xf32, #tpu.memory_space<vmem>>) attributes {dimension_semantics = [#tpu.dimension_semantics<parallel>, #tpu.dimension_semantics<parallel>], iteration_bounds = array<i64: 2, 1>, scalar_prefetch = 0 : i64, scratch_operands = 0 : i64, tpu.core_type = #tpu.core_type<tc>, window_params = [{transform_indices = @transform_0, window_bounds = array<i64: 1, 384, 256>}, {pipeline_mode = #tpu.pipeline_mode<synchronous>, transform_indices = @transform_1, window_bounds = array<i64: 256, 384>}, {transform_indices = @transform_2, window_bounds = array<i64: 1, 256, 256>}, {transform_indices = @transform_3, window_bounds = array<i64: 1, 1, 256, 1>}, {transform_indices = @transform_4, window_bounds = array<i64: 1, 1, 256, 1>}]} {
    %c0 = arith.constant 0 : index
    %c0_0 = arith.constant 0 : index
    %0 = vector.load %arg3[%c0, %c0_0] : memref<256x384xf32, #tpu.memory_space<vmem>>, vector<256x384xf32>
    %c0_1 = arith.constant 0 : index
    %c0_2 = arith.constant 0 : index
    %c0_3 = arith.constant 0 : index
    %1 = vector.load %arg2[%c0_1, %c0_2, %c0_3] : memref<1x384x256xf32, #tpu.memory_space<vmem>>, vector<1x384x256xf32>
    %2 = vector.shape_cast %1 : vector<1x384x256xf32> to vector<384x256xf32>
    %cst = arith.constant dense<0.000000e+00> : vector<256x256xf32>
    %3 = tpu.matmul %0, %2, %cst {dimension_numbers = #tpu.dot_dimension_numbers<[1], [0], [0], [1], [0, 0, 1, 1], [], []>} : vector<256x384xf32>, vector<384x256xf32>, vector<256x256xf32> -> vector<256x256xf32>
    %c0_4 = arith.constant 0 : index
    %c0_5 = arith.constant 0 : index
    %c0_6 = arith.constant 0 : index
    %4 = vector.load %arg4[%c0_4, %c0_5, %c0_6] : memref<1x256x256xf32, #tpu.memory_space<vmem>>, vector<1x256x256xf32>
    %5 = vector.shape_cast %4 : vector<1x256x256xf32> to vector<256x256xf32>
    %6 = vector.shape_cast %3 : vector<256x256xf32> to vector<1x256x256xf32>
    tpu.vector_store %arg4[%c0_4, %c0_5, %c0_6], %6 {strides = array<i32>} : memref<1x256x256xf32, #tpu.memory_space<vmem>>, vector<1x256x256xf32>,
    %cst_7 = arith.constant dense<0.000000e+00> : vector<256xf32>
    %7 = vector.multi_reduction <add>, %3, %cst_7 [1] : vector<256x256xf32> to vector<256xf32>
    %8 = vector.shape_cast %7 : vector<256xf32> to vector<256x1xf32>
    %c0_8 = arith.constant 0 : index
    %c0_9 = arith.constant 0 : index
    %c0_10 = arith.constant 0 : index
    %c0_11 = arith.constant 0 : index
    %9 = vector.load %arg5[%c0_8, %c0_9, %c0_10, %c0_11] : memref<1x1x256x1xf32, #tpu.memory_space<vmem>>, vector<1x1x256x1xf32>
    %10 = vector.shape_cast %9 : vector<1x1x256x1xf32> to vector<256x1xf32>
    %11 = vector.shape_cast %8 : vector<256x1xf32> to vector<1x1x256x1xf32>
    tpu.vector_store %arg5[%c0_8, %c0_9, %c0_10, %c0_11], %11 {strides = array<i32>} : memref<1x1x256x1xf32, #tpu.memory_space<vmem>>, vector<1x1x256x1xf32>,
    %12 = arith.mulf %3, %3 : vector<256x256xf32>
    %cst_12 = arith.constant dense<0.000000e+00> : vector<256xf32>
    %13 = vector.multi_reduction <add>, %12, %cst_12 [1] : vector<256x256xf32> to vector<256xf32>
    %14 = vector.shape_cast %13 : vector<256xf32> to vector<256x1xf32>
    %c0_13 = arith.constant 0 : index
    %c0_14 = arith.constant 0 : index
    %c0_15 = arith.constant 0 : index
    %c0_16 = arith.constant 0 : index
    %15 = vector.load %arg6[%c0_13, %c0_14, %c0_15, %c0_16] : memref<1x1x256x1xf32, #tpu.memory_space<vmem>>, vector<1x1x256x1xf32>
    %16 = vector.shape_cast %15 : vector<1x1x256x1xf32> to vector<256x1xf32>
    %17 = vector.shape_cast %14 : vector<256x1xf32> to vector<1x1x256x1xf32>
    tpu.vector_store %arg6[%c0_13, %c0_14, %c0_15, %c0_16], %17 {strides = array<i32>} : memref<1x1x256x1xf32, #tpu.memory_space<vmem>>, vector<1x1x256x1xf32>,
    return
  }
  func.func @transform_0(%arg0: i32, %arg1: i32) -> (i32, i32, i32) {
    %c0_i32 = arith.constant 0 : i32
    %c0_i32_0 = arith.constant 0 : i32
    return %arg0, %c0_i32, %arg1 : i32, i32, i32
  }
  func.func @transform_1(%arg0: i32, %arg1: i32) -> (i32, i32) {
    %c0_i32 = arith.constant 0 : i32
    %c0_i32_0 = arith.constant 0 : i32
    %c0_i32_1 = arith.constant 0 : i32
    return %c0_i32, %c0_i32_0 : i32, i32
  }
  func.func @transform_2(%arg0: i32, %arg1: i32) -> (i32, i32, i32) {
    %c0_i32 = arith.constant 0 : i32
    %c0_i32_0 = arith.constant 0 : i32
    return %arg0, %c0_i32, %arg1 : i32, i32, i32
  }
  func.func @transform_3(%arg0: i32, %arg1: i32) -> (i32, i32, i32, i32) {
    %c0_i32 = arith.constant 0 : i32
    %c0_i32_0 = arith.constant 0 : i32
    %c0_i32_1 = arith.constant 0 : i32
    return %arg0, %arg1, %c0_i32, %c0_i32_0 : i32, i32, i32, i32
  }
  func.func @transform_4(%arg0: i32, %arg1: i32) -> (i32, i32, i32, i32) {
    %c0_i32 = arith.constant 0 : i32
    %c0_i32_0 = arith.constant 0 : i32
    %c0_i32_1 = arith.constant 0 : i32
    return %arg0, %arg1, %c0_i32, %c0_i32_0 : i32, i32, i32, i32
  }
}

module attributes {stable_mosaic.version = 11 : i64} {
  func.func @_bn_relu_conv_stats_kernel(%arg0: i32, %arg1: i32, %arg2: memref<1x256x256xf32, #tpu.memory_space<vmem>>, %arg3: memref<256x1xf32, #tpu.memory_space<vmem>>, %arg4: memref<256x1xf32, #tpu.memory_space<vmem>>, %arg5: memref<256x256xf32, #tpu.memory_space<vmem>>, %arg6: memref<1x256x256xf32, #tpu.memory_space<vmem>>, %arg7: memref<1x1x256x1xf32, #tpu.memory_space<vmem>>, %arg8: memref<1x1x256x1xf32, #tpu.memory_space<vmem>>) attributes {dimension_semantics = [#tpu.dimension_semantics<parallel>, #tpu.dimension_semantics<parallel>], iteration_bounds = array<i64: 2, 1>, scalar_prefetch = 0 : i64, scratch_operands = 0 : i64, tpu.core_type = #tpu.core_type<tc>, window_params = [{transform_indices = @transform_0, window_bounds = array<i64: 1, 256, 256>}, {pipeline_mode = #tpu.pipeline_mode<synchronous>, transform_indices = @transform_1, window_bounds = array<i64: 256, 1>}, {pipeline_mode = #tpu.pipeline_mode<synchronous>, transform_indices = @transform_2, window_bounds = array<i64: 256, 1>}, {pipeline_mode = #tpu.pipeline_mode<synchronous>, transform_indices = @transform_3, window_bounds = array<i64: 256, 256>}, {transform_indices = @transform_4, window_bounds = array<i64: 1, 256, 256>}, {transform_indices = @transform_5, window_bounds = array<i64: 1, 1, 256, 1>}, {transform_indices = @transform_6, window_bounds = array<i64: 1, 1, 256, 1>}]} {
    %c0 = arith.constant 0 : index
    %c0_0 = arith.constant 0 : index
    %c0_1 = arith.constant 0 : index
    %0 = vector.load %arg2[%c0, %c0_0, %c0_1] : memref<1x256x256xf32, #tpu.memory_space<vmem>>, vector<1x256x256xf32>
    %1 = vector.shape_cast %0 : vector<1x256x256xf32> to vector<256x256xf32>
    %c0_2 = arith.constant 0 : index
    %c0_3 = arith.constant 0 : index
    %2 = vector.load %arg3[%c0_2, %c0_3] : memref<256x1xf32, #tpu.memory_space<vmem>>, vector<256x1xf32>
    %3 = vector.broadcast %2 : vector<256x1xf32> to vector<256x256xf32>
    %4 = arith.mulf %1, %3 : vector<256x256xf32>
    %c0_4 = arith.constant 0 : index
    %c0_5 = arith.constant 0 : index
    %5 = vector.load %arg4[%c0_4, %c0_5] : memref<256x1xf32, #tpu.memory_space<vmem>>, vector<256x1xf32>
    %6 = vector.broadcast %5 : vector<256x1xf32> to vector<256x256xf32>
    %7 = arith.addf %4, %6 : vector<256x256xf32>
    %cst = arith.constant 0.000000e+00 : f32
    %8 = vector.broadcast %cst : f32 to vector<256x256xf32>
    %9 = arith.maximumf %7, %8 : vector<256x256xf32>
    %c0_6 = arith.constant 0 : index
    %c0_7 = arith.constant 0 : index
    %10 = vector.load %arg5[%c0_6, %c0_7] : memref<256x256xf32, #tpu.memory_space<vmem>>, vector<256x256xf32>
    %cst_8 = arith.constant dense<0.000000e+00> : vector<256x256xf32>
    %11 = tpu.matmul %10, %9, %cst_8 {dimension_numbers = #tpu.dot_dimension_numbers<[1], [0], [0], [1], [0, 0, 1, 1], [], []>} : vector<256x256xf32>, vector<256x256xf32>, vector<256x256xf32> -> vector<256x256xf32>
    %c0_9 = arith.constant 0 : index
    %c0_10 = arith.constant 0 : index
    %c0_11 = arith.constant 0 : index
    %12 = vector.load %arg6[%c0_9, %c0_10, %c0_11] : memref<1x256x256xf32, #tpu.memory_space<vmem>>, vector<1x256x256xf32>
    %13 = vector.shape_cast %12 : vector<1x256x256xf32> to vector<256x256xf32>
    %14 = vector.shape_cast %11 : vector<256x256xf32> to vector<1x256x256xf32>
    tpu.vector_store %arg6[%c0_9, %c0_10, %c0_11], %14 {strides = array<i32>} : memref<1x256x256xf32, #tpu.memory_space<vmem>>, vector<1x256x256xf32>,
    %cst_12 = arith.constant dense<0.000000e+00> : vector<256xf32>
    %15 = vector.multi_reduction <add>, %11, %cst_12 [1] : vector<256x256xf32> to vector<256xf32>
    %16 = vector.shape_cast %15 : vector<256xf32> to vector<256x1xf32>
    %c0_13 = arith.constant 0 : index
    %c0_14 = arith.constant 0 : index
    %c0_15 = arith.constant 0 : index
    %c0_16 = arith.constant 0 : index
    %17 = vector.load %arg7[%c0_13, %c0_14, %c0_15, %c0_16] : memref<1x1x256x1xf32, #tpu.memory_space<vmem>>, vector<1x1x256x1xf32>
    %18 = vector.shape_cast %17 : vector<1x1x256x1xf32> to vector<256x1xf32>
    %19 = vector.shape_cast %16 : vector<256x1xf32> to vector<1x1x256x1xf32>
    tpu.vector_store %arg7[%c0_13, %c0_14, %c0_15, %c0_16], %19 {strides = array<i32>} : memref<1x1x256x1xf32, #tpu.memory_space<vmem>>, vector<1x1x256x1xf32>,
    %20 = arith.mulf %11, %11 : vector<256x256xf32>
    %cst_17 = arith.constant dense<0.000000e+00> : vector<256xf32>
    %21 = vector.multi_reduction <add>, %20, %cst_17 [1] : vector<256x256xf32> to vector<256xf32>
    %22 = vector.shape_cast %21 : vector<256xf32> to vector<256x1xf32>
    %c0_18 = arith.constant 0 : index
    %c0_19 = arith.constant 0 : index
    %c0_20 = arith.constant 0 : index
    %c0_21 = arith.constant 0 : index
    %23 = vector.load %arg8[%c0_18, %c0_19, %c0_20, %c0_21] : memref<1x1x256x1xf32, #tpu.memory_space<vmem>>, vector<1x1x256x1xf32>
    %24 = vector.shape_cast %23 : vector<1x1x256x1xf32> to vector<256x1xf32>
    %25 = vector.shape_cast %22 : vector<256x1xf32> to vector<1x1x256x1xf32>
    tpu.vector_store %arg8[%c0_18, %c0_19, %c0_20, %c0_21], %25 {strides = array<i32>} : memref<1x1x256x1xf32, #tpu.memory_space<vmem>>, vector<1x1x256x1xf32>,
    return
  }
  func.func @transform_0(%arg0: i32, %arg1: i32) -> (i32, i32, i32) {
    %c0_i32 = arith.constant 0 : i32
    %c0_i32_0 = arith.constant 0 : i32
    return %arg0, %c0_i32, %arg1 : i32, i32, i32
  }
  func.func @transform_1(%arg0: i32, %arg1: i32) -> (i32, i32) {
    %c0_i32 = arith.constant 0 : i32
    %c0_i32_0 = arith.constant 0 : i32
    %c0_i32_1 = arith.constant 0 : i32
    return %c0_i32, %c0_i32_0 : i32, i32
  }
  func.func @transform_2(%arg0: i32, %arg1: i32) -> (i32, i32) {
    %c0_i32 = arith.constant 0 : i32
    %c0_i32_0 = arith.constant 0 : i32
    %c0_i32_1 = arith.constant 0 : i32
    return %c0_i32, %c0_i32_0 : i32, i32
  }
  func.func @transform_3(%arg0: i32, %arg1: i32) -> (i32, i32) {
    %c0_i32 = arith.constant 0 : i32
    %c0_i32_0 = arith.constant 0 : i32
    %c0_i32_1 = arith.constant 0 : i32
    return %c0_i32, %c0_i32_0 : i32, i32
  }
  func.func @transform_4(%arg0: i32, %arg1: i32) -> (i32, i32, i32) {
    %c0_i32 = arith.constant 0 : i32
    %c0_i32_0 = arith.constant 0 : i32
    return %arg0, %c0_i32, %arg1 : i32, i32, i32
  }
  func.func @transform_5(%arg0: i32, %arg1: i32) -> (i32, i32, i32, i32) {
    %c0_i32 = arith.constant 0 : i32
    %c0_i32_0 = arith.constant 0 : i32
    %c0_i32_1 = arith.constant 0 : i32
    return %arg0, %arg1, %c0_i32, %c0_i32_0 : i32, i32, i32, i32
  }
  func.func @transform_6(%arg0: i32, %arg1: i32) -> (i32, i32, i32, i32) {
    %c0_i32 = arith.constant 0 : i32
    %c0_i32_0 = arith.constant 0 : i32
    %c0_i32_1 = arith.constant 0 : i32
    return %arg0, %arg1, %c0_i32, %c0_i32_0 : i32, i32, i32, i32
  }
}

module attributes {stable_mosaic.version = 11 : i64} {
  func.func @_bn_relu_kernel(%arg0: i32, %arg1: i32, %arg2: memref<1x256x256xf32, #tpu.memory_space<vmem>>, %arg3: memref<256x1xf32, #tpu.memory_space<vmem>>, %arg4: memref<256x1xf32, #tpu.memory_space<vmem>>, %arg5: memref<1x256x256xf32, #tpu.memory_space<vmem>>) attributes {dimension_semantics = [#tpu.dimension_semantics<parallel>, #tpu.dimension_semantics<parallel>], iteration_bounds = array<i64: 2, 1>, scalar_prefetch = 0 : i64, scratch_operands = 0 : i64, tpu.core_type = #tpu.core_type<tc>, window_params = [{transform_indices = @transform_0, window_bounds = array<i64: 1, 256, 256>}, {pipeline_mode = #tpu.pipeline_mode<synchronous>, transform_indices = @transform_1, window_bounds = array<i64: 256, 1>}, {pipeline_mode = #tpu.pipeline_mode<synchronous>, transform_indices = @transform_2, window_bounds = array<i64: 256, 1>}, {transform_indices = @transform_3, window_bounds = array<i64: 1, 256, 256>}]} {
    %c0 = arith.constant 0 : index
    %c0_0 = arith.constant 0 : index
    %c0_1 = arith.constant 0 : index
    %0 = vector.load %arg2[%c0, %c0_0, %c0_1] : memref<1x256x256xf32, #tpu.memory_space<vmem>>, vector<1x256x256xf32>
    %1 = vector.shape_cast %0 : vector<1x256x256xf32> to vector<256x256xf32>
    %c0_2 = arith.constant 0 : index
    %c0_3 = arith.constant 0 : index
    %2 = vector.load %arg3[%c0_2, %c0_3] : memref<256x1xf32, #tpu.memory_space<vmem>>, vector<256x1xf32>
    %3 = vector.broadcast %2 : vector<256x1xf32> to vector<256x256xf32>
    %4 = arith.mulf %1, %3 : vector<256x256xf32>
    %c0_4 = arith.constant 0 : index
    %c0_5 = arith.constant 0 : index
    %5 = vector.load %arg4[%c0_4, %c0_5] : memref<256x1xf32, #tpu.memory_space<vmem>>, vector<256x1xf32>
    %6 = vector.broadcast %5 : vector<256x1xf32> to vector<256x256xf32>
    %7 = arith.addf %4, %6 : vector<256x256xf32>
    %cst = arith.constant 0.000000e+00 : f32
    %8 = vector.broadcast %cst : f32 to vector<256x256xf32>
    %9 = arith.maximumf %7, %8 : vector<256x256xf32>
    %c0_6 = arith.constant 0 : index
    %c0_7 = arith.constant 0 : index
    %c0_8 = arith.constant 0 : index
    %10 = vector.load %arg5[%c0_6, %c0_7, %c0_8] : memref<1x256x256xf32, #tpu.memory_space<vmem>>, vector<1x256x256xf32>
    %11 = vector.shape_cast %10 : vector<1x256x256xf32> to vector<256x256xf32>
    %12 = vector.shape_cast %9 : vector<256x256xf32> to vector<1x256x256xf32>
    tpu.vector_store %arg5[%c0_6, %c0_7, %c0_8], %12 {strides = array<i32>} : memref<1x256x256xf32, #tpu.memory_space<vmem>>, vector<1x256x256xf32>,
    return
  }
  func.func @transform_0(%arg0: i32, %arg1: i32) -> (i32, i32, i32) {
    %c0_i32 = arith.constant 0 : i32
    %c0_i32_0 = arith.constant 0 : i32
    return %arg0, %c0_i32, %arg1 : i32, i32, i32
  }
  func.func @transform_1(%arg0: i32, %arg1: i32) -> (i32, i32) {
    %c0_i32 = arith.constant 0 : i32
    %c0_i32_0 = arith.constant 0 : i32
    %c0_i32_1 = arith.constant 0 : i32
    return %c0_i32, %c0_i32_0 : i32, i32
  }
  func.func @transform_2(%arg0: i32, %arg1: i32) -> (i32, i32) {
    %c0_i32 = arith.constant 0 : i32
    %c0_i32_0 = arith.constant 0 : i32
    %c0_i32_1 = arith.constant 0 : i32
    return %c0_i32, %c0_i32_0 : i32, i32
  }
  func.func @transform_3(%arg0: i32, %arg1: i32) -> (i32, i32, i32) {
    %c0_i32 = arith.constant 0 : i32
    %c0_i32_0 = arith.constant 0 : i32
    return %arg0, %c0_i32, %arg1 : i32, i32, i32
  }
}

</mosaic_0001>

<llo_original>
// kernel: model_forward.5
$region0: #{model_forward.5}
  #allocation0 [shape = 'u32[]', space=smem, size = 0x4, offset = 0x4, fixed_abs, tag = 'smem constant byte address 0x4 - core index']
  #allocation1 [shape = 'u32[144,128]{1,0:T(1,128)}', space=vmem, size = 0x12000, scoped, tag = 'internal scratch']
  %s0 = inlined_call_operand.vmem [shape: f32[2,256,256], index: 0, kind: input, shape index: {}]
  %s1 = inlined_call_operand.vmem [shape: f32[256,1], index: 1, kind: input, shape index: {}]
  %s2 = inlined_call_operand.vmem [shape: f32[256,1], index: 2, kind: input, shape index: {}]
  %s3 = inlined_call_operand.vmem [shape: f32[2,256,256], index: 3, kind: output, shape index: {}]
  %s4 = sld [smem:[#allocation0]]
  $region45: #{model_forward.5} parent=0
    _
  %s6 = ssub.s32 1, %s4
  %s7 = scalar_select 0, %s6, %s4
  loop: start=0, step=1, limit=4
  $region2: #{model_forward.5} parent=0 // loop_pre_header
    _
  $region3: #{model_forward.5} parent=0 // loop_header
    %s9 = sphi 0, %s13
    %p10 = scmp.ge.s32.totalorder %s9, 4
    %s16 = sphi 0, %s28
    %s17 = sphi 0, %s24
    %s18 = sphi 0, %s16
    %s19 = sphi 0, %s17
    %s20 = sphi 0, %s18
    %s21 = sphi 0, %s19
    %s33 = sphi 0, %s35
    %s36 = sphi 0, %s33
    %s37 = sphi 0, %s36
    %s53 = sphi 0, %s37
    %s57 = sphi 0, %s57
    %s59 = sphi 0, %s57
    %s60 = sphi 0, %s59
    %s74 = sphi 0, %s60
    %s78 = sphi 0, %s78
    %s80 = sphi 0, %s78
    %s81 = sphi 0, %s80
    %s95 = sphi 0, %s81
    %s103 = sphi 0, %s105
    %s106 = sphi 0, %s103
    %s107 = sphi 0, %s106
    %s123 = sphi 0, %s107
  $region4: #{model_forward.5} parent=0 // loop_header_branch
    %12 = sbr.rel (%p10) target = $region8
  $region5: #{model_forward.5} parent=0 // loop_body
    %s14 = ssub.s32 %s9, 1
    %s15 = ssub.s32 %s9, 2
    %s22 = sadd.s32 1, %s17
    %p23 = scmp.ge.s32.totalorder %s22, 1
    %s24 = scalar_select %p23, 0, %s22
    %s25 = sadd.s32 1, %s16
    %s26 = scalar_select %p23, %s25, %s16
    %p27 = scmp.ge.s32.totalorder %s26, 2
    %s28 = scalar_select %p27, 0, %s26
    %s29 = ssub.s32 %s16, %s28
    %s30 = ssub.s32 %s17, %s24
    %s31 = sor.u32 %s29, %s30
    %p32 = scmp.eq.s32.totalorder %s31, 0
    %s34 = sadd.s32 %s33, 1
    %s35 = scalar_select %p32, %s33, %s34
    %p38 = pneg %p32
    %p39 = scmp.eq.s32.totalorder %s9, 1
    %p40 = por %p38, %p39
    %p41 = scmp.ne.s32.totalorder %s33, %s36
    %p42 = scmp.eq.s32.totalorder %s9, 0
    %p43 = por %p41, %p42
    %p44 = scmp.ne.s32.totalorder %s33, %s36
    %p45 = scmp.eq.s32.totalorder %s14, 1
    %p46 = por %p44, %p45
    %p47 = scmp.ne.s32.totalorder %s36, %s37
    %p48 = scmp.eq.s32.totalorder %s14, 0
    %p49 = por %p47, %p48
    %p50 = scmp.ne.s32.totalorder %s36, %s37
    %p51 = scmp.eq.s32.totalorder %s15, 1
    %p52 = por %p50, %p51
    %p54 = scmp.ne.s32.totalorder %s37, %s53
    %p55 = scmp.eq.s32.totalorder %s15, 0
    %p56 = por %p54, %p55
    %s58 = sadd.s32 %s57, 1
    %p61 = scmp.eq.s32.totalorder %s9, 1
    %p62 = scmp.ne.s32.totalorder %s57, %s59
    %p63 = scmp.eq.s32.totalorder %s9, 0
    %p64 = por %p62, %p63
    %p65 = scmp.ne.s32.totalorder %s57, %s59
    %p66 = scmp.eq.s32.totalorder %s14, 1
    %p67 = por %p65, %p66
    %p68 = scmp.ne.s32.totalorder %s59, %s60
    %p69 = scmp.eq.s32.totalorder %s14, 0
    %p70 = por %p68, %p69
    %p71 = scmp.ne.s32.totalorder %s59, %s60
    %p72 = scmp.eq.s32.totalorder %s15, 1
    %p73 = por %p71, %p72
    %p75 = scmp.ne.s32.totalorder %s60, %s74
    %p76 = scmp.eq.s32.totalorder %s15, 0
    %p77 = por %p75, %p76
    %s79 = sadd.s32 %s78, 1
    %p82 = scmp.eq.s32.totalorder %s9, 1
    %p83 = scmp.ne.s32.totalorder %s78, %s80
    %p84 = scmp.eq.s32.totalorder %s9, 0
    %p85 = por %p83, %p84
    %p86 = scmp.ne.s32.totalorder %s78, %s80
    %p87 = scmp.eq.s32.totalorder %s14, 1
    %p88 = por %p86, %p87
    %p89 = scmp.ne.s32.totalorder %s80, %s81
    %p90 = scmp.eq.s32.totalorder %s14, 0
    %p91 = por %p89, %p90
    %p92 = scmp.ne.s32.totalorder %s80, %s81
    %p93 = scmp.eq.s32.totalorder %s15, 1
    %p94 = por %p92, %p93
    %p96 = scmp.ne.s32.totalorder %s81, %s95
    %p97 = scmp.eq.s32.totalorder %s15, 0
    %p98 = por %p96, %p97
    %s99 = ssub.s32 %s16, %s28
    %s100 = ssub.s32 %s17, %s24
    %s101 = sor.u32 %s99, %s100
    %p102 = scmp.eq.s32.totalorder %s101, 0
    %s104 = sadd.s32 %s103, 1
    %s105 = scalar_select %p102, %s103, %s104
    %p108 = pneg %p102
    %p109 = scmp.eq.s32.totalorder %s9, 1
    %p110 = por %p108, %p109
    %p111 = scmp.ne.s32.totalorder %s103, %s106
    %p112 = scmp.eq.s32.totalorder %s9, 0
    %p113 = por %p111, %p112
    %p114 = scmp.ne.s32.totalorder %s103, %s106
    %p115 = scmp.eq.s32.totalorder %s14, 1
    %p116 = por %p114, %p115
    %p117 = scmp.ne.s32.totalorder %s106, %s107
    %p118 = scmp.eq.s32.totalorder %s14, 0
    %p119 = por %p117, %p118
    %p120 = scmp.ne.s32.totalorder %s106, %s107
    %p121 = scmp.eq.s32.totalorder %s15, 1
    %p122 = por %p120, %p121
    %p124 = scmp.ne.s32.totalorder %s107, %s123
    %p125 = scmp.eq.s32.totalorder %s15, 0
    %p126 = por %p124, %p125
    %p127 = scmp.le.s32.totalorder 1, %s9
    %p128 = scmp.lt.s32.totalorder %s9, 3
    %p129 = pnand %p127, %p128
    %p130 = pneg %p129
    // Predicated region
    $region9: #{model_forward.5} parent=5 // pred_check
      _
    $region10: #{model_forward.5} parent=5 // pred_check_branch
      %132 = sbr.rel (%p129) target = $region12
    $region11: #{model_forward.5} parent=5 // pred_region
      %s133 = ssub.s32 %s9, 1
      // Predicated region
      $region13: #{model_forward.5} parent=11 // pred_check
        %p134 = pneg %p70
      $region14: #{model_forward.5} parent=11 // pred_check_branch
        %136 = sbr.rel (%p134) target = $region16
      $region15: #{model_forward.5} parent=11 // pred_region
        _
      $region16: #{model_forward.5} parent=11 // pred_fallthru
        _
      // Predicated region
      $region17: #{model_forward.5} parent=11 // pred_check
        %p137 = pneg %p91
      $region18: #{model_forward.5} parent=11 // pred_check_branch
        %139 = sbr.rel (%p137) target = $region20
      $region19: #{model_forward.5} parent=11 // pred_region
        _
      $region20: #{model_forward.5} parent=11 // pred_fallthru
        _
    $region12: #{model_forward.5} parent=5 // pred_fallthru
      _
    %p140 = scmp.lt.s32.totalorder %s9, 2
    // Predicated region
    $region21: #{model_forward.5} parent=5 // pred_check
      %p141 = pneg %p140
    $region22: #{model_forward.5} parent=5 // pred_check_branch
      %143 = sbr.rel (%p141) target = $region24
    $region23: #{model_forward.5} parent=5 // pred_region
      // Predicated region
      $region25: #{model_forward.5} parent=23 // pred_check
        %p144 = pneg %p43
      $region26: #{model_forward.5} parent=23 // pred_check_branch
        %146 = sbr.rel (%p144) target = $region28
      $region27: #{model_forward.5} parent=23 // pred_region
        %s147 = smul.u32 2, %s17
        %p148 = scmp.lt.s32.totalorder %s16, 1
        %s149 = scalar_select %p148, %s16, 1
        %p150 = scmp.lt.s32.totalorder %s147, 1
        %s151 = scalar_select %p150, %s147, 1
        %s152 = smul.addr %s149, 64
        %s153 = sadd.s32 %s151, %s152
        %s154 = smul.addr %s153, 8
        %s155 = scalar_lea.vmem %s0, %s154
        %s156 = smul.u32 2, %s17
      $region28: #{model_forward.5} parent=23 // pred_fallthru
        _
    $region24: #{model_forward.5} parent=5 // pred_fallthru
      _
    %p157 = scmp.le.s32.totalorder 1, %s9
    %p158 = scmp.lt.s32.totalorder %s9, 3
    %p159 = pnand %p157, %p158
    %p160 = pneg %p159
    // Predicated region
    $region29: #{model_forward.5} parent=5 // pred_check
      _
    $region30: #{model_forward.5} parent=5 // pred_check_branch
      %162 = sbr.rel (%p159) target = $region32
    $region31: #{model_forward.5} parent=5 // pred_region
      %s163 = ssub.s32 %s9, 1
      %s164 = smul.u32 2, %s19
      %p165 = scmp.lt.s32.totalorder %s18, 1
      %s166 = scalar_select %p165, %s18, 1
      %p167 = scmp.lt.s32.totalorder %s164, 1
      %s168 = scalar_select %p167, %s164, 1
      %s169 = smul.addr %s166, 64
      %s170 = sadd.s32 %s168, %s169
      %s171 = smul.addr %s170, 8
      %s172 = scalar_lea.vmem %s0, %s171
      %p173 = pneg %p49
      %p174 = pneg %p46
      %p175 = pneg %p70
      %p176 = pneg %p67
      %p177 = pneg %p91
      %p178 = pneg %p88
      %p179 = pneg %p119
      %p180 = pneg %p116
      %s181 = smul.u32 2, %s19
      %p182 = scmp.lt.s32.totalorder %s18, 1
      %s183 = scalar_select %p182, %s18, 1
      %p184 = scmp.lt.s32.totalorder %s181, 1
      %s185 = scalar_select %p184, %s181, 1
      %s186 = smul.addr %s183, 64
      %s187 = sadd.s32 %s185, %s186
      %s188 = smul.addr %s187, 8
      %s189 = scalar_lea.vmem %s3, %s188
      %s190 = smul.u32 2, %s19
      %p191 = scmp.lt.s32.totalorder %s18, 1
      %s192 = scalar_select %p191, %s18, 1
      %p193 = scmp.lt.s32.totalorder %s190, 1
      %s194 = scalar_select %p193, %s190, 1
      %s195 = smul.addr %s192, 64
      %s196 = sadd.s32 %s194, %s195
      %s197 = smul.addr %s196, 8
      %s198 = scalar_lea.vmem %s0, %s197
      %s199 = smul.u32 2, %s19
      %s200 = smul.u32 2, %s19
      %p201 = scmp.lt.s32.totalorder %s18, 1
      %s202 = scalar_select %p201, %s18, 1
      %p203 = scmp.lt.s32.totalorder %s200, 1
      %s204 = scalar_select %p203, %s200, 1
      %s205 = smul.addr %s202, 64
      %s206 = sadd.s32 %s204, %s205
      %s207 = smul.addr %s206, 8
      %s208 = scalar_lea.vmem %s3, %s207
      %s209 = smul.u32 2, %s19
      %v210 = vld [vmem:[%s198] sm:$0xff]
      %v211 = vld [vmem:[%s198 + $0x8] sm:$0xff]
      %v212 = vld [vmem:[%s198 + $0x10] sm:$0xff]
      %v213 = vld [vmem:[%s198 + $0x18] sm:$0xff]
      %v214 = vld [vmem:[%s198 + $0x20] sm:$0xff]
      %v215 = vld [vmem:[%s198 + $0x28] sm:$0xff]
      %v216 = vld [vmem:[%s198 + $0x30] sm:$0xff]
      %v217 = vld [vmem:[%s198 + $0x38] sm:$0xff]
      %v218 = vld [vmem:[%s198 + $0x40] sm:$0xff]
      %v219 = vld [vmem:[%s198 + $0x48] sm:$0xff]
      %v220 = vld [vmem:[%s198 + $0x50] sm:$0xff]
      %v221 = vld [vmem:[%s198 + $0x58] sm:$0xff]
      %v222 = vld [vmem:[%s198 + $0x60] sm:$0xff]
      %v223 = vld [vmem:[%s198 + $0x68] sm:$0xff]
      %v224 = vld [vmem:[%s198 + $0x70] sm:$0xff]
      %v225 = vld [vmem:[%s198 + $0x78] sm:$0xff]
      %v226 = vld [vmem:[%s198 + $0x80] sm:$0xff]
      %v227 = vld [vmem:[%s198 + $0x88] sm:$0xff]
      %v228 = vld [vmem:[%s198 + $0x90] sm:$0xff]
      %v229 = vld [vmem:[%s198 + $0x98] sm:$0xff]
      %v230 = vld [vmem:[%s198 + $0xa0] sm:$0xff]
      %v231 = vld [vmem:[%s198 + $0xa8] sm:$0xff]
      %v232 = vld [vmem:[%s198 + $0xb0] sm:$0xff]
      %v233 = vld [vmem:[%s198 + $0xb8] sm:$0xff]
      %v234 = vld [vmem:[%s198 + $0xc0] sm:$0xff]
      %v235 = vld [vmem:[%s198 + $0xc8] sm:$0xff]
      %v236 = vld [vmem:[%s198 + $0xd0] sm:$0xff]
      %v237 = vld [vmem:[%s198 + $0xd8] sm:$0xff]
      %v238 = vld [vmem:[%s198 + $0xe0] sm:$0xff]
      %v239 = vld [vmem:[%s198 + $0xe8] sm:$0xff]
      %v240 = vld [vmem:[%s198 + $0xf0] sm:$0xff]
      %v241 = vld [vmem:[%s198 + $0xf8] sm:$0xff]
      %v242 = vld [vmem:[%s198 + $0x100] sm:$0xff]
      %v243 = vld [vmem:[%s198 + $0x108] sm:$0xff]
      %v244 = vld [vmem:[%s198 + $0x110] sm:$0xff]
      %v245 = vld [vmem:[%s198 + $0x118] sm:$0xff]
      %v246 = vld [vmem:[%s198 + $0x120] sm:$0xff]
      %v247 = vld [vmem:[%s198 + $0x128] sm:$0xff]
      %v248 = vld [vmem:[%s198 + $0x130] sm:$0xff]
      %v249 = vld [vmem:[%s198 + $0x138] sm:$0xff]
      %v250 = vld [vmem:[%s198 + $0x140] sm:$0xff]
      %v251 = vld [vmem:[%s198 + $0x148] sm:$0xff]
      %v252 = vld [vmem:[%s198 + $0x150] sm:$0xff]
      %v253 = vld [vmem:[%s198 + $0x158] sm:$0xff]
      %v254 = vld [vmem:[%s198 + $0x160] sm:$0xff]
      %v255 = vld [vmem:[%s198 + $0x168] sm:$0xff]
      %v256 = vld [vmem:[%s198 + $0x170] sm:$0xff]
      %v257 = vld [vmem:[%s198 + $0x178] sm:$0xff]
      %v258 = vld [vmem:[%s198 + $0x180] sm:$0xff]
      %v259 = vld [vmem:[%s198 + $0x188] sm:$0xff]
      %v260 = vld [vmem:[%s198 + $0x190] sm:$0xff]
      %v261 = vld [vmem:[%s198 + $0x198] sm:$0xff]
      %v262 = vld [vmem:[%s198 + $0x1a0] sm:$0xff]
      %v263 = vld [vmem:[%s198 + $0x1a8] sm:$0xff]
      %v264 = vld [vmem:[%s198 + $0x1b0] sm:$0xff]
      %v265 = vld [vmem:[%s198 + $0x1b8] sm:$0xff]
      %v266 = vld [vmem:[%s198 + $0x1c0] sm:$0xff]
      %v267 = vld [vmem:[%s198 + $0x1c8] sm:$0xff]
      %v268 = vld [vmem:[%s198 + $0x1d0] sm:$0xff]
      %v269 = vld [vmem:[%s198 + $0x1d8] sm:$0xff]
      %v270 = vld [vmem:[%s198 + $0x1e0] sm:$0xff]
      %v271 = vld [vmem:[%s198 + $0x1e8] sm:$0xff]
      %v272 = vld [vmem:[%s198 + $0x1f0] sm:$0xff]
      %v273 = vld [vmem:[%s198 + $0x1f8] sm:$0xff]
      %v274 = vld [vmem:[%s1] sm:$0xff]
      %v275 = vld [vmem:[%s1 + $0x8] sm:$0xff]
      %v276 = vld [vmem:[%s1 + $0x10] sm:$0xff]
      %v277 = vld [vmem:[%s1 + $0x18] sm:$0xff]
      %v278 = vld [vmem:[%s1 + $0x20] sm:$0xff]
      %v279 = vld [vmem:[%s1 + $0x28] sm:$0xff]
      %v280 = vld [vmem:[%s1 + $0x30] sm:$0xff]
      %v281 = vld [vmem:[%s1 + $0x38] sm:$0xff]
      %v282 = vld [vmem:[%s1 + $0x40] sm:$0xff]
      %v283 = vld [vmem:[%s1 + $0x48] sm:$0xff]
      %v284 = vld [vmem:[%s1 + $0x50] sm:$0xff]
      %v285 = vld [vmem:[%s1 + $0x58] sm:$0xff]
      %v286 = vld [vmem:[%s1 + $0x60] sm:$0xff]
      %v287 = vld [vmem:[%s1 + $0x68] sm:$0xff]
      %v288 = vld [vmem:[%s1 + $0x70] sm:$0xff]
      %v289 = vld [vmem:[%s1 + $0x78] sm:$0xff]
      %v290 = vld [vmem:[%s1 + $0x80] sm:$0xff]
      %v291 = vld [vmem:[%s1 + $0x88] sm:$0xff]
      %v292 = vld [vmem:[%s1 + $0x90] sm:$0xff]
      %v293 = vld [vmem:[%s1 + $0x98] sm:$0xff]
      %v294 = vld [vmem:[%s1 + $0xa0] sm:$0xff]
      %v295 = vld [vmem:[%s1 + $0xa8] sm:$0xff]
      %v296 = vld [vmem:[%s1 + $0xb0] sm:$0xff]
      %v297 = vld [vmem:[%s1 + $0xb8] sm:$0xff]
      %v298 = vld [vmem:[%s1 + $0xc0] sm:$0xff]
      %v299 = vld [vmem:[%s1 + $0xc8] sm:$0xff]
      %v300 = vld [vmem:[%s1 + $0xd0] sm:$0xff]
      %v301 = vld [vmem:[%s1 + $0xd8] sm:$0xff]
      %v302 = vld [vmem:[%s1 + $0xe0] sm:$0xff]
      %v303 = vld [vmem:[%s1 + $0xe8] sm:$0xff]
      %v304 = vld [vmem:[%s1 + $0xf0] sm:$0xff]
      %v305 = vld [vmem:[%s1 + $0xf8] sm:$0xff]
      %307 = vset.pattern.permute.xlu0 0
      %308 = vperm.xlu0 %307, %v274
      %v309 = vpop.permute.xlu0 %308
      %312 = vset.pattern.permute.xlu0 0
      %313 = vperm.xlu0 %312, %v275
      %v314 = vpop.permute.xlu0 %313
      %317 = vset.pattern.permute.xlu0 0
      %318 = vperm.xlu0 %317, %v276
      %v319 = vpop.permute.xlu0 %318
      %322 = vset.pattern.permute.xlu0 0
      %323 = vperm.xlu0 %322, %v277
      %v324 = vpop.permute.xlu0 %323
      %327 = vset.pattern.permute.xlu0 0
      %328 = vperm.xlu0 %327, %v278
      %v329 = vpop.permute.xlu0 %328
      %332 = vset.pattern.permute.xlu0 0
      %333 = vperm.xlu0 %332, %v279
      %v334 = vpop.permute.xlu0 %333
      %337 = vset.pattern.permute.xlu0 0
      %338 = vperm.xlu0 %337, %v280
      %v339 = vpop.permute.xlu0 %338
      %342 = vset.pattern.permute.xlu0 0
      %343 = vperm.xlu0 %342, %v281
      %v344 = vpop.permute.xlu0 %343
      %347 = vset.pattern.permute.xlu0 0
      %348 = vperm.xlu0 %347, %v282
      %v349 = vpop.permute.xlu0 %348
      %352 = vset.pattern.permute.xlu0 0
      %353 = vperm.xlu0 %352, %v283
      %v354 = vpop.permute.xlu0 %353
      %357 = vset.pattern.permute.xlu0 0
      %358 = vperm.xlu0 %357, %v284
      %v359 = vpop.permute.xlu0 %358
      %362 = vset.pattern.permute.xlu0 0
      %363 = vperm.xlu0 %362, %v285
      %v364 = vpop.permute.xlu0 %363
      %367 = vset.pattern.permute.xlu0 0
      %368 = vperm.xlu0 %367, %v286
      %v369 = vpop.permute.xlu0 %368
      %372 = vset.pattern.permute.xlu0 0
      %373 = vperm.xlu0 %372, %v287
      %v374 = vpop.permute.xlu0 %373
      %377 = vset.pattern.permute.xlu0 0
      %378 = vperm.xlu0 %377, %v288
      %v379 = vpop.permute.xlu0 %378
      %382 = vset.pattern.permute.xlu0 0
      %383 = vperm.xlu0 %382, %v289
      %v384 = vpop.permute.xlu0 %383
      %387 = vset.pattern.permute.xlu0 0
      %388 = vperm.xlu0 %387, %v290
      %v389 = vpop.permute.xlu0 %388
      %392 = vset.pattern.permute.xlu0 0
      %393 = vperm.xlu0 %392, %v291
      %v394 = vpop.permute.xlu0 %393
      %397 = vset.pattern.permute.xlu0 0
      %398 = vperm.xlu0 %397, %v292
      %v399 = vpop.permute.xlu0 %398
      %402 = vset.pattern.permute.xlu0 0
      %403 = vperm.xlu0 %402, %v293
      %v404 = vpop.permute.xlu0 %403
      %407 = vset.pattern.permute.xlu0 0
      %408 = vperm.xlu0 %407, %v294
      %v409 = vpop.permute.xlu0 %408
      %412 = vset.pattern.permute.xlu0 0
      %413 = vperm.xlu0 %412, %v295
      %v414 = vpop.permute.xlu0 %413
      %417 = vset.pattern.permute.xlu0 0
      %418 = vperm.xlu0 %417, %v296
      %v419 = vpop.permute.xlu0 %418
      %422 = vset.pattern.permute.xlu0 0
      %423 = vperm.xlu0 %422, %v297
      %v424 = vpop.permute.xlu0 %423
      %427 = vset.pattern.permute.xlu0 0
      %428 = vperm.xlu0 %427, %v298
      %v429 = vpop.permute.xlu0 %428
      %432 = vset.pattern.permute.xlu0 0
      %433 = vperm.xlu0 %432, %v299
      %v434 = vpop.permute.xlu0 %433
      %437 = vset.pattern.permute.xlu0 0
      %438 = vperm.xlu0 %437, %v300
      %v439 = vpop.permute.xlu0 %438
      %442 = vset.pattern.permute.xlu0 0
      %443 = vperm.xlu0 %442, %v301
      %v444 = vpop.permute.xlu0 %443
      %447 = vset.pattern.permute.xlu0 0
      %448 = vperm.xlu0 %447, %v302
      %v449 = vpop.permute.xlu0 %448
      %452 = vset.pattern.permute.xlu0 0
      %453 = vperm.xlu0 %452, %v303
      %v454 = vpop.permute.xlu0 %453
      %457 = vset.pattern.permute.xlu0 0
      %458 = vperm.xlu0 %457, %v304
      %v459 = vpop.permute.xlu0 %458
      %462 = vset.pattern.permute.xlu0 0
      %463 = vperm.xlu0 %462, %v305
      %v464 = vpop.permute.xlu0 %463
      %v466 = vmul.f32 %v210, %v309
      %v467 = vmul.f32 %v211, %v309
      %v468 = vmul.f32 %v212, %v314
      %v469 = vmul.f32 %v213, %v314
      %v470 = vmul.f32 %v214, %v319
      %v471 = vmul.f32 %v215, %v319
      %v472 = vmul.f32 %v216, %v324
      %v473 = vmul.f32 %v217, %v324
      %v474 = vmul.f32 %v218, %v329
      %v475 = vmul.f32 %v219, %v329
      %v476 = vmul.f32 %v220, %v334
      %v477 = vmul.f32 %v221, %v334
      %v478 = vmul.f32 %v222, %v339
      %v479 = vmul.f32 %v223, %v339
      %v480 = vmul.f32 %v224, %v344
      %v481 = vmul.f32 %v225, %v344
      %v482 = vmul.f32 %v226, %v349
      %v483 = vmul.f32 %v227, %v349
      %v484 = vmul.f32 %v228, %v354
      %v485 = vmul.f32 %v229, %v354
      %v486 = vmul.f32 %v230, %v359
      %v487 = vmul.f32 %v231, %v359
      %v488 = vmul.f32 %v232, %v364
      %v489 = vmul.f32 %v233, %v364
      %v490 = vmul.f32 %v234, %v369
      %v491 = vmul.f32 %v235, %v369
      %v492 = vmul.f32 %v236, %v374
      %v493 = vmul.f32 %v237, %v374
      %v494 = vmul.f32 %v238, %v379
      %v495 = vmul.f32 %v239, %v379
      %v496 = vmul.f32 %v240, %v384
      %v497 = vmul.f32 %v241, %v384
      %v498 = vmul.f32 %v242, %v389
      %v499 = vmul.f32 %v243, %v389
      %v500 = vmul.f32 %v244, %v394
      %v501 = vmul.f32 %v245, %v394
      %v502 = vmul.f32 %v246, %v399
      %v503 = vmul.f32 %v247, %v399
      %v504 = vmul.f32 %v248, %v404
      %v505 = vmul.f32 %v249, %v404
      %v506 = vmul.f32 %v250, %v409
      %v507 = vmul.f32 %v251, %v409
      %v508 = vmul.f32 %v252, %v414
      %v509 = vmul.f32 %v253, %v414
      %v510 = vmul.f32 %v254, %v419
      %v511 = vmul.f32 %v255, %v419
      %v512 = vmul.f32 %v256, %v424
      %v513 = vmul.f32 %v257, %v424
      %v514 = vmul.f32 %v258, %v429
      %v515 = vmul.f32 %v259, %v429
      %v516 = vmul.f32 %v260, %v434
      %v517 = vmul.f32 %v261, %v434
      %v518 = vmul.f32 %v262, %v439
      %v519 = vmul.f32 %v263, %v439
      %v520 = vmul.f32 %v264, %v444
      %v521 = vmul.f32 %v265, %v444
      %v522 = vmul.f32 %v266, %v449
      %v523 = vmul.f32 %v267, %v449
      %v524 = vmul.f32 %v268, %v454
      %v525 = vmul.f32 %v269, %v454
      %v526 = vmul.f32 %v270, %v459
      %v527 = vmul.f32 %v271, %v459
      %v528 = vmul.f32 %v272, %v464
      %v529 = vmul.f32 %v273, %v464
      %v530 = vld [vmem:[%s2] sm:$0xff]
      %v531 = vld [vmem:[%s2 + $0x8] sm:$0xff]
      %v532 = vld [vmem:[%s2 + $0x10] sm:$0xff]
      %v533 = vld [vmem:[%s2 + $0x18] sm:$0xff]
      %v534 = vld [vmem:[%s2 + $0x20] sm:$0xff]
      %v535 = vld [vmem:[%s2 + $0x28] sm:$0xff]
      %v536 = vld [vmem:[%s2 + $0x30] sm:$0xff]
      %v537 = vld [vmem:[%s2 + $0x38] sm:$0xff]
      %v538 = vld [vmem:[%s2 + $0x40] sm:$0xff]
      %v539 = vld [vmem:[%s2 + $0x48] sm:$0xff]
      %v540 = vld [vmem:[%s2 + $0x50] sm:$0xff]
      %v541 = vld [vmem:[%s2 + $0x58] sm:$0xff]
      %v542 = vld [vmem:[%s2 + $0x60] sm:$0xff]
      %v543 = vld [vmem:[%s2 + $0x68] sm:$0xff]
      %v544 = vld [vmem:[%s2 + $0x70] sm:$0xff]
      %v545 = vld [vmem:[%s2 + $0x78] sm:$0xff]
      %v546 = vld [vmem:[%s2 + $0x80] sm:$0xff]
      %v547 = vld [vmem:[%s2 + $0x88] sm:$0xff]
      %v548 = vld [vmem:[%s2 + $0x90] sm:$0xff]
      %v549 = vld [vmem:[%s2 + $0x98] sm:$0xff]
      %v550 = vld [vmem:[%s2 + $0xa0] sm:$0xff]
      %v551 = vld [vmem:[%s2 + $0xa8] sm:$0xff]
      %v552 = vld [vmem:[%s2 + $0xb0] sm:$0xff]
      %v553 = vld [vmem:[%s2 + $0xb8] sm:$0xff]
      %v554 = vld [vmem:[%s2 + $0xc0] sm:$0xff]
      %v555 = vld [vmem:[%s2 + $0xc8] sm:$0xff]
      %v556 = vld [vmem:[%s2 + $0xd0] sm:$0xff]
      %v557 = vld [vmem:[%s2 + $0xd8] sm:$0xff]
      %v558 = vld [vmem:[%s2 + $0xe0] sm:$0xff]
      %v559 = vld [vmem:[%s2 + $0xe8] sm:$0xff]
      %v560 = vld [vmem:[%s2 + $0xf0] sm:$0xff]
      %v561 = vld [vmem:[%s2 + $0xf8] sm:$0xff]
      %563 = vset.pattern.permute.xlu0 0
      %564 = vperm.xlu0 %563, %v530
      %v565 = vpop.permute.xlu0 %564
      %568 = vset.pattern.permute.xlu0 0
      %569 = vperm.xlu0 %568, %v531
      %v570 = vpop.permute.xlu0 %569
      %573 = vset.pattern.permute.xlu0 0
      %574 = vperm.xlu0 %573, %v532
      %v575 = vpop.permute.xlu0 %574
      %578 = vset.pattern.permute.xlu0 0
      %579 = vperm.xlu0 %578, %v533
      %v580 = vpop.permute.xlu0 %579
      %583 = vset.pattern.permute.xlu0 0
      %584 = vperm.xlu0 %583, %v534
      %v585 = vpop.permute.xlu0 %584
      %588 = vset.pattern.permute.xlu0 0
      %589 = vperm.xlu0 %588, %v535
      %v590 = vpop.permute.xlu0 %589
      %593 = vset.pattern.permute.xlu0 0
      %594 = vperm.xlu0 %593, %v536
      %v595 = vpop.permute.xlu0 %594
      %598 = vset.pattern.permute.xlu0 0
      %599 = vperm.xlu0 %598, %v537
      %v600 = vpop.permute.xlu0 %599
      %603 = vset.pattern.permute.xlu0 0
      %604 = vperm.xlu0 %603, %v538
      %v605 = vpop.permute.xlu0 %604
      %608 = vset.pattern.permute.xlu0 0
      %609 = vperm.xlu0 %608, %v539
      %v610 = vpop.permute.xlu0 %609
      %613 = vset.pattern.permute.xlu0 0
      %614 = vperm.xlu0 %613, %v540
      %v615 = vpop.permute.xlu0 %614
      %618 = vset.pattern.permute.xlu0 0
      %619 = vperm.xlu0 %618, %v541
      %v620 = vpop.permute.xlu0 %619
      %623 = vset.pattern.permute.xlu0 0
      %624 = vperm.xlu0 %623, %v542
      %v625 = vpop.permute.xlu0 %624
      %628 = vset.pattern.permute.xlu0 0
      %629 = vperm.xlu0 %628, %v543
      %v630 = vpop.permute.xlu0 %629
      %633 = vset.pattern.permute.xlu0 0
      %634 = vperm.xlu0 %633, %v544
      %v635 = vpop.permute.xlu0 %634
      %638 = vset.pattern.permute.xlu0 0
      %639 = vperm.xlu0 %638, %v545
      %v640 = vpop.permute.xlu0 %639
      %643 = vset.pattern.permute.xlu0 0
      %644 = vperm.xlu0 %643, %v546
      %v645 = vpop.permute.xlu0 %644
      %648 = vset.pattern.permute.xlu0 0
      %649 = vperm.xlu0 %648, %v547
      %v650 = vpop.permute.xlu0 %649
      %653 = vset.pattern.permute.xlu0 0
      %654 = vperm.xlu0 %653, %v548
      %v655 = vpop.permute.xlu0 %654
      %658 = vset.pattern.permute.xlu0 0
      %659 = vperm.xlu0 %658, %v549
      %v660 = vpop.permute.xlu0 %659
      %663 = vset.pattern.permute.xlu0 0
      %664 = vperm.xlu0 %663, %v550
      %v665 = vpop.permute.xlu0 %664
      %668 = vset.pattern.permute.xlu0 0
      %669 = vperm.xlu0 %668, %v551
      %v670 = vpop.permute.xlu0 %669
      %673 = vset.pattern.permute.xlu0 0
      %674 = vperm.xlu0 %673, %v552
      %v675 = vpop.permute.xlu0 %674
      %678 = vset.pattern.permute.xlu0 0
      %679 = vperm.xlu0 %678, %v553
      %v680 = vpop.permute.xlu0 %679
      %683 = vset.pattern.permute.xlu0 0
      %684 = vperm.xlu0 %683, %v554
      %v685 = vpop.permute.xlu0 %684
      %688 = vset.pattern.permute.xlu0 0
      %689 = vperm.xlu0 %688, %v555
      %v690 = vpop.permute.xlu0 %689
      %693 = vset.pattern.permute.xlu0 0
      %694 = vperm.xlu0 %693, %v556
      %v695 = vpop.permute.xlu0 %694
      %698 = vset.pattern.permute.xlu0 0
      %699 = vperm.xlu0 %698, %v557
      %v700 = vpop.permute.xlu0 %699
      %703 = vset.pattern.permute.xlu0 0
      %704 = vperm.xlu0 %703, %v558
      %v705 = vpop.permute.xlu0 %704
      %708 = vset.pattern.permute.xlu0 0
      %709 = vperm.xlu0 %708, %v559
      %v710 = vpop.permute.xlu0 %709
      %713 = vset.pattern.permute.xlu0 0
      %714 = vperm.xlu0 %713, %v560
      %v715 = vpop.permute.xlu0 %714
      %718 = vset.pattern.permute.xlu0 0
      %719 = vperm.xlu0 %718, %v561
      %v720 = vpop.permute.xlu0 %719
      %v722 = vadd.f32 %v466, %v565
      %v723 = vadd.f32 %v467, %v565
      %v724 = vadd.f32 %v468, %v570
      %v725 = vadd.f32 %v469, %v570
      %v726 = vadd.f32 %v470, %v575
      %v727 = vadd.f32 %v471, %v575
      %v728 = vadd.f32 %v472, %v580
      %v729 = vadd.f32 %v473, %v580
      %v730 = vadd.f32 %v474, %v585
      %v731 = vadd.f32 %v475, %v585
      %v732 = vadd.f32 %v476, %v590
      %v733 = vadd.f32 %v477, %v590
      %v734 = vadd.f32 %v478, %v595
      %v735 = vadd.f32 %v479, %v595
      %v736 = vadd.f32 %v480, %v600
      %v737 = vadd.f32 %v481, %v600
      %v738 = vadd.f32 %v482, %v605
      %v739 = vadd.f32 %v483, %v605
      %v740 = vadd.f32 %v484, %v610
      %v741 = vadd.f32 %v485, %v610
      %v742 = vadd.f32 %v486, %v615
      %v743 = vadd.f32 %v487, %v615
      %v744 = vadd.f32 %v488, %v620
      %v745 = vadd.f32 %v489, %v620
      %v746 = vadd.f32 %v490, %v625
      %v747 = vadd.f32 %v491, %v625
      %v748 = vadd.f32 %v492, %v630
      %v749 = vadd.f32 %v493, %v630
      %v750 = vadd.f32 %v494, %v635
      %v751 = vadd.f32 %v495, %v635
      %v752 = vadd.f32 %v496, %v640
      %v753 = vadd.f32 %v497, %v640
      %v754 = vadd.f32 %v498, %v645
      %v755 = vadd.f32 %v499, %v645
      %v756 = vadd.f32 %v500, %v650
      %v757 = vadd.f32 %v501, %v650
      %v758 = vadd.f32 %v502, %v655
      %v759 = vadd.f32 %v503, %v655
      %v760 = vadd.f32 %v504, %v660
      %v761 = vadd.f32 %v505, %v660
      %v762 = vadd.f32 %v506, %v665
      %v763 = vadd.f32 %v507, %v665
      %v764 = vadd.f32 %v508, %v670
      %v765 = vadd.f32 %v509, %v670
      %v766 = vadd.f32 %v510, %v675
      %v767 = vadd.f32 %v511, %v675
      %v768 = vadd.f32 %v512, %v680
      %v769 = vadd.f32 %v513, %v680
      %v770 = vadd.f32 %v514, %v685
      %v771 = vadd.f32 %v515, %v685
      %v772 = vadd.f32 %v516, %v690
      %v773 = vadd.f32 %v517, %v690
      %v774 = vadd.f32 %v518, %v695
      %v775 = vadd.f32 %v519, %v695
      %v776 = vadd.f32 %v520, %v700
      %v777 = vadd.f32 %v521, %v700
      %v778 = vadd.f32 %v522, %v705
      %v779 = vadd.f32 %v523, %v705
      %v780 = vadd.f32 %v524, %v710
      %v781 = vadd.f32 %v525, %v710
      %v782 = vadd.f32 %v526, %v715
      %v783 = vadd.f32 %v527, %v715
      %v784 = vadd.f32 %v528, %v720
      %v785 = vadd.f32 %v529, %v720
      %v786 = vmax.f32 %v722, 0.0
      %v787 = vmax.f32 %v723, 0.0
      %v788 = vmax.f32 %v724, 0.0
      %v789 = vmax.f32 %v725, 0.0
      %v790 = vmax.f32 %v726, 0.0
      %v791 = vmax.f32 %v727, 0.0
      %v792 = vmax.f32 %v728, 0.0
      %v793 = vmax.f32 %v729, 0.0
      %v794 = vmax.f32 %v730, 0.0
      %v795 = vmax.f32 %v731, 0.0
      %v796 = vmax.f32 %v732, 0.0
      %v797 = vmax.f32 %v733, 0.0
      %v798 = vmax.f32 %v734, 0.0
      %v799 = vmax.f32 %v735, 0.0
      %v800 = vmax.f32 %v736, 0.0
      %v801 = vmax.f32 %v737, 0.0
      %v802 = vmax.f32 %v738, 0.0
      %v803 = vmax.f32 %v739, 0.0
      %v804 = vmax.f32 %v740, 0.0
      %v805 = vmax.f32 %v741, 0.0
      %v806 = vmax.f32 %v742, 0.0
      %v807 = vmax.f32 %v743, 0.0
      %v808 = vmax.f32 %v744, 0.0
      %v809 = vmax.f32 %v745, 0.0
      %v810 = vmax.f32 %v746, 0.0
      %v811 = vmax.f32 %v747, 0.0
      %v812 = vmax.f32 %v748, 0.0
      %v813 = vmax.f32 %v749, 0.0
      %v814 = vmax.f32 %v750, 0.0
      %v815 = vmax.f32 %v751, 0.0
      %v816 = vmax.f32 %v752, 0.0
      %v817 = vmax.f32 %v753, 0.0
      %v818 = vmax.f32 %v754, 0.0
      %v819 = vmax.f32 %v755, 0.0
      %v820 = vmax.f32 %v756, 0.0
      %v821 = vmax.f32 %v757, 0.0
      %v822 = vmax.f32 %v758, 0.0
      %v823 = vmax.f32 %v759, 0.0
      %v824 = vmax.f32 %v760, 0.0
      %v825 = vmax.f32 %v761, 0.0
      %v826 = vmax.f32 %v762, 0.0
      %v827 = vmax.f32 %v763, 0.0
      %v828 = vmax.f32 %v764, 0.0
      %v829 = vmax.f32 %v765, 0.0
      %v830 = vmax.f32 %v766, 0.0
      %v831 = vmax.f32 %v767, 0.0
      %v832 = vmax.f32 %v768, 0.0
      %v833 = vmax.f32 %v769, 0.0
      %v834 = vmax.f32 %v770, 0.0
      %v835 = vmax.f32 %v771, 0.0
      %v836 = vmax.f32 %v772, 0.0
      %v837 = vmax.f32 %v773, 0.0
      %v838 = vmax.f32 %v774, 0.0
      %v839 = vmax.f32 %v775, 0.0
      %v840 = vmax.f32 %v776, 0.0
      %v841 = vmax.f32 %v777, 0.0
      %v842 = vmax.f32 %v778, 0.0
      %v843 = vmax.f32 %v779, 0.0
      %v844 = vmax.f32 %v780, 0.0
      %v845 = vmax.f32 %v781, 0.0
      %v846 = vmax.f32 %v782, 0.0
      %v847 = vmax.f32 %v783, 0.0
      %v848 = vmax.f32 %v784, 0.0
      %v849 = vmax.f32 %v785, 0.0
      %850 = vst [vmem:[%s208] sm:$0xff] %v786
      %851 = vst [vmem:[%s208 + $0x8] sm:$0xff] %v787
      %852 = vst [vmem:[%s208 + $0x10] sm:$0xff] %v788
      %853 = vst [vmem:[%s208 + $0x18] sm:$0xff] %v789
      %854 = vst [vmem:[%s208 + $0x20] sm:$0xff] %v790
      %855 = vst [vmem:[%s208 + $0x28] sm:$0xff] %v791
      %856 = vst [vmem:[%s208 + $0x30] sm:$0xff] %v792
      %857 = vst [vmem:[%s208 + $0x38] sm:$0xff] %v793
      %858 = vst [vmem:[%s208 + $0x40] sm:$0xff] %v794
      %859 = vst [vmem:[%s208 + $0x48] sm:$0xff] %v795
      %860 = vst [vmem:[%s208 + $0x50] sm:$0xff] %v796
      %861 = vst [vmem:[%s208 + $0x58] sm:$0xff] %v797
      %862 = vst [vmem:[%s208 + $0x60] sm:$0xff] %v798
      %863 = vst [vmem:[%s208 + $0x68] sm:$0xff] %v799
      %864 = vst [vmem:[%s208 + $0x70] sm:$0xff] %v800
      %865 = vst [vmem:[%s208 + $0x78] sm:$0xff] %v801
      %866 = vst [vmem:[%s208 + $0x80] sm:$0xff] %v802
      %867 = vst [vmem:[%s208 + $0x88] sm:$0xff] %v803
      %868 = vst [vmem:[%s208 + $0x90] sm:$0xff] %v804
      %869 = vst [vmem:[%s208 + $0x98] sm:$0xff] %v805
      %870 = vst [vmem:[%s208 + $0xa0] sm:$0xff] %v806
      %871 = vst [vmem:[%s208 + $0xa8] sm:$0xff] %v807
      %872 = vst [vmem:[%s208 + $0xb0] sm:$0xff] %v808
      %873 = vst [vmem:[%s208 + $0xb8] sm:$0xff] %v809
      %874 = vst [vmem:[%s208 + $0xc0] sm:$0xff] %v810
      %875 = vst [vmem:[%s208 + $0xc8] sm:$0xff] %v811
      %876 = vst [vmem:[%s208 + $0xd0] sm:$0xff] %v812
      %877 = vst [vmem:[%s208 + $0xd8] sm:$0xff] %v813
      %878 = vst [vmem:[%s208 + $0xe0] sm:$0xff] %v814
      %879 = vst [vmem:[%s208 + $0xe8] sm:$0xff] %v815
      %880 = vst [vmem:[%s208 + $0xf0] sm:$0xff] %v816
      %881 = vst [vmem:[%s208 + $0xf8] sm:$0xff] %v817
      %882 = vst [vmem:[%s208 + $0x100] sm:$0xff] %v818
      %883 = vst [vmem:[%s208 + $0x108] sm:$0xff] %v819
      %884 = vst [vmem:[%s208 + $0x110] sm:$0xff] %v820
      %885 = vst [vmem:[%s208 + $0x118] sm:$0xff] %v821
      %886 = vst [vmem:[%s208 + $0x120] sm:$0xff] %v822
      %887 = vst [vmem:[%s208 + $0x128] sm:$0xff] %v823
      %888 = vst [vmem:[%s208 + $0x130] sm:$0xff] %v824
      %889 = vst [vmem:[%s208 + $0x138] sm:$0xff] %v825
      %890 = vst [vmem:[%s208 + $0x140] sm:$0xff] %v826
      %891 = vst [vmem:[%s208 + $0x148] sm:$0xff] %v827
      %892 = vst [vmem:[%s208 + $0x150] sm:$0xff] %v828
      %893 = vst [vmem:[%s208 + $0x158] sm:$0xff] %v829
      %894 = vst [vmem:[%s208 + $0x160] sm:$0xff] %v830
      %895 = vst [vmem:[%s208 + $0x168] sm:$0xff] %v831
      %896 = vst [vmem:[%s208 + $0x170] sm:$0xff] %v832
      %897 = vst [vmem:[%s208 + $0x178] sm:$0xff] %v833
      %898 = vst [vmem:[%s208 + $0x180] sm:$0xff] %v834
      %899 = vst [vmem:[%s208 + $0x188] sm:$0xff] %v835
      %900 = vst [vmem:[%s208 + $0x190] sm:$0xff] %v836
      %901 = vst [vmem:[%s208 + $0x198] sm:$0xff] %v837
      %902 = vst [vmem:[%s208 + $0x1a0] sm:$0xff] %v838
      %903 = vst [vmem:[%s208 + $0x1a8] sm:$0xff] %v839
      %904 = vst [vmem:[%s208 + $0x1b0] sm:$0xff] %v840
      %905 = vst [vmem:[%s208 + $0x1b8] sm:$0xff] %v841
      %906 = vst [vmem:[%s208 + $0x1c0] sm:$0xff] %v842
      %907 = vst [vmem:[%s208 + $0x1c8] sm:$0xff] %v843
      %908 = vst [vmem:[%s208 + $0x1d0] sm:$0xff] %v844
      %909 = vst [vmem:[%s208 + $0x1d8] sm:$0xff] %v845
      %910 = vst [vmem:[%s208 + $0x1e0] sm:$0xff] %v846
      %911 = vst [vmem:[%s208 + $0x1e8] sm:$0xff] %v847
      %912 = vst [vmem:[%s208 + $0x1f0] sm:$0xff] %v848
      %913 = vst [vmem:[%s208 + $0x1f8] sm:$0xff] %v849
      %s914 = smul.u32 2, %s19
      %p915 = scmp.lt.s32.totalorder %s18, 1
      %s916 = scalar_select %p915, %s18, 1
      %p917 = scmp.lt.s32.totalorder %s914, 1
      %s918 = scalar_select %p917, %s914, 1
      %s919 = smul.addr %s916, 64
      %s920 = sadd.s32 %s918, %s919
      %s921 = smul.addr %s920, 8
      %s922 = scalar_lea.vmem %s3, %s921
      // Predicated region
      $region33: #{model_forward.5} parent=31 // pred_check
        %p923 = pneg %p116
      $region34: #{model_forward.5} parent=31 // pred_check_branch
        %925 = sbr.rel (%p923) target = $region36
      $region35: #{model_forward.5} parent=31 // pred_region
        %s926 = smul.u32 2, %s19
      $region36: #{model_forward.5} parent=31 // pred_fallthru
        _
    $region32: #{model_forward.5} parent=5 // pred_fallthru
      _
    %p927 = scmp.le.s32.totalorder 2, %s9
    // Predicated region
    $region37: #{model_forward.5} parent=5 // pred_check
      %p928 = pneg %p927
    $region38: #{model_forward.5} parent=5 // pred_check_branch
      %930 = sbr.rel (%p928) target = $region40
    $region39: #{model_forward.5} parent=5 // pred_region
      %s931 = ssub.s32 %s9, 2
      // Predicated region
      $region41: #{model_forward.5} parent=39 // pred_check
        %p932 = pneg %p122
      $region42: #{model_forward.5} parent=39 // pred_check_branch
        %934 = sbr.rel (%p932) target = $region44
      $region43: #{model_forward.5} parent=39 // pred_region
        %s935 = smul.u32 2, %s21
        %p936 = scmp.lt.s32.totalorder %s20, 1
        %s937 = scalar_select %p936, %s20, 1
        %p938 = scmp.lt.s32.totalorder %s935, 1
        %s939 = scalar_select %p938, %s935, 1
        %s940 = smul.addr %s937, 64
        %s941 = sadd.s32 %s939, %s940
        %s942 = smul.addr %s941, 8
        %s943 = scalar_lea.vmem %s3, %s942
      $region44: #{model_forward.5} parent=39 // pred_fallthru
        _
    $region40: #{model_forward.5} parent=5 // pred_fallthru
      _
  $region6: #{model_forward.5} parent=0 // loop_footer
    %s13 = sadd.s32 1, %s9
  $region7: #{model_forward.5} parent=0 // loop_footer_branch
    %8 = sbr.rel target = $region3
  $region8: #{model_forward.5} parent=0 // loop_exit
    _

// kernel: model_forward.3
$region0: #{model_forward.3}
  #allocation0 [shape = 'u32[]', space=smem, size = 0x4, offset = 0x4, fixed_abs, tag = 'smem constant byte address 0x4 - core index']
  #allocation1 [shape = 'u32[144,128]{1,0:T(1,128)}', space=vmem, size = 0x12000, scoped, tag = 'internal scratch']
  %s0 = inlined_call_operand.vmem [shape: f32[2,384,256], index: 0, kind: input, shape index: {}]
  %s1 = inlined_call_operand.vmem [shape: f32[256,384], index: 1, kind: input, shape index: {}]
  %s2 = inlined_call_operand.vmem [shape: f32[2,256,256], index: 2, kind: output, shape index: {0}]
  %s3 = inlined_call_operand.vmem [shape: f32[2,1,256,1], index: 3, kind: output, shape index: {1}]
  %s4 = inlined_call_operand.vmem [shape: f32[2,1,256,1], index: 4, kind: output, shape index: {2}]
  %5 = xla_tuple %s2, %s3, %s4
  %s6 = sld [smem:[#allocation0]]
  $region57: #{model_forward.3} parent=0
    _
  %s8 = ssub.s32 1, %s6
  %s9 = scalar_select 0, %s8, %s6
  loop: start=0, step=1, limit=4
  $region2: #{model_forward.3} parent=0 // loop_pre_header
    _
  $region3: #{model_forward.3} parent=0 // loop_header
    %s11 = sphi 0, %s15
    %p12 = scmp.ge.s32.totalorder %s11, 4
    %s18 = sphi 0, %s30
    %s19 = sphi 0, %s26
    %s20 = sphi 0, %s18
    %s21 = sphi 0, %s19
    %s22 = sphi 0, %s20
    %s23 = sphi 0, %s21
    %s35 = sphi 0, %s37
    %s38 = sphi 0, %s35
    %s39 = sphi 0, %s38
    %s55 = sphi 0, %s39
    %s59 = sphi 0, %s59
    %s61 = sphi 0, %s59
    %s62 = sphi 0, %s61
    %s76 = sphi 0, %s62
    %s84 = sphi 0, %s86
    %s87 = sphi 0, %s84
    %s88 = sphi 0, %s87
    %s104 = sphi 0, %s88
    %s112 = sphi 0, %s114
    %s115 = sphi 0, %s112
    %s116 = sphi 0, %s115
    %s132 = sphi 0, %s116
    %s140 = sphi 0, %s142
    %s143 = sphi 0, %s140
    %s144 = sphi 0, %s143
    %s160 = sphi 0, %s144
  $region4: #{model_forward.3} parent=0 // loop_header_branch
    %14 = sbr.rel (%p12) target = $region8
  $region5: #{model_forward.3} parent=0 // loop_body
    %s16 = ssub.s32 %s11, 1
    %s17 = ssub.s32 %s11, 2
    %s24 = sadd.s32 1, %s19
    %p25 = scmp.ge.s32.totalorder %s24, 1
    %s26 = scalar_select %p25, 0, %s24
    %s27 = sadd.s32 1, %s18
    %s28 = scalar_select %p25, %s27, %s18
    %p29 = scmp.ge.s32.totalorder %s28, 2
    %s30 = scalar_select %p29, 0, %s28
    %s31 = ssub.s32 %s18, %s30
    %s32 = ssub.s32 %s19, %s26
    %s33 = sor.u32 %s31, %s32
    %p34 = scmp.eq.s32.totalorder %s33, 0
    %s36 = sadd.s32 %s35, 1
    %s37 = scalar_select %p34, %s35, %s36
    %p40 = pneg %p34
    %p41 = scmp.eq.s32.totalorder %s11, 1
    %p42 = por %p40, %p41
    %p43 = scmp.ne.s32.totalorder %s35, %s38
    %p44 = scmp.eq.s32.totalorder %s11, 0
    %p45 = por %p43, %p44
    %p46 = scmp.ne.s32.totalorder %s35, %s38
    %p47 = scmp.eq.s32.totalorder %s16, 1
    %p48 = por %p46, %p47
    %p49 = scmp.ne.s32.totalorder %s38, %s39
    %p50 = scmp.eq.s32.totalorder %s16, 0
    %p51 = por %p49, %p50
    %p52 = scmp.ne.s32.totalorder %s38, %s39
    %p53 = scmp.eq.s32.totalorder %s17, 1
    %p54 = por %p52, %p53
    %p56 = scmp.ne.s32.totalorder %s39, %s55
    %p57 = scmp.eq.s32.totalorder %s17, 0
    %p58 = por %p56, %p57
    %s60 = sadd.s32 %s59, 1
    %p63 = scmp.eq.s32.totalorder %s11, 1
    %p64 = scmp.ne.s32.totalorder %s59, %s61
    %p65 = scmp.eq.s32.totalorder %s11, 0
    %p66 = por %p64, %p65
    %p67 = scmp.ne.s32.totalorder %s59, %s61
    %p68 = scmp.eq.s32.totalorder %s16, 1
    %p69 = por %p67, %p68
    %p70 = scmp.ne.s32.totalorder %s61, %s62
    %p71 = scmp.eq.s32.totalorder %s16, 0
    %p72 = por %p70, %p71
    %p73 = scmp.ne.s32.totalorder %s61, %s62
    %p74 = scmp.eq.s32.totalorder %s17, 1
    %p75 = por %p73, %p74
    %p77 = scmp.ne.s32.totalorder %s62, %s76
    %p78 = scmp.eq.s32.totalorder %s17, 0
    %p79 = por %p77, %p78
    %s80 = ssub.s32 %s18, %s30
    %s81 = ssub.s32 %s19, %s26
    %s82 = sor.u32 %s80, %s81
    %p83 = scmp.eq.s32.totalorder %s82, 0
    %s85 = sadd.s32 %s84, 1
    %s86 = scalar_select %p83, %s84, %s85
    %p89 = pneg %p83
    %p90 = scmp.eq.s32.totalorder %s11, 1
    %p91 = por %p89, %p90
    %p92 = scmp.ne.s32.totalorder %s84, %s87
    %p93 = scmp.eq.s32.totalorder %s11, 0
    %p94 = por %p92, %p93
    %p95 = scmp.ne.s32.totalorder %s84, %s87
    %p96 = scmp.eq.s32.totalorder %s16, 1
    %p97 = por %p95, %p96
    %p98 = scmp.ne.s32.totalorder %s87, %s88
    %p99 = scmp.eq.s32.totalorder %s16, 0
    %p100 = por %p98, %p99
    %p101 = scmp.ne.s32.totalorder %s87, %s88
    %p102 = scmp.eq.s32.totalorder %s17, 1
    %p103 = por %p101, %p102
    %p105 = scmp.ne.s32.totalorder %s88, %s104
    %p106 = scmp.eq.s32.totalorder %s17, 0
    %p107 = por %p105, %p106
    %s108 = ssub.s32 %s18, %s30
    %s109 = ssub.s32 %s19, %s26
    %s110 = sor.u32 %s108, %s109
    %p111 = scmp.eq.s32.totalorder %s110, 0
    %s113 = sadd.s32 %s112, 1
    %s114 = scalar_select %p111, %s112, %s113
    %p117 = pneg %p111
    %p118 = scmp.eq.s32.totalorder %s11, 1
    %p119 = por %p117, %p118
    %p120 = scmp.ne.s32.totalorder %s112, %s115
    %p121 = scmp.eq.s32.totalorder %s11, 0
    %p122 = por %p120, %p121
    %p123 = scmp.ne.s32.totalorder %s112, %s115
    %p124 = scmp.eq.s32.totalorder %s16, 1
    %p125 = por %p123, %p124
    %p126 = scmp.ne.s32.totalorder %s115, %s116
    %p127 = scmp.eq.s32.totalorder %s16, 0
    %p128 = por %p126, %p127
    %p129 = scmp.ne.s32.totalorder %s115, %s116
    %p130 = scmp.eq.s32.totalorder %s17, 1
    %p131 = por %p129, %p130
    %p133 = scmp.ne.s32.totalorder %s116, %s132
    %p134 = scmp.eq.s32.totalorder %s17, 0
    %p135 = por %p133, %p134
    %s136 = ssub.s32 %s18, %s30
    %s137 = ssub.s32 %s19, %s26
    %s138 = sor.u32 %s136, %s137
    %p139 = scmp.eq.s32.totalorder %s138, 0
    %s141 = sadd.s32 %s140, 1
    %s142 = scalar_select %p139, %s140, %s141
    %p145 = pneg %p139
    %p146 = scmp.eq.s32.totalorder %s11, 1
    %p147 = por %p145, %p146
    %p148 = scmp.ne.s32.totalorder %s140, %s143
    %p149 = scmp.eq.s32.totalorder %s11, 0
    %p150 = por %p148, %p149
    %p151 = scmp.ne.s32.totalorder %s140, %s143
    %p152 = scmp.eq.s32.totalorder %s16, 1
    %p153 = por %p151, %p152
    %p154 = scmp.ne.s32.totalorder %s143, %s144
    %p155 = scmp.eq.s32.totalorder %s16, 0
    %p156 = por %p154, %p155
    %p157 = scmp.ne.s32.totalorder %s143, %s144
    %p158 = scmp.eq.s32.totalorder %s17, 1
    %p159 = por %p157, %p158
    %p161 = scmp.ne.s32.totalorder %s144, %s160
    %p162 = scmp.eq.s32.totalorder %s17, 0
    %p163 = por %p161, %p162
    %p164 = scmp.le.s32.totalorder 1, %s11
    %p165 = scmp.lt.s32.totalorder %s11, 3
    %p166 = pnand %p164, %p165
    %p167 = pneg %p166
    // Predicated region
    $region9: #{model_forward.3} parent=5 // pred_check
      _
    $region10: #{model_forward.3} parent=5 // pred_check_branch
      %169 = sbr.rel (%p166) target = $region12
    $region11: #{model_forward.3} parent=5 // pred_region
      %s170 = ssub.s32 %s11, 1
      // Predicated region
      $region13: #{model_forward.3} parent=11 // pred_check
        %p171 = pneg %p72
      $region14: #{model_forward.3} parent=11 // pred_check_branch
        %173 = sbr.rel (%p171) target = $region16
      $region15: #{model_forward.3} parent=11 // pred_region
        _
      $region16: #{model_forward.3} parent=11 // pred_fallthru
        _
    $region12: #{model_forward.3} parent=5 // pred_fallthru
      _
    %p174 = scmp.lt.s32.totalorder %s11, 2
    // Predicated region
    $region17: #{model_forward.3} parent=5 // pred_check
      %p175 = pneg %p174
    $region18: #{model_forward.3} parent=5 // pred_check_branch
      %177 = sbr.rel (%p175) target = $region20
    $region19: #{model_forward.3} parent=5 // pred_region
      // Predicated region
      $region21: #{model_forward.3} parent=19 // pred_check
        %p178 = pneg %p45
      $region22: #{model_forward.3} parent=19 // pred_check_branch
        %180 = sbr.rel (%p178) target = $region24
      $region23: #{model_forward.3} parent=19 // pred_region
        %s181 = smul.u32 2, %s19
        %p182 = scmp.lt.s32.totalorder %s18, 1
        %s183 = scalar_select %p182, %s18, 1
        %p184 = scmp.lt.s32.totalorder %s181, 1
        %s185 = scalar_select %p184, %s181, 1
        %s186 = smul.addr %s183, 96
        %s187 = sadd.s32 %s185, %s186
        %s188 = smul.addr %s187, 8
        %s189 = scalar_lea.vmem %s0, %s188
        %s190 = smul.u32 2, %s19
      $region24: #{model_forward.3} parent=19 // pred_fallthru
        _
    $region20: #{model_forward.3} parent=5 // pred_fallthru
      _
    %p191 = scmp.le.s32.totalorder 1, %s11
    %p192 = scmp.lt.s32.totalorder %s11, 3
    %p193 = pnand %p191, %p192
    %p194 = pneg %p193
    // Predicated region
    $region25: #{model_forward.3} parent=5 // pred_check
      _
    $region26: #{model_forward.3} parent=5 // pred_check_branch
      %196 = sbr.rel (%p193) target = $region28
    $region27: #{model_forward.3} parent=5 // pred_region
      %s197 = ssub.s32 %s11, 1
      %s198 = smul.u32 2, %s21
      %p199 = scmp.lt.s32.totalorder %s20, 1
      %s200 = scalar_select %p199, %s20, 1
      %p201 = scmp.lt.s32.totalorder %s198, 1
      %s202 = scalar_select %p201, %s198, 1
      %s203 = smul.addr %s200, 96
      %s204 = sadd.s32 %s202, %s203
      %s205 = smul.addr %s204, 8
      %s206 = scalar_lea.vmem %s0, %s205
      %p207 = pneg %p51
      %p208 = pneg %p48
      %p209 = pneg %p72
      %p210 = pneg %p69
      %p211 = pneg %p100
      %p212 = pneg %p97
      %s213 = smul.u32 2, %s21
      %p214 = scmp.lt.s32.totalorder %s20, 1
      %s215 = scalar_select %p214, %s20, 1
      %p216 = scmp.lt.s32.totalorder %s213, 1
      %s217 = scalar_select %p216, %s213, 1
      %s218 = smul.addr %s215, 64
      %s219 = sadd.s32 %s217, %s218
      %s220 = smul.addr %s219, 8
      %s221 = scalar_lea.vmem %s2, %s220
      %p222 = pneg %p128
      %p223 = pneg %p125
      %p224 = scmp.lt.s32.totalorder %s20, 1
      %s225 = scalar_select %p224, %s20, 1
      %p226 = scmp.lt.s32.totalorder %s21, 0
      %s227 = scalar_select %p226, %s21, 0
      %s228 = smul.addr %s227, 32
      %s229 = smul.addr %s225, 32
      %s230 = sadd.s32 %s228, %s229
      %s231 = smul.addr %s230, 8
      %s232 = scalar_lea.vmem %s3, %s231
      %p233 = pneg %p156
      %p234 = pneg %p153
      %p235 = scmp.lt.s32.totalorder %s20, 1
      %s236 = scalar_select %p235, %s20, 1
      %p237 = scmp.lt.s32.totalorder %s21, 0
      %s238 = scalar_select %p237, %s21, 0
      %s239 = smul.addr %s238, 32
      %s240 = smul.addr %s236, 32
      %s241 = sadd.s32 %s239, %s240
      %s242 = smul.addr %s241, 8
      %s243 = scalar_lea.vmem %s4, %s242
      %s244 = smul.u32 2, %s21
      %p245 = scmp.lt.s32.totalorder %s20, 1
      %s246 = scalar_select %p245, %s20, 1
      %p247 = scmp.lt.s32.totalorder %s244, 1
      %s248 = scalar_select %p247, %s244, 1
      %s249 = smul.addr %s246, 96
      %s250 = sadd.s32 %s248, %s249
      %s251 = smul.addr %s250, 8
      %s252 = scalar_lea.vmem %s0, %s251
      %s253 = smul.u32 2, %s21
      %s254 = smul.u32 2, %s21
      %p255 = scmp.lt.s32.totalorder %s20, 1
      %s256 = scalar_select %p255, %s20, 1
      %p257 = scmp.lt.s32.totalorder %s254, 1
      %s258 = scalar_select %p257, %s254, 1
      %s259 = smul.addr %s256, 64
      %s260 = sadd.s32 %s258, %s259
      %s261 = smul.addr %s260, 8
      %s262 = scalar_lea.vmem %s2, %s261
      %s263 = smul.u32 2, %s21
      %p264 = scmp.lt.s32.totalorder %s20, 1
      %s265 = scalar_select %p264, %s20, 1
      %p266 = scmp.lt.s32.totalorder %s21, 0
      %s267 = scalar_select %p266, %s21, 0
      %s268 = smul.addr %s267, 32
      %s269 = smul.addr %s265, 32
      %s270 = sadd.s32 %s268, %s269
      %s271 = smul.addr %s270, 8
      %s272 = scalar_lea.vmem %s3, %s271
      %p273 = scmp.lt.s32.totalorder %s20, 1
      %s274 = scalar_select %p273, %s20, 1
      %p275 = scmp.lt.s32.totalorder %s21, 0
      %s276 = scalar_select %p275, %s21, 0
      %s277 = smul.addr %s276, 32
      %s278 = smul.addr %s274, 32
      %s279 = sadd.s32 %s277, %s278
      %s280 = smul.addr %s279, 8
      %s281 = scalar_lea.vmem %s4, %s280
      %v282 = vld [vmem:[%s1] sm:$0xff]
      %v283 = vld [vmem:[%s1 + $0x8] sm:$0xff]
      %v284 = vld [vmem:[%s1 + $0x10] sm:$0xff]
      %v285 = vld [vmem:[%s1 + $0x18] sm:$0xff]
      %v286 = vld [vmem:[%s1 + $0x20] sm:$0xff]
      %v287 = vld [vmem:[%s1 + $0x28] sm:$0xff]
      %v288 = vld [vmem:[%s1 + $0x30] sm:$0xff]
      %v289 = vld [vmem:[%s1 + $0x38] sm:$0xff]
      %v290 = vld [vmem:[%s1 + $0x40] sm:$0xff]
      %v291 = vld [vmem:[%s1 + $0x48] sm:$0xff]
      %v292 = vld [vmem:[%s1 + $0x50] sm:$0xff]
      %v293 = vld [vmem:[%s1 + $0x58] sm:$0xff]
      %v294 = vld [vmem:[%s1 + $0x60] sm:$0xff]
      %v295 = vld [vmem:[%s1 + $0x68] sm:$0xff]
      %v296 = vld [vmem:[%s1 + $0x70] sm:$0xff]
      %v297 = vld [vmem:[%s1 + $0x78] sm:$0xff]
      %v298 = vld [vmem:[%s1 + $0x80] sm:$0xff]
      %v299 = vld [vmem:[%s1 + $0x88] sm:$0xff]
      %v300 = vld [vmem:[%s1 + $0x90] sm:$0xff]
      %v301 = vld [vmem:[%s1 + $0x98] sm:$0xff]
      %v302 = vld [vmem:[%s1 + $0xa0] sm:$0xff]
      %v303 = vld [vmem:[%s1 + $0xa8] sm:$0xff]
      %v304 = vld [vmem:[%s1 + $0xb0] sm:$0xff]
      %v305 = vld [vmem:[%s1 + $0xb8] sm:$0xff]
      %v306 = vld [vmem:[%s1 + $0xc0] sm:$0xff]
      %v307 = vld [vmem:[%s1 + $0xc8] sm:$0xff]
      %v308 = vld [vmem:[%s1 + $0xd0] sm:$0xff]
      %v309 = vld [vmem:[%s1 + $0xd8] sm:$0xff]
      %v310 = vld [vmem:[%s1 + $0xe0] sm:$0xff]
      %v311 = vld [vmem:[%s1 + $0xe8] sm:$0xff]
      %v312 = vld [vmem:[%s1 + $0xf0] sm:$0xff]
      %v313 = vld [vmem:[%s1 + $0xf8] sm:$0xff]
      %v314 = vld [vmem:[%s1 + $0x100] sm:$0xff]
      %v315 = vld [vmem:[%s1 + $0x108] sm:$0xff]
      %v316 = vld [vmem:[%s1 + $0x110] sm:$0xff]
      %v317 = vld [vmem:[%s1 + $0x118] sm:$0xff]
      %v318 = vld [vmem:[%s1 + $0x120] sm:$0xff]
      %v319 = vld [vmem:[%s1 + $0x128] sm:$0xff]
      %v320 = vld [vmem:[%s1 + $0x130] sm:$0xff]
      %v321 = vld [vmem:[%s1 + $0x138] sm:$0xff]
      %v322 = vld [vmem:[%s1 + $0x140] sm:$0xff]
      %v323 = vld [vmem:[%s1 + $0x148] sm:$0xff]
      %v324 = vld [vmem:[%s1 + $0x150] sm:$0xff]
      %v325 = vld [vmem:[%s1 + $0x158] sm:$0xff]
      %v326 = vld [vmem:[%s1 + $0x160] sm:$0xff]
      %v327 = vld [vmem:[%s1 + $0x168] sm:$0xff]
      %v328 = vld [vmem:[%s1 + $0x170] sm:$0xff]
      %v329 = vld [vmem:[%s1 + $0x178] sm:$0xff]
      %v330 = vld [vmem:[%s1 + $0x180] sm:$0xff]
      %v331 = vld [vmem:[%s1 + $0x188] sm:$0xff]
      %v332 = vld [vmem:[%s1 + $0x190] sm:$0xff]
      %v333 = vld [vmem:[%s1 + $0x198] sm:$0xff]
      %v334 = vld [vmem:[%s1 + $0x1a0] sm:$0xff]
      %v335 = vld [vmem:[%s1 + $0x1a8] sm:$0xff]
      %v336 = vld [vmem:[%s1 + $0x1b0] sm:$0xff]
      %v337 = vld [vmem:[%s1 + $0x1b8] sm:$0xff]
      %v338 = vld [vmem:[%s1 + $0x1c0] sm:$0xff]
      %v339 = vld [vmem:[%s1 + $0x1c8] sm:$0xff]
      %v340 = vld [vmem:[%s1 + $0x1d0] sm:$0xff]
      %v341 = vld [vmem:[%s1 + $0x1d8] sm:$0xff]
      %v342 = vld [vmem:[%s1 + $0x1e0] sm:$0xff]
      %v343 = vld [vmem:[%s1 + $0x1e8] sm:$0xff]
      %v344 = vld [vmem:[%s1 + $0x1f0] sm:$0xff]
      %v345 = vld [vmem:[%s1 + $0x1f8] sm:$0xff]
      %v346 = vld [vmem:[%s1 + $0x200] sm:$0xff]
      %v347 = vld [vmem:[%s1 + $0x208] sm:$0xff]
      %v348 = vld [vmem:[%s1 + $0x210] sm:$0xff]
      %v349 = vld [vmem:[%s1 + $0x218] sm:$0xff]
      %v350 = vld [vmem:[%s1 + $0x220] sm:$0xff]
      %v351 = vld [vmem:[%s1 + $0x228] sm:$0xff]
      %v352 = vld [vmem:[%s1 + $0x230] sm:$0xff]
      %v353 = vld [vmem:[%s1 + $0x238] sm:$0xff]
      %v354 = vld [vmem:[%s1 + $0x240] sm:$0xff]
      %v355 = vld [vmem:[%s1 + $0x248] sm:$0xff]
      %v356 = vld [vmem:[%s1 + $0x250] sm:$0xff]
      %v357 = vld [vmem:[%s1 + $0x258] sm:$0xff]
      %v358 = vld [vmem:[%s1 + $0x260] sm:$0xff]
      %v359 = vld [vmem:[%s1 + $0x268] sm:$0xff]
      %v360 = vld [vmem:[%s1 + $0x270] sm:$0xff]
      %v361 = vld [vmem:[%s1 + $0x278] sm:$0xff]
      %v362 = vld [vmem:[%s1 + $0x280] sm:$0xff]
      %v363 = vld [vmem:[%s1 + $0x288] sm:$0xff]
      %v364 = vld [vmem:[%s1 + $0x290] sm:$0xff]
      %v365 = vld [vmem:[%s1 + $0x298] sm:$0xff]
      %v366 = vld [vmem:[%s1 + $0x2a0] sm:$0xff]
      %v367 = vld [vmem:[%s1 + $0x2a8] sm:$0xff]
      %v368 = vld [vmem:[%s1 + $0x2b0] sm:$0xff]
      %v369 = vld [vmem:[%s1 + $0x2b8] sm:$0xff]
      %v370 = vld [vmem:[%s1 + $0x2c0] sm:$0xff]
      %v371 = vld [vmem:[%s1 + $0x2c8] sm:$0xff]
      %v372 = vld [vmem:[%s1 + $0x2d0] sm:$0xff]
      %v373 = vld [vmem:[%s1 + $0x2d8] sm:$0xff]
      %v374 = vld [vmem:[%s1 + $0x2e0] sm:$0xff]
      %v375 = vld [vmem:[%s1 + $0x2e8] sm:$0xff]
      %v376 = vld [vmem:[%s1 + $0x2f0] sm:$0xff]
      %v377 = vld [vmem:[%s1 + $0x2f8] sm:$0xff]
      %v378 = vld [vmem:[%s252] sm:$0xff]
      %v379 = vld [vmem:[%s252 + $0x8] sm:$0xff]
      %v380 = vld [vmem:[%s252 + $0x10] sm:$0xff]
      %v381 = vld [vmem:[%s252 + $0x18] sm:$0xff]
      %v382 = vld [vmem:[%s252 + $0x20] sm:$0xff]
      %v383 = vld [vmem:[%s252 + $0x28] sm:$0xff]
      %v384 = vld [vmem:[%s252 + $0x30] sm:$0xff]
      %v385 = vld [vmem:[%s252 + $0x38] sm:$0xff]
      %v386 = vld [vmem:[%s252 + $0x40] sm:$0xff]
      %v387 = vld [vmem:[%s252 + $0x48] sm:$0xff]
      %v388 = vld [vmem:[%s252 + $0x50] sm:$0xff]
      %v389 = vld [vmem:[%s252 + $0x58] sm:$0xff]
      %v390 = vld [vmem:[%s252 + $0x60] sm:$0xff]
      %v391 = vld [vmem:[%s252 + $0x68] sm:$0xff]
      %v392 = vld [vmem:[%s252 + $0x70] sm:$0xff]
      %v393 = vld [vmem:[%s252 + $0x78] sm:$0xff]
      %v394 = vld [vmem:[%s252 + $0x80] sm:$0xff]
      %v395 = vld [vmem:[%s252 + $0x88] sm:$0xff]
      %v396 = vld [vmem:[%s252 + $0x90] sm:$0xff]
      %v397 = vld [vmem:[%s252 + $0x98] sm:$0xff]
      %v398 = vld [vmem:[%s252 + $0xa0] sm:$0xff]
      %v399 = vld [vmem:[%s252 + $0xa8] sm:$0xff]
      %v400 = vld [vmem:[%s252 + $0xb0] sm:$0xff]
      %v401 = vld [vmem:[%s252 + $0xb8] sm:$0xff]
      %v402 = vld [vmem:[%s252 + $0xc0] sm:$0xff]
      %v403 = vld [vmem:[%s252 + $0xc8] sm:$0xff]
      %v404 = vld [vmem:[%s252 + $0xd0] sm:$0xff]
      %v405 = vld [vmem:[%s252 + $0xd8] sm:$0xff]
      %v406 = vld [vmem:[%s252 + $0xe0] sm:$0xff]
      %v407 = vld [vmem:[%s252 + $0xe8] sm:$0xff]
      %v408 = vld [vmem:[%s252 + $0xf0] sm:$0xff]
      %v409 = vld [vmem:[%s252 + $0xf8] sm:$0xff]
      %v410 = vld [vmem:[%s252 + $0x100] sm:$0xff]
      %v411 = vld [vmem:[%s252 + $0x108] sm:$0xff]
      %v412 = vld [vmem:[%s252 + $0x110] sm:$0xff]
      %v413 = vld [vmem:[%s252 + $0x118] sm:$0xff]
      %v414 = vld [vmem:[%s252 + $0x120] sm:$0xff]
      %v415 = vld [vmem:[%s252 + $0x128] sm:$0xff]
      %v416 = vld [vmem:[%s252 + $0x130] sm:$0xff]
      %v417 = vld [vmem:[%s252 + $0x138] sm:$0xff]
      %v418 = vld [vmem:[%s252 + $0x140] sm:$0xff]
      %v419 = vld [vmem:[%s252 + $0x148] sm:$0xff]
      %v420 = vld [vmem:[%s252 + $0x150] sm:$0xff]
      %v421 = vld [vmem:[%s252 + $0x158] sm:$0xff]
      %v422 = vld [vmem:[%s252 + $0x160] sm:$0xff]
      %v423 = vld [vmem:[%s252 + $0x168] sm:$0xff]
      %v424 = vld [vmem:[%s252 + $0x170] sm:$0xff]
      %v425 = vld [vmem:[%s252 + $0x178] sm:$0xff]
      %v426 = vld [vmem:[%s252 + $0x180] sm:$0xff]
      %v427 = vld [vmem:[%s252 + $0x188] sm:$0xff]
      %v428 = vld [vmem:[%s252 + $0x190] sm:$0xff]
      %v429 = vld [vmem:[%s252 + $0x198] sm:$0xff]
      %v430 = vld [vmem:[%s252 + $0x1a0] sm:$0xff]
      %v431 = vld [vmem:[%s252 + $0x1a8] sm:$0xff]
      %v432 = vld [vmem:[%s252 + $0x1b0] sm:$0xff]
      %v433 = vld [vmem:[%s252 + $0x1b8] sm:$0xff]
      %v434 = vld [vmem:[%s252 + $0x1c0] sm:$0xff]
      %v435 = vld [vmem:[%s252 + $0x1c8] sm:$0xff]
      %v436 = vld [vmem:[%s252 + $0x1d0] sm:$0xff]
      %v437 = vld [vmem:[%s252 + $0x1d8] sm:$0xff]
      %v438 = vld [vmem:[%s252 + $0x1e0] sm:$0xff]
      %v439 = vld [vmem:[%s252 + $0x1e8] sm:$0xff]
      %v440 = vld [vmem:[%s252 + $0x1f0] sm:$0xff]
      %v441 = vld [vmem:[%s252 + $0x1f8] sm:$0xff]
      %v442 = vld [vmem:[%s252 + $0x200] sm:$0xff]
      %v443 = vld [vmem:[%s252 + $0x208] sm:$0xff]
      %v444 = vld [vmem:[%s252 + $0x210] sm:$0xff]
      %v445 = vld [vmem:[%s252 + $0x218] sm:$0xff]
      %v446 = vld [vmem:[%s252 + $0x220] sm:$0xff]
      %v447 = vld [vmem:[%s252 + $0x228] sm:$0xff]
      %v448 = vld [vmem:[%s252 + $0x230] sm:$0xff]
      %v449 = vld [vmem:[%s252 + $0x238] sm:$0xff]
      %v450 = vld [vmem:[%s252 + $0x240] sm:$0xff]
      %v451 = vld [vmem:[%s252 + $0x248] sm:$0xff]
      %v452 = vld [vmem:[%s252 + $0x250] sm:$0xff]
      %v453 = vld [vmem:[%s252 + $0x258] sm:$0xff]
      %v454 = vld [vmem:[%s252 + $0x260] sm:$0xff]
      %v455 = vld [vmem:[%s252 + $0x268] sm:$0xff]
      %v456 = vld [vmem:[%s252 + $0x270] sm:$0xff]
      %v457 = vld [vmem:[%s252 + $0x278] sm:$0xff]
      %v458 = vld [vmem:[%s252 + $0x280] sm:$0xff]
      %v459 = vld [vmem:[%s252 + $0x288] sm:$0xff]
      %v460 = vld [vmem:[%s252 + $0x290] sm:$0xff]
      %v461 = vld [vmem:[%s252 + $0x298] sm:$0xff]
      %v462 = vld [vmem:[%s252 + $0x2a0] sm:$0xff]
      %v463 = vld [vmem:[%s252 + $0x2a8] sm:$0xff]
      %v464 = vld [vmem:[%s252 + $0x2b0] sm:$0xff]
      %v465 = vld [vmem:[%s252 + $0x2b8] sm:$0xff]
      %v466 = vld [vmem:[%s252 + $0x2c0] sm:$0xff]
      %v467 = vld [vmem:[%s252 + $0x2c8] sm:$0xff]
      %v468 = vld [vmem:[%s252 + $0x2d0] sm:$0xff]
      %v469 = vld [vmem:[%s252 + $0x2d8] sm:$0xff]
      %v470 = vld [vmem:[%s252 + $0x2e0] sm:$0xff]
      %v471 = vld [vmem:[%s252 + $0x2e8] sm:$0xff]
      %v472 = vld [vmem:[%s252 + $0x2f0] sm:$0xff]
      %v473 = vld [vmem:[%s252 + $0x2f8] sm:$0xff]
      %474 = vmatprep.subr.mxu0 %v379
      %475 = vmatpush1.msra.mxu0 %v378
      %476 = vmatprep.subr.mxu0 %v381
      %477 = vmatpush1.msra.mxu0 %v380
      %478 = vmatprep.subr.mxu0 %v383
      %479 = vmatpush1.msra.mxu0 %v382
      %480 = vmatprep.subr.mxu0 %v385
      %481 = vmatpush1.msra.mxu0 %v384
      %482 = vmatprep.subr.mxu0 %v387
      %483 = vmatpush1.msra.mxu0 %v386
      %484 = vmatprep.subr.mxu0 %v389
      %485 = vmatpush1.msra.mxu0 %v388
      %486 = vmatprep.subr.mxu0 %v391
      %487 = vmatpush1.msra.mxu0 %v390
      %488 = vmatprep.subr.mxu0 %v393
      %489 = vmatpush1.msra.mxu0 %v392
      %490 = vmatprep.subr.mxu0 %v395
      %491 = vmatpush1.msra.mxu0 %v394
      %492 = vmatprep.subr.mxu0 %v397
      %493 = vmatpush1.msra.mxu0 %v396
      %494 = vmatprep.subr.mxu0 %v399
      %495 = vmatpush1.msra.mxu0 %v398
      %496 = vmatprep.subr.mxu0 %v401
      %497 = vmatpush1.msra.mxu0 %v400
      %498 = vmatprep.subr.mxu0 %v403
      %499 = vmatpush1.msra.mxu0 %v402
      %500 = vmatprep.subr.mxu0 %v405
      %501 = vmatpush1.msra.mxu0 %v404
      %502 = vmatprep.subr.mxu0 %v407
      %503 = vmatpush1.msra.mxu0 %v406
      %504 = vmatprep.subr.mxu0 %v409
      %505 = vmatpush1.msra.mxu0 %v408
      %506 = vmatprep.subr.mxu0 %v411
      %507 = vmatpush1.msra.mxu0 %v410
      %508 = vmatprep.subr.mxu0 %v413
      %509 = vmatpush1.msra.mxu0 %v412
      %510 = vmatprep.subr.mxu0 %v415
      %511 = vmatpush1.msra.mxu0 %v414
      %512 = vmatprep.subr.mxu0 %v417
      %513 = vmatpush1.msra.mxu0 %v416
      %514 = vmatprep.subr.mxu0 %v419
      %515 = vmatpush1.msra.mxu0 %v418
      %516 = vmatprep.subr.mxu0 %v421
      %517 = vmatpush1.msra.mxu0 %v420
      %518 = vmatprep.subr.mxu0 %v423
      %519 = vmatpush1.msra.mxu0 %v422
      %520 = vmatprep.subr.mxu0 %v425
      %521 = vmatpush1.msra.mxu0 %v424
      %522 = vmatprep.subr.mxu0 %v427
      %523 = vmatpush1.msra.mxu0 %v426
      %524 = vmatprep.subr.mxu0 %v429
      %525 = vmatpush1.msra.mxu0 %v428
      %526 = vmatprep.subr.mxu0 %v431
      %527 = vmatpush1.msra.mxu0 %v430
      %528 = vmatprep.subr.mxu0 %v433
      %529 = vmatpush1.msra.mxu0 %v432
      %530 = vmatprep.subr.mxu0 %v435
      %531 = vmatpush1.msra.mxu0 %v434
      %532 = vmatprep.subr.mxu0 %v437
      %533 = vmatpush1.msra.mxu0 %v436
      %534 = vmatprep.subr.mxu0 %v439
      %535 = vmatpush1.msra.mxu0 %v438
      %536 = vmatprep.subr.mxu0 %v441
      %537 = vmatpush1.msra.mxu0 %v440
      %538 = vmatprep.mubr.f32.mxu0 %v283
      %539 = vmatmul.mubr.f32.gmra.mrb[0].mxu0 %v282
      %v540 = vpop.f32.mrb[0].mxu0
      %v541 = vadd.f32 0.0, %v540
      %v542 = vpop.f32.mrb[0].mxu0
      %v543 = vadd.f32 0.0, %v542
      %544 = vmatprep.mubr.f32.mxu0 %v286
      %545 = vmatmul.mubr.f32.gmra.mrb[0].mxu0 %v285
      %v546 = vpop.f32.mrb[0].mxu0
      %v547 = vadd.f32 0.0, %v546
      %v548 = vpop.f32.mrb[0].mxu0
      %v549 = vadd.f32 0.0, %v548
      %550 = vmatprep.mubr.f32.mxu0 %v289
      %551 = vmatmul.mubr.f32.gmra.mrb[0].mxu0 %v288
      %v552 = vpop.f32.mrb[0].mxu0
      %v553 = vadd.f32 0.0, %v552
      %v554 = vpop.f32.mrb[0].mxu0
      %v555 = vadd.f32 0.0, %v554
      %556 = vmatprep.mubr.f32.mxu0 %v292
      %557 = vmatmul.mubr.f32.gmra.mrb[0].mxu0 %v291
      %v558 = vpop.f32.mrb[0].mxu0
      %v559 = vadd.f32 0.0, %v558
      %v560 = vpop.f32.mrb[0].mxu0
      %v561 = vadd.f32 0.0, %v560
      %562 = vmatprep.mubr.f32.mxu0 %v295
      %563 = vmatmul.mubr.f32.gmra.mrb[0].mxu0 %v294
      %v564 = vpop.f32.mrb[0].mxu0
      %v565 = vadd.f32 0.0, %v564
      %v566 = vpop.f32.mrb[0].mxu0
      %v567 = vadd.f32 0.0, %v566
      %568 = vmatprep.mubr.f32.mxu0 %v298
      %569 = vmatmul.mubr.f32.gmra.mrb[0].mxu0 %v297
      %v570 = vpop.f32.mrb[0].mxu0
      %v571 = vadd.f32 0.0, %v570
      %v572 = vpop.f32.mrb[0].mxu0
      %v573 = vadd.f32 0.0, %v572
      %574 = vmatprep.mubr.f32.mxu0 %v301
      %575 = vmatmul.mubr.f32.gmra.mrb[0].mxu0 %v300
      %v576 = vpop.f32.mrb[0].mxu0
      %v577 = vadd.f32 0.0, %v576
      %v578 = vpop.f32.mrb[0].mxu0
      %v579 = vadd.f32 0.0, %v578
      %580 = vmatprep.mubr.f32.mxu0 %v304
      %581 = vmatmul.mubr.f32.gmra.mrb[0].mxu0 %v303
      %v582 = vpop.f32.mrb[0].mxu0
      %v583 = vadd.f32 0.0, %v582
      %v584 = vpop.f32.mrb[0].mxu0
      %v585 = vadd.f32 0.0, %v584
      %586 = vmatprep.mubr.f32.mxu0 %v307
      %587 = vmatmul.mubr.f32.gmra.mrb[0].mxu0 %v306
      %v588 = vpop.f32.mrb[0].mxu0
      %v589 = vadd.f32 0.0, %v588
      %v590 = vpop.f32.mrb[0].mxu0
      %v591 = vadd.f32 0.0, %v590
      %592 = vmatprep.mubr.f32.mxu0 %v310
      %593 = vmatmul.mubr.f32.gmra.mrb[0].mxu0 %v309
      %v594 = vpop.f32.mrb[0].mxu0
      %v595 = vadd.f32 0.0, %v594
      %v596 = vpop.f32.mrb[0].mxu0
      %v597 = vadd.f32 0.0, %v596
      %598 = vmatprep.mubr.f32.mxu0 %v313
      %599 = vmatmul.mubr.f32.gmra.mrb[0].mxu0 %v312
      %v600 = vpop.f32.mrb[0].mxu0
      %v601 = vadd.f32 0.0, %v600
      %v602 = vpop.f32.mrb[0].mxu0
      %v603 = vadd.f32 0.0, %v602
      %604 = vmatprep.mubr.f32.mxu0 %v316
      %605 = vmatmul.mubr.f32.gmra.mrb[0].mxu0 %v315
      %v606 = vpop.f32.mrb[0].mxu0
      %v607 = vadd.f32 0.0, %v606
      %v608 = vpop.f32.mrb[0].mxu0
      %v609 = vadd.f32 0.0, %v608
      %610 = vmatprep.mubr.f32.mxu0 %v319
      %611 = vmatmul.mubr.f32.gmra.mrb[0].mxu0 %v318
      %v612 = vpop.f32.mrb[0].mxu0
      %v613 = vadd.f32 0.0, %v612
      %v614 = vpop.f32.mrb[0].mxu0
      %v615 = vadd.f32 0.0, %v614
      %616 = vmatprep.mubr.f32.mxu0 %v322
      %617 = vmatmul.mubr.f32.gmra.mrb[0].mxu0 %v321
      %v618 = vpop.f32.mrb[0].mxu0
      %v619 = vadd.f32 0.0, %v618
      %v620 = vpop.f32.mrb[0].mxu0
      %v621 = vadd.f32 0.0, %v620
      %622 = vmatprep.mubr.f32.mxu0 %v325
      %623 = vmatmul.mubr.f32.gmra.mrb[0].mxu0 %v324
      %v624 = vpop.f32.mrb[0].mxu0
      %v625 = vadd.f32 0.0, %v624
      %v626 = vpop.f32.mrb[0].mxu0
      %v627 = vadd.f32 0.0, %v626
      %628 = vmatprep.mubr.f32.mxu0 %v328
      %629 = vmatmul.mubr.f32.gmra.mrb[0].mxu0 %v327
      %v630 = vpop.f32.mrb[0].mxu0
      %v631 = vadd.f32 0.0, %v630
      %v632 = vpop.f32.mrb[0].mxu0
      %v633 = vadd.f32 0.0, %v632
      %634 = vmatprep.mubr.f32.mxu0 %v331
      %635 = vmatmul.mubr.f32.gmra.mrb[0].mxu0 %v330
      %v636 = vpop.f32.mrb[0].mxu0
      %v637 = vadd.f32 0.0, %v636
      %v638 = vpop.f32.mrb[0].mxu0
      %v639 = vadd.f32 0.0, %v638
      %640 = vmatprep.mubr.f32.mxu0 %v334
      %641 = vmatmul.mubr.f32.gmra.mrb[0].mxu0 %v333
      %v642 = vpop.f32.mrb[0].mxu0
      %v643 = vadd.f32 0.0, %v642
      %v644 = vpop.f32.mrb[0].mxu0
      %v645 = vadd.f32 0.0, %v644
      %646 = vmatprep.mubr.f32.mxu0 %v337
      %647 = vmatmul.mubr.f32.gmra.mrb[0].mxu0 %v336
      %v648 = vpop.f32.mrb[0].mxu0
      %v649 = vadd.f32 0.0, %v648
      %v650 = vpop.f32.mrb[0].mxu0
      %v651 = vadd.f32 0.0, %v650
      %652 = vmatprep.mubr.f32.mxu0 %v340
      %653 = vmatmul.mubr.f32.gmra.mrb[0].mxu0 %v339
      %v654 = vpop.f32.mrb[0].mxu0
      %v655 = vadd.f32 0.0, %v654
      %v656 = vpop.f32.mrb[0].mxu0
      %v657 = vadd.f32 0.0, %v656
      %658 = vmatprep.mubr.f32.mxu0 %v343
      %659 = vmatmul.mubr.f32.gmra.mrb[0].mxu0 %v342
      %v660 = vpop.f32.mrb[0].mxu0
      %v661 = vadd.f32 0.0, %v660
      %v662 = vpop.f32.mrb[0].mxu0
      %v663 = vadd.f32 0.0, %v662
      %664 = vmatprep.mubr.f32.mxu0 %v346
      %665 = vmatmul.mubr.f32.gmra.mrb[0].mxu0 %v345
      %v666 = vpop.f32.mrb[0].mxu0
      %v667 = vadd.f32 0.0, %v666
      %v668 = vpop.f32.mrb[0].mxu0
      %v669 = vadd.f32 0.0, %v668
      %670 = vmatprep.mubr.f32.mxu0 %v349
      %671 = vmatmul.mubr.f32.gmra.mrb[0].mxu0 %v348
      %v672 = vpop.f32.mrb[0].mxu0
      %v673 = vadd.f32 0.0, %v672
      %v674 = vpop.f32.mrb[0].mxu0
      %v675 = vadd.f32 0.0, %v674
      %676 = vmatprep.mubr.f32.mxu0 %v352
      %677 = vmatmul.mubr.f32.gmra.mrb[0].mxu0 %v351
      %v678 = vpop.f32.mrb[0].mxu0
      %v679 = vadd.f32 0.0, %v678
      %v680 = vpop.f32.mrb[0].mxu0
      %v681 = vadd.f32 0.0, %v680
      %682 = vmatprep.mubr.f32.mxu0 %v355
      %683 = vmatmul.mubr.f32.gmra.mrb[0].mxu0 %v354
      %v684 = vpop.f32.mrb[0].mxu0
      %v685 = vadd.f32 0.0, %v684
      %v686 = vpop.f32.mrb[0].mxu0
      %v687 = vadd.f32 0.0, %v686
      %688 = vmatprep.mubr.f32.mxu0 %v358
      %689 = vmatmul.mubr.f32.gmra.mrb[0].mxu0 %v357
      %v690 = vpop.f32.mrb[0].mxu0
      %v691 = vadd.f32 0.0, %v690
      %v692 = vpop.f32.mrb[0].mxu0
      %v693 = vadd.f32 0.0, %v692
      %694 = vmatprep.mubr.f32.mxu0 %v361
      %695 = vmatmul.mubr.f32.gmra.mrb[0].mxu0 %v360
      %v696 = vpop.f32.mrb[0].mxu0
      %v697 = vadd.f32 0.0, %v696
      %v698 = vpop.f32.mrb[0].mxu0
      %v699 = vadd.f32 0.0, %v698
      %700 = vmatprep.mubr.f32.mxu0 %v364
      %701 = vmatmul.mubr.f32.gmra.mrb[0].mxu0 %v363
      %v702 = vpop.f32.mrb[0].mxu0
      %v703 = vadd.f32 0.0, %v702
      %v704 = vpop.f32.mrb[0].mxu0
      %v705 = vadd.f32 0.0, %v704
      %706 = vmatprep.mubr.f32.mxu0 %v367
      %707 = vmatmul.mubr.f32.gmra.mrb[0].mxu0 %v366
      %v708 = vpop.f32.mrb[0].mxu0
      %v709 = vadd.f32 0.0, %v708
      %v710 = vpop.f32.mrb[0].mxu0
      %v711 = vadd.f32 0.0, %v710
      %712 = vmatprep.mubr.f32.mxu0 %v370
      %713 = vmatmul.mubr.f32.gmra.mrb[0].mxu0 %v369
      %v714 = vpop.f32.mrb[0].mxu0
      %v715 = vadd.f32 0.0, %v714
      %v716 = vpop.f32.mrb[0].mxu0
      %v717 = vadd.f32 0.0, %v716
      %718 = vmatprep.mubr.f32.mxu0 %v373
      %719 = vmatmul.mubr.f32.gmra.mrb[0].mxu0 %v372
      %v720 = vpop.f32.mrb[0].mxu0
      %v721 = vadd.f32 0.0, %v720
      %v722 = vpop.f32.mrb[0].mxu0
      %v723 = vadd.f32 0.0, %v722
      %724 = vmatprep.mubr.f32.mxu0 %v376
      %725 = vmatmul.mubr.f32.gmra.mrb[0].mxu0 %v375
      %v726 = vpop.f32.mrb[0].mxu0
      %v727 = vadd.f32 0.0, %v726
      %v728 = vpop.f32.mrb[0].mxu0
      %v729 = vadd.f32 0.0, %v728
      %730 = vdwg.mxu0
      %731 = vmatprep.subr.mxu0 %v443
      %732 = vmatpush1.msra.mxu0 %v442
      %733 = vmatprep.subr.mxu0 %v445
      %734 = vmatpush1.msra.mxu0 %v444
      %735 = vmatprep.subr.mxu0 %v447
      %736 = vmatpush1.msra.mxu0 %v446
      %737 = vmatprep.subr.mxu0 %v449
      %738 = vmatpush1.msra.mxu0 %v448
      %739 = vmatprep.subr.mxu0 %v451
      %740 = vmatpush1.msra.mxu0 %v450
      %741 = vmatprep.subr.mxu0 %v453
      %742 = vmatpush1.msra.mxu0 %v452
      %743 = vmatprep.subr.mxu0 %v455
      %744 = vmatpush1.msra.mxu0 %v454
      %745 = vmatprep.subr.mxu0 %v457
      %746 = vmatpush1.msra.mxu0 %v456
      %747 = vmatprep.subr.mxu0 %v459
      %748 = vmatpush1.msra.mxu0 %v458
      %749 = vmatprep.subr.mxu0 %v461
      %750 = vmatpush1.msra.mxu0 %v460
      %751 = vmatprep.subr.mxu0 %v463
      %752 = vmatpush1.msra.mxu0 %v462
      %753 = vmatprep.subr.mxu0 %v465
      %754 = vmatpush1.msra.mxu0 %v464
      %755 = vmatprep.subr.mxu0 %v467
      %756 = vmatpush1.msra.mxu0 %v466
      %757 = vmatprep.subr.mxu0 %v469
      %758 = vmatpush1.msra.mxu0 %v468
      %759 = vmatprep.subr.mxu0 %v471
      %760 = vmatpush1.msra.mxu0 %v470
      %761 = vmatprep.subr.mxu0 %v473
      %762 = vmatpush1.msra.mxu0 %v472
      %763 = vmatprep.subr.mxu0 0.0
      %764 = vmatpush1.msra.mxu0 0.0
      %765 = vmatprep.subr.mxu0 0.0
      %766 = vmatpush1.msra.mxu0 0.0
      %767 = vmatprep.subr.mxu0 0.0
      %768 = vmatpush1.msra.mxu0 0.0
      %769 = vmatprep.subr.mxu0 0.0
      %770 = vmatpush1.msra.mxu0 0.0
      %771 = vmatprep.subr.mxu0 0.0
      %772 = vmatpush1.msra.mxu0 0.0
      %773 = vmatprep.subr.mxu0 0.0
      %774 = vmatpush1.msra.mxu0 0.0
      %775 = vmatprep.subr.mxu0 0.0
      %776 = vmatpush1.msra.mxu0 0.0
      %777 = vmatprep.subr.mxu0 0.0
      %778 = vmatpush1.msra.mxu0 0.0
      %779 = vmatprep.subr.mxu0 0.0
      %780 = vmatpush1.msra.mxu0 0.0
      %781 = vmatprep.subr.mxu0 0.0
      %782 = vmatpush1.msra.mxu0 0.0
      %783 = vmatprep.subr.mxu0 0.0
      %784 = vmatpush1.msra.mxu0 0.0
      %785 = vmatprep.subr.mxu0 0.0
      %786 = vmatpush1.msra.mxu0 0.0
      %787 = vmatprep.subr.mxu0 0.0
      %788 = vmatpush1.msra.mxu0 0.0
      %789 = vmatprep.subr.mxu0 0.0
      %790 = vmatpush1.msra.mxu0 0.0
      %791 = vmatprep.subr.mxu0 0.0
      %792 = vmatpush1.msra.mxu0 0.0
      %793 = vmatprep.subr.mxu0 0.0
      %794 = vmatpush1.msra.mxu0 0.0
      %795 = vmatprep.mubr.f32.mxu0 0.0
      %796 = vmatmul.mubr.f32.gmra.mrb[0].mxu0 %v284
      %v797 = vpop.f32.mrb[0].mxu0
      %v798 = vadd.f32 %v541, %v797
      %v799 = vpop.f32.mrb[0].mxu0
      %v800 = vadd.f32 %v543, %v799
      %801 = vmatprep.mubr.f32.mxu0 0.0
      %802 = vmatmul.mubr.f32.gmra.mrb[0].mxu0 %v287
      %v803 = vpop.f32.mrb[0].mxu0
      %v804 = vadd.f32 %v547, %v803
      %v805 = vpop.f32.mrb[0].mxu0
      %v806 = vadd.f32 %v549, %v805
      %807 = vmatprep.mubr.f32.mxu0 0.0
      %808 = vmatmul.mubr.f32.gmra.mrb[0].mxu0 %v290
      %v809 = vpop.f32.mrb[0].mxu0
      %v810 = vadd.f32 %v553, %v809
      %v811 = vpop.f32.mrb[0].mxu0
      %v812 = vadd.f32 %v555, %v811
      %813 = vmatprep.mubr.f32.mxu0 0.0
      %814 = vmatmul.mubr.f32.gmra.mrb[0].mxu0 %v293
      %v815 = vpop.f32.mrb[0].mxu0
      %v816 = vadd.f32 %v559, %v815
      %v817 = vpop.f32.mrb[0].mxu0
      %v818 = vadd.f32 %v561, %v817
      %819 = vmatprep.mubr.f32.mxu0 0.0
      %820 = vmatmul.mubr.f32.gmra.mrb[0].mxu0 %v296
      %v821 = vpop.f32.mrb[0].mxu0
      %v822 = vadd.f32 %v565, %v821
      %v823 = vpop.f32.mrb[0].mxu0
      %v824 = vadd.f32 %v567, %v823
      %825 = vmatprep.mubr.f32.mxu0 0.0
      %826 = vmatmul.mubr.f32.gmra.mrb[0].mxu0 %v299
      %v827 = vpop.f32.mrb[0].mxu0
      %v828 = vadd.f32 %v571, %v827
      %v829 = vpop.f32.mrb[0].mxu0
      %v830 = vadd.f32 %v573, %v829
      %831 = vmatprep.mubr.f32.mxu0 0.0
      %832 = vmatmul.mubr.f32.gmra.mrb[0].mxu0 %v302
      %v833 = vpop.f32.mrb[0].mxu0
      %v834 = vadd.f32 %v577, %v833
      %v835 = vpop.f32.mrb[0].mxu0
      %v836 = vadd.f32 %v579, %v835
      %837 = vmatprep.mubr.f32.mxu0 0.0
      %838 = vmatmul.mubr.f32.gmra.mrb[0].mxu0 %v305
      %v839 = vpop.f32.mrb[0].mxu0
      %v840 = vadd.f32 %v583, %v839
      %v841 = vpop.f32.mrb[0].mxu0
      %v842 = vadd.f32 %v585, %v841
      %843 = vmatprep.mubr.f32.mxu0 0.0
      %844 = vmatmul.mubr.f32.gmra.mrb[0].mxu0 %v308
      %v845 = vpop.f32.mrb[0].mxu0
      %v846 = vadd.f32 %v589, %v845
      %v847 = vpop.f32.mrb[0].mxu0
      %v848 = vadd.f32 %v591, %v847
      %849 = vmatprep.mubr.f32.mxu0 0.0
      %850 = vmatmul.mubr.f32.gmra.mrb[0].mxu0 %v311
      %v851 = vpop.f32.mrb[0].mxu0
      %v852 = vadd.f32 %v595, %v851
      %v853 = vpop.f32.mrb[0].mxu0
      %v854 = vadd.f32 %v597, %v853
      %855 = vmatprep.mubr.f32.mxu0 0.0
      %856 = vmatmul.mubr.f32.gmra.mrb[0].mxu0 %v314
      %v857 = vpop.f32.mrb[0].mxu0
      %v858 = vadd.f32 %v601, %v857
      %v859 = vpop.f32.mrb[0].mxu0
      %v860 = vadd.f32 %v603, %v859
      %861 = vmatprep.mubr.f32.mxu0 0.0
      %862 = vmatmul.mubr.f32.gmra.mrb[0].mxu0 %v317
      %v863 = vpop.f32.mrb[0].mxu0
      %v864 = vadd.f32 %v607, %v863
      %v865 = vpop.f32.mrb[0].mxu0
      %v866 = vadd.f32 %v609, %v865
      %867 = vmatprep.mubr.f32.mxu0 0.0
      %868 = vmatmul.mubr.f32.gmra.mrb[0].mxu0 %v320
      %v869 = vpop.f32.mrb[0].mxu0
      %v870 = vadd.f32 %v613, %v869
      %v871 = vpop.f32.mrb[0].mxu0
      %v872 = vadd.f32 %v615, %v871
      %873 = vmatprep.mubr.f32.mxu0 0.0
      %874 = vmatmul.mubr.f32.gmra.mrb[0].mxu0 %v323
      %v875 = vpop.f32.mrb[0].mxu0
      %v876 = vadd.f32 %v619, %v875
      %v877 = vpop.f32.mrb[0].mxu0
      %v878 = vadd.f32 %v621, %v877
      %879 = vmatprep.mubr.f32.mxu0 0.0
      %880 = vmatmul.mubr.f32.gmra.mrb[0].mxu0 %v326
      %v881 = vpop.f32.mrb[0].mxu0
      %v882 = vadd.f32 %v625, %v881
      %v883 = vpop.f32.mrb[0].mxu0
      %v884 = vadd.f32 %v627, %v883
      %885 = vmatprep.mubr.f32.mxu0 0.0
      %886 = vmatmul.mubr.f32.gmra.mrb[0].mxu0 %v329
      %v887 = vpop.f32.mrb[0].mxu0
      %v888 = vadd.f32 %v631, %v887
      %v889 = vpop.f32.mrb[0].mxu0
      %v890 = vadd.f32 %v633, %v889
      %891 = vmatprep.mubr.f32.mxu0 0.0
      %892 = vmatmul.mubr.f32.gmra.mrb[0].mxu0 %v332
      %v893 = vpop.f32.mrb[0].mxu0
      %v894 = vadd.f32 %v637, %v893
      %v895 = vpop.f32.mrb[0].mxu0
      %v896 = vadd.f32 %v639, %v895
      %897 = vmatprep.mubr.f32.mxu0 0.0
      %898 = vmatmul.mubr.f32.gmra.mrb[0].mxu0 %v335
      %v899 = vpop.f32.mrb[0].mxu0
      %v900 = vadd.f32 %v643, %v899
      %v901 = vpop.f32.mrb[0].mxu0
      %v902 = vadd.f32 %v645, %v901
      %903 = vmatprep.mubr.f32.mxu0 0.0
      %904 = vmatmul.mubr.f32.gmra.mrb[0].mxu0 %v338
      %v905 = vpop.f32.mrb[0].mxu0
      %v906 = vadd.f32 %v649, %v905
      %v907 = vpop.f32.mrb[0].mxu0
      %v908 = vadd.f32 %v651, %v907
      %909 = vmatprep.mubr.f32.mxu0 0.0
      %910 = vmatmul.mubr.f32.gmra.mrb[0].mxu0 %v341
      %v911 = vpop.f32.mrb[0].mxu0
      %v912 = vadd.f32 %v655, %v911
      %v913 = vpop.f32.mrb[0].mxu0
      %v914 = vadd.f32 %v657, %v913
      %915 = vmatprep.mubr.f32.mxu0 0.0
      %916 = vmatmul.mubr.f32.gmra.mrb[0].mxu0 %v344
      %v917 = vpop.f32.mrb[0].mxu0
      %v918 = vadd.f32 %v661, %v917
      %v919 = vpop.f32.mrb[0].mxu0
      %v920 = vadd.f32 %v663, %v919
      %921 = vmatprep.mubr.f32.mxu0 0.0
      %922 = vmatmul.mubr.f32.gmra.mrb[0].mxu0 %v347
      %v923 = vpop.f32.mrb[0].mxu0
      %v924 = vadd.f32 %v667, %v923
      %v925 = vpop.f32.mrb[0].mxu0
      %v926 = vadd.f32 %v669, %v925
      %927 = vmatprep.mubr.f32.mxu0 0.0
      %928 = vmatmul.mubr.f32.gmra.mrb[0].mxu0 %v350
      %v929 = vpop.f32.mrb[0].mxu0
      %v930 = vadd.f32 %v673, %v929
      %v931 = vpop.f32.mrb[0].mxu0
      %v932 = vadd.f32 %v675, %v931
      %933 = vmatprep.mubr.f32.mxu0 0.0
      %934 = vmatmul.mubr.f32.gmra.mrb[0].mxu0 %v353
      %v935 = vpop.f32.mrb[0].mxu0
      %v936 = vadd.f32 %v679, %v935
      %v937 = vpop.f32.mrb[0].mxu0
      %v938 = vadd.f32 %v681, %v937
      %939 = vmatprep.mubr.f32.mxu0 0.0
      %940 = vmatmul.mubr.f32.gmra.mrb[0].mxu0 %v356
      %v941 = vpop.f32.mrb[0].mxu0
      %v942 = vadd.f32 %v685, %v941
      %v943 = vpop.f32.mrb[0].mxu0
      %v944 = vadd.f32 %v687, %v943
      %945 = vmatprep.mubr.f32.mxu0 0.0
      %946 = vmatmul.mubr.f32.gmra.mrb[0].mxu0 %v359
      %v947 = vpop.f32.mrb[0].mxu0
      %v948 = vadd.f32 %v691, %v947
      %v949 = vpop.f32.mrb[0].mxu0
      %v950 = vadd.f32 %v693, %v949
      %951 = vmatprep.mubr.f32.mxu0 0.0
      %952 = vmatmul.mubr.f32.gmra.mrb[0].mxu0 %v362
      %v953 = vpop.f32.mrb[0].mxu0
      %v954 = vadd.f32 %v697, %v953
      %v955 = vpop.f32.mrb[0].mxu0
      %v956 = vadd.f32 %v699, %v955
      %957 = vmatprep.mubr.f32.mxu0 0.0
      %958 = vmatmul.mubr.f32.gmra.mrb[0].mxu0 %v365
      %v959 = vpop.f32.mrb[0].mxu0
      %v960 = vadd.f32 %v703, %v959
      %v961 = vpop.f32.mrb[0].mxu0
      %v962 = vadd.f32 %v705, %v961
      %963 = vmatprep.mubr.f32.mxu0 0.0
      %964 = vmatmul.mubr.f32.gmra.mrb[0].mxu0 %v368
      %v965 = vpop.f32.mrb[0].mxu0
      %v966 = vadd.f32 %v709, %v965
      %v967 = vpop.f32.mrb[0].mxu0
      %v968 = vadd.f32 %v711, %v967
      %969 = vmatprep.mubr.f32.mxu0 0.0
      %970 = vmatmul.mubr.f32.gmra.mrb[0].mxu0 %v371
      %v971 = vpop.f32.mrb[0].mxu0
      %v972 = vadd.f32 %v715, %v971
      %v973 = vpop.f32.mrb[0].mxu0
      %v974 = vadd.f32 %v717, %v973
      %975 = vmatprep.mubr.f32.mxu0 0.0
      %976 = vmatmul.mubr.f32.gmra.mrb[0].mxu0 %v374
      %v977 = vpop.f32.mrb[0].mxu0
      %v978 = vadd.f32 %v721, %v977
      %v979 = vpop.f32.mrb[0].mxu0
      %v980 = vadd.f32 %v723, %v979
      %981 = vmatprep.mubr.f32.mxu0 0.0
      %982 = vmatmul.mubr.f32.gmra.mrb[0].mxu0 %v377
      %v983 = vpop.f32.mrb[0].mxu0
      %v984 = vadd.f32 %v727, %v983
      %v985 = vpop.f32.mrb[0].mxu0
      %v986 = vadd.f32 %v729, %v985
      %987 = vdwg.mxu0
      %988 = vst [vmem:[%s262] sm:$0xff] %v798
      %989 = vst [vmem:[%s262 + $0x8] sm:$0xff] %v800
      %990 = vst [vmem:[%s262 + $0x10] sm:$0xff] %v804
      %991 = vst [vmem:[%s262 + $0x18] sm:$0xff] %v806
      %992 = vst [vmem:[%s262 + $0x20] sm:$0xff] %v810
      %993 = vst [vmem:[%s262 + $0x28] sm:$0xff] %v812
      %994 = vst [vmem:[%s262 + $0x30] sm:$0xff] %v816
      %995 = vst [vmem:[%s262 + $0x38] sm:$0xff] %v818
      %996 = vst [vmem:[%s262 + $0x40] sm:$0xff] %v822
      %997 = vst [vmem:[%s262 + $0x48] sm:$0xff] %v824
      %998 = vst [vmem:[%s262 + $0x50] sm:$0xff] %v828
      %999 = vst [vmem:[%s262 + $0x58] sm:$0xff] %v830
      %1000 = vst [vmem:[%s262 + $0x60] sm:$0xff] %v834
      %1001 = vst [vmem:[%s262 + $0x68] sm:$0xff] %v836
      %1002 = vst [vmem:[%s262 + $0x70] sm:$0xff] %v840
      %1003 = vst [vmem:[%s262 + $0x78] sm:$0xff] %v842
      %1004 = vst [vmem:[%s262 + $0x80] sm:$0xff] %v846
      %1005 = vst [vmem:[%s262 + $0x88] sm:$0xff] %v848
      %1006 = vst [vmem:[%s262 + $0x90] sm:$0xff] %v852
      %1007 = vst [vmem:[%s262 + $0x98] sm:$0xff] %v854
      %1008 = vst [vmem:[%s262 + $0xa0] sm:$0xff] %v858
      %1009 = vst [vmem:[%s262 + $0xa8] sm:$0xff] %v860
      %1010 = vst [vmem:[%s262 + $0xb0] sm:$0xff] %v864
      %1011 = vst [vmem:[%s262 + $0xb8] sm:$0xff] %v866
      %1012 = vst [vmem:[%s262 + $0xc0] sm:$0xff] %v870
      %1013 = vst [vmem:[%s262 + $0xc8] sm:$0xff] %v872
      %1014 = vst [vmem:[%s262 + $0xd0] sm:$0xff] %v876
      %1015 = vst [vmem:[%s262 + $0xd8] sm:$0xff] %v878
      %1016 = vst [vmem:[%s262 + $0xe0] sm:$0xff] %v882
      %1017 = vst [vmem:[%s262 + $0xe8] sm:$0xff] %v884
      %1018 = vst [vmem:[%s262 + $0xf0] sm:$0xff] %v888
      %1019 = vst [vmem:[%s262 + $0xf8] sm:$0xff] %v890
      %1020 = vst [vmem:[%s262 + $0x100] sm:$0xff] %v894
      %1021 = vst [vmem:[%s262 + $0x108] sm:$0xff] %v896
      %1022 = vst [vmem:[%s262 + $0x110] sm:$0xff] %v900
      %1023 = vst [vmem:[%s262 + $0x118] sm:$0xff] %v902
      %1024 = vst [vmem:[%s262 + $0x120] sm:$0xff] %v906
      %1025 = vst [vmem:[%s262 + $0x128] sm:$0xff] %v908
      %1026 = vst [vmem:[%s262 + $0x130] sm:$0xff] %v912
      %1027 = vst [vmem:[%s262 + $0x138] sm:$0xff] %v914
      %1028 = vst [vmem:[%s262 + $0x140] sm:$0xff] %v918
      %1029 = vst [vmem:[%s262 + $0x148] sm:$0xff] %v920
      %1030 = vst [vmem:[%s262 + $0x150] sm:$0xff] %v924
      %1031 = vst [vmem:[%s262 + $0x158] sm:$0xff] %v926
      %1032 = vst [vmem:[%s262 + $0x160] sm:$0xff] %v930
      %1033 = vst [vmem:[%s262 + $0x168] sm:$0xff] %v932
      %1034 = vst [vmem:[%s262 + $0x170] sm:$0xff] %v936
      %1035 = vst [vmem:[%s262 + $0x178] sm:$0xff] %v938
      %1036 = vst [vmem:[%s262 + $0x180] sm:$0xff] %v942
      %1037 = vst [vmem:[%s262 + $0x188] sm:$0xff] %v944
      %1038 = vst [vmem:[%s262 + $0x190] sm:$0xff] %v948
      %1039 = vst [vmem:[%s262 + $0x198] sm:$0xff] %v950
      %1040 = vst [vmem:[%s262 + $0x1a0] sm:$0xff] %v954
      %1041 = vst [vmem:[%s262 + $0x1a8] sm:$0xff] %v956
      %1042 = vst [vmem:[%s262 + $0x1b0] sm:$0xff] %v960
      %1043 = vst [vmem:[%s262 + $0x1b8] sm:$0xff] %v962
      %1044 = vst [vmem:[%s262 + $0x1c0] sm:$0xff] %v966
      %1045 = vst [vmem:[%s262 + $0x1c8] sm:$0xff] %v968
      %1046 = vst [vmem:[%s262 + $0x1d0] sm:$0xff] %v972
      %1047 = vst [vmem:[%s262 + $0x1d8] sm:$0xff] %v974
      %1048 = vst [vmem:[%s262 + $0x1e0] sm:$0xff] %v978
      %1049 = vst [vmem:[%s262 + $0x1e8] sm:$0xff] %v980
      %1050 = vst [vmem:[%s262 + $0x1f0] sm:$0xff] %v984
      %1051 = vst [vmem:[%s262 + $0x1f8] sm:$0xff] %v986
      %v1052 = vadd.f32 %v798, %v800
      %1053 = vadd.xlane.f32.xlu0 %v1052
      %v1054 = vpop.xlane.xlu0 %1053
      %v1055 = vadd.f32 %v804, %v806
      %1056 = vadd.xlane.f32.xlu0 %v1055
      %v1057 = vpop.xlane.xlu0 %1056
      %v1058 = vadd.f32 %v810, %v812
      %1059 = vadd.xlane.f32.xlu0 %v1058
      %v1060 = vpop.xlane.xlu0 %1059
      %v1061 = vadd.f32 %v816, %v818
      %1062 = vadd.xlane.f32.xlu0 %v1061
      %v1063 = vpop.xlane.xlu0 %1062
      %v1064 = vadd.f32 %v822, %v824
      %1065 = vadd.xlane.f32.xlu0 %v1064
      %v1066 = vpop.xlane.xlu0 %1065
      %v1067 = vadd.f32 %v828, %v830
      %1068 = vadd.xlane.f32.xlu0 %v1067
      %v1069 = vpop.xlane.xlu0 %1068
      %v1070 = vadd.f32 %v834, %v836
      %1071 = vadd.xlane.f32.xlu0 %v1070
      %v1072 = vpop.xlane.xlu0 %1071
      %v1073 = vadd.f32 %v840, %v842
      %1074 = vadd.xlane.f32.xlu0 %v1073
      %v1075 = vpop.xlane.xlu0 %1074
      %v1076 = vadd.f32 %v846, %v848
      %1077 = vadd.xlane.f32.xlu0 %v1076
      %v1078 = vpop.xlane.xlu0 %1077
      %v1079 = vadd.f32 %v852, %v854
      %1080 = vadd.xlane.f32.xlu0 %v1079
      %v1081 = vpop.xlane.xlu0 %1080
      %v1082 = vadd.f32 %v858, %v860
      %1083 = vadd.xlane.f32.xlu0 %v1082
      %v1084 = vpop.xlane.xlu0 %1083
      %v1085 = vadd.f32 %v864, %v866
      %1086 = vadd.xlane.f32.xlu0 %v1085
      %v1087 = vpop.xlane.xlu0 %1086
      %v1088 = vadd.f32 %v870, %v872
      %1089 = vadd.xlane.f32.xlu0 %v1088
      %v1090 = vpop.xlane.xlu0 %1089
      %v1091 = vadd.f32 %v876, %v878
      %1092 = vadd.xlane.f32.xlu0 %v1091
      %v1093 = vpop.xlane.xlu0 %1092
      %v1094 = vadd.f32 %v882, %v884
      %1095 = vadd.xlane.f32.xlu0 %v1094
      %v1096 = vpop.xlane.xlu0 %1095
      %v1097 = vadd.f32 %v888, %v890
      %1098 = vadd.xlane.f32.xlu0 %v1097
      %v1099 = vpop.xlane.xlu0 %1098
      %v1100 = vadd.f32 %v894, %v896
      %1101 = vadd.xlane.f32.xlu0 %v1100
      %v1102 = vpop.xlane.xlu0 %1101
      %v1103 = vadd.f32 %v900, %v902
      %1104 = vadd.xlane.f32.xlu0 %v1103
      %v1105 = vpop.xlane.xlu0 %1104
      %v1106 = vadd.f32 %v906, %v908
      %1107 = vadd.xlane.f32.xlu0 %v1106
      %v1108 = vpop.xlane.xlu0 %1107
      %v1109 = vadd.f32 %v912, %v914
      %1110 = vadd.xlane.f32.xlu0 %v1109
      %v1111 = vpop.xlane.xlu0 %1110
      %v1112 = vadd.f32 %v918, %v920
      %1113 = vadd.xlane.f32.xlu0 %v1112
      %v1114 = vpop.xlane.xlu0 %1113
      %v1115 = vadd.f32 %v924, %v926
      %1116 = vadd.xlane.f32.xlu0 %v1115
      %v1117 = vpop.xlane.xlu0 %1116
      %v1118 = vadd.f32 %v930, %v932
      %1119 = vadd.xlane.f32.xlu0 %v1118
      %v1120 = vpop.xlane.xlu0 %1119
      %v1121 = vadd.f32 %v936, %v938
      %1122 = vadd.xlane.f32.xlu0 %v1121
      %v1123 = vpop.xlane.xlu0 %1122
      %v1124 = vadd.f32 %v942, %v944
      %1125 = vadd.xlane.f32.xlu0 %v1124
      %v1126 = vpop.xlane.xlu0 %1125
      %v1127 = vadd.f32 %v948, %v950
      %1128 = vadd.xlane.f32.xlu0 %v1127
      %v1129 = vpop.xlane.xlu0 %1128
      %v1130 = vadd.f32 %v954, %v956
      %1131 = vadd.xlane.f32.xlu0 %v1130
      %v1132 = vpop.xlane.xlu0 %1131
      %v1133 = vadd.f32 %v960, %v962
      %1134 = vadd.xlane.f32.xlu0 %v1133
      %v1135 = vpop.xlane.xlu0 %1134
      %v1136 = vadd.f32 %v966, %v968
      %1137 = vadd.xlane.f32.xlu0 %v1136
      %v1138 = vpop.xlane.xlu0 %1137
      %v1139 = vadd.f32 %v972, %v974
      %1140 = vadd.xlane.f32.xlu0 %v1139
      %v1141 = vpop.xlane.xlu0 %1140
      %v1142 = vadd.f32 %v978, %v980
      %1143 = vadd.xlane.f32.xlu0 %v1142
      %v1144 = vpop.xlane.xlu0 %1143
      %v1145 = vadd.f32 %v984, %v986
      %1146 = vadd.xlane.f32.xlu0 %v1145
      %v1147 = vpop.xlane.xlu0 %1146
      %vm1148 = vcmask 7168
      %1149 = vst.msk [vmem:[%s272] sm:$0xff] %vm1148, %v1054
      %1150 = vst.msk [vmem:[%s272 + $0x8] sm:$0xff] %vm1148, %v1057
      %1151 = vst.msk [vmem:[%s272 + $0x10] sm:$0xff] %vm1148, %v1060
      %1152 = vst.msk [vmem:[%s272 + $0x18] sm:$0xff] %vm1148, %v1063
      %1153 = vst.msk [vmem:[%s272 + $0x20] sm:$0xff] %vm1148, %v1066
      %1154 = vst.msk [vmem:[%s272 + $0x28] sm:$0xff] %vm1148, %v1069
      %1155 = vst.msk [vmem:[%s272 + $0x30] sm:$0xff] %vm1148, %v1072
      %1156 = vst.msk [vmem:[%s272 + $0x38] sm:$0xff] %vm1148, %v1075
      %1157 = vst.msk [vmem:[%s272 + $0x40] sm:$0xff] %vm1148, %v1078
      %1158 = vst.msk [vmem:[%s272 + $0x48] sm:$0xff] %vm1148, %v1081
      %1159 = vst.msk [vmem:[%s272 + $0x50] sm:$0xff] %vm1148, %v1084
      %1160 = vst.msk [vmem:[%s272 + $0x58] sm:$0xff] %vm1148, %v1087
      %1161 = vst.msk [vmem:[%s272 + $0x60] sm:$0xff] %vm1148, %v1090
      %1162 = vst.msk [vmem:[%s272 + $0x68] sm:$0xff] %vm1148, %v1093
      %1163 = vst.msk [vmem:[%s272 + $0x70] sm:$0xff] %vm1148, %v1096
      %1164 = vst.msk [vmem:[%s272 + $0x78] sm:$0xff] %vm1148, %v1099
      %1165 = vst.msk [vmem:[%s272 + $0x80] sm:$0xff] %vm1148, %v1102
      %1166 = vst.msk [vmem:[%s272 + $0x88] sm:$0xff] %vm1148, %v1105
      %1167 = vst.msk [vmem:[%s272 + $0x90] sm:$0xff] %vm1148, %v1108
      %1168 = vst.msk [vmem:[%s272 + $0x98] sm:$0xff] %vm1148, %v1111
      %1169 = vst.msk [vmem:[%s272 + $0xa0] sm:$0xff] %vm1148, %v1114
      %1170 = vst.msk [vmem:[%s272 + $0xa8] sm:$0xff] %vm1148, %v1117
      %1171 = vst.msk [vmem:[%s272 + $0xb0] sm:$0xff] %vm1148, %v1120
      %1172 = vst.msk [vmem:[%s272 + $0xb8] sm:$0xff] %vm1148, %v1123
      %1173 = vst.msk [vmem:[%s272 + $0xc0] sm:$0xff] %vm1148, %v1126
      %1174 = vst.msk [vmem:[%s272 + $0xc8] sm:$0xff] %vm1148, %v1129
      %1175 = vst.msk [vmem:[%s272 + $0xd0] sm:$0xff] %vm1148, %v1132
      %1176 = vst.msk [vmem:[%s272 + $0xd8] sm:$0xff] %vm1148, %v1135
      %1177 = vst.msk [vmem:[%s272 + $0xe0] sm:$0xff] %vm1148, %v1138
      %1178 = vst.msk [vmem:[%s272 + $0xe8] sm:$0xff] %vm1148, %v1141
      %1179 = vst.msk [vmem:[%s272 + $0xf0] sm:$0xff] %vm1148, %v1144
      %1180 = vst.msk [vmem:[%s272 + $0xf8] sm:$0xff] %vm1148, %v1147
      %v1181 = vmul.f32 %v798, %v798
      %v1182 = vmul.f32 %v800, %v800
      %v1183 = vmul.f32 %v804, %v804
      %v1184 = vmul.f32 %v806, %v806
      %v1185 = vmul.f32 %v810, %v810
      %v1186 = vmul.f32 %v812, %v812
      %v1187 = vmul.f32 %v816, %v816
      %v1188 = vmul.f32 %v818, %v818
      %v1189 = vmul.f32 %v822, %v822
      %v1190 = vmul.f32 %v824, %v824
      %v1191 = vmul.f32 %v828, %v828
      %v1192 = vmul.f32 %v830, %v830
      %v1193 = vmul.f32 %v834, %v834
      %v1194 = vmul.f32 %v836, %v836
      %v1195 = vmul.f32 %v840, %v840
      %v1196 = vmul.f32 %v842, %v842
      %v1197 = vmul.f32 %v846, %v846
      %v1198 = vmul.f32 %v848, %v848
      %v1199 = vmul.f32 %v852, %v852
      %v1200 = vmul.f32 %v854, %v854
      %v1201 = vmul.f32 %v858, %v858
      %v1202 = vmul.f32 %v860, %v860
      %v1203 = vmul.f32 %v864, %v864
      %v1204 = vmul.f32 %v866, %v866
      %v1205 = vmul.f32 %v870, %v870
      %v1206 = vmul.f32 %v872, %v872
      %v1207 = vmul.f32 %v876, %v876
      %v1208 = vmul.f32 %v878, %v878
      %v1209 = vmul.f32 %v882, %v882
      %v1210 = vmul.f32 %v884, %v884
      %v1211 = vmul.f32 %v888, %v888
      %v1212 = vmul.f32 %v890, %v890
      %v1213 = vmul.f32 %v894, %v894
      %v1214 = vmul.f32 %v896, %v896
      %v1215 = vmul.f32 %v900, %v900
      %v1216 = vmul.f32 %v902, %v902
      %v1217 = vmul.f32 %v906, %v906
      %v1218 = vmul.f32 %v908, %v908
      %v1219 = vmul.f32 %v912, %v912
      %v1220 = vmul.f32 %v914, %v914
      %v1221 = vmul.f32 %v918, %v918
      %v1222 = vmul.f32 %v920, %v920
      %v1223 = vmul.f32 %v924, %v924
      %v1224 = vmul.f32 %v926, %v926
      %v1225 = vmul.f32 %v930, %v930
      %v1226 = vmul.f32 %v932, %v932
      %v1227 = vmul.f32 %v936, %v936
      %v1228 = vmul.f32 %v938, %v938
      %v1229 = vmul.f32 %v942, %v942
      %v1230 = vmul.f32 %v944, %v944
      %v1231 = vmul.f32 %v948, %v948
      %v1232 = vmul.f32 %v950, %v950
      %v1233 = vmul.f32 %v954, %v954
      %v1234 = vmul.f32 %v956, %v956
      %v1235 = vmul.f32 %v960, %v960
      %v1236 = vmul.f32 %v962, %v962
      %v1237 = vmul.f32 %v966, %v966
      %v1238 = vmul.f32 %v968, %v968
      %v1239 = vmul.f32 %v972, %v972
      %v1240 = vmul.f32 %v974, %v974
      %v1241 = vmul.f32 %v978, %v978
      %v1242 = vmul.f32 %v980, %v980
      %v1243 = vmul.f32 %v984, %v984
      %v1244 = vmul.f32 %v986, %v986
      %v1245 = vadd.f32 %v1181, %v1182
      %1246 = vadd.xlane.f32.xlu0 %v1245
      %v1247 = vpop.xlane.xlu0 %1246
      %v1248 = vadd.f32 %v1183, %v1184
      %1249 = vadd.xlane.f32.xlu0 %v1248
      %v1250 = vpop.xlane.xlu0 %1249
      %v1251 = vadd.f32 %v1185, %v1186
      %1252 = vadd.xlane.f32.xlu0 %v1251
      %v1253 = vpop.xlane.xlu0 %1252
      %v1254 = vadd.f32 %v1187, %v1188
      %1255 = vadd.xlane.f32.xlu0 %v1254
      %v1256 = vpop.xlane.xlu0 %1255
      %v1257 = vadd.f32 %v1189, %v1190
      %1258 = vadd.xlane.f32.xlu0 %v1257
      %v1259 = vpop.xlane.xlu0 %1258
      %v1260 = vadd.f32 %v1191, %v1192
      %1261 = vadd.xlane.f32.xlu0 %v1260
      %v1262 = vpop.xlane.xlu0 %1261
      %v1263 = vadd.f32 %v1193, %v1194
      %1264 = vadd.xlane.f32.xlu0 %v1263
      %v1265 = vpop.xlane.xlu0 %1264
      %v1266 = vadd.f32 %v1195, %v1196
      %1267 = vadd.xlane.f32.xlu0 %v1266
      %v1268 = vpop.xlane.xlu0 %1267
      %v1269 = vadd.f32 %v1197, %v1198
      %1270 = vadd.xlane.f32.xlu0 %v1269
      %v1271 = vpop.xlane.xlu0 %1270
      %v1272 = vadd.f32 %v1199, %v1200
      %1273 = vadd.xlane.f32.xlu0 %v1272
      %v1274 = vpop.xlane.xlu0 %1273
      %v1275 = vadd.f32 %v1201, %v1202
      %1276 = vadd.xlane.f32.xlu0 %v1275
      %v1277 = vpop.xlane.xlu0 %1276
      %v1278 = vadd.f32 %v1203, %v1204
      %1279 = vadd.xlane.f32.xlu0 %v1278
      %v1280 = vpop.xlane.xlu0 %1279
      %v1281 = vadd.f32 %v1205, %v1206
      %1282 = vadd.xlane.f32.xlu0 %v1281
      %v1283 = vpop.xlane.xlu0 %1282
      %v1284 = vadd.f32 %v1207, %v1208
      %1285 = vadd.xlane.f32.xlu0 %v1284
      %v1286 = vpop.xlane.xlu0 %1285
      %v1287 = vadd.f32 %v1209, %v1210
      %1288 = vadd.xlane.f32.xlu0 %v1287
      %v1289 = vpop.xlane.xlu0 %1288
      %v1290 = vadd.f32 %v1211, %v1212
      %1291 = vadd.xlane.f32.xlu0 %v1290
      %v1292 = vpop.xlane.xlu0 %1291
      %v1293 = vadd.f32 %v1213, %v1214
      %1294 = vadd.xlane.f32.xlu0 %v1293
      %v1295 = vpop.xlane.xlu0 %1294
      %v1296 = vadd.f32 %v1215, %v1216
      %1297 = vadd.xlane.f32.xlu0 %v1296
      %v1298 = vpop.xlane.xlu0 %1297
      %v1299 = vadd.f32 %v1217, %v1218
      %1300 = vadd.xlane.f32.xlu0 %v1299
      %v1301 = vpop.xlane.xlu0 %1300
      %v1302 = vadd.f32 %v1219, %v1220
      %1303 = vadd.xlane.f32.xlu0 %v1302
      %v1304 = vpop.xlane.xlu0 %1303
      %v1305 = vadd.f32 %v1221, %v1222
      %1306 = vadd.xlane.f32.xlu0 %v1305
      %v1307 = vpop.xlane.xlu0 %1306
      %v1308 = vadd.f32 %v1223, %v1224
      %1309 = vadd.xlane.f32.xlu0 %v1308
      %v1310 = vpop.xlane.xlu0 %1309
      %v1311 = vadd.f32 %v1225, %v1226
      %1312 = vadd.xlane.f32.xlu0 %v1311
      %v1313 = vpop.xlane.xlu0 %1312
      %v1314 = vadd.f32 %v1227, %v1228
      %1315 = vadd.xlane.f32.xlu0 %v1314
      %v1316 = vpop.xlane.xlu0 %1315
      %v1317 = vadd.f32 %v1229, %v1230
      %1318 = vadd.xlane.f32.xlu0 %v1317
      %v1319 = vpop.xlane.xlu0 %1318
      %v1320 = vadd.f32 %v1231, %v1232
      %1321 = vadd.xlane.f32.xlu0 %v1320
      %v1322 = vpop.xlane.xlu0 %1321
      %v1323 = vadd.f32 %v1233, %v1234
      %1324 = vadd.xlane.f32.xlu0 %v1323
      %v1325 = vpop.xlane.xlu0 %1324
      %v1326 = vadd.f32 %v1235, %v1236
      %1327 = vadd.xlane.f32.xlu0 %v1326
      %v1328 = vpop.xlane.xlu0 %1327
      %v1329 = vadd.f32 %v1237, %v1238
      %1330 = vadd.xlane.f32.xlu0 %v1329
      %v1331 = vpop.xlane.xlu0 %1330
      %v1332 = vadd.f32 %v1239, %v1240
      %1333 = vadd.xlane.f32.xlu0 %v1332
      %v1334 = vpop.xlane.xlu0 %1333
      %v1335 = vadd.f32 %v1241, %v1242
      %1336 = vadd.xlane.f32.xlu0 %v1335
      %v1337 = vpop.xlane.xlu0 %1336
      %v1338 = vadd.f32 %v1243, %v1244
      %1339 = vadd.xlane.f32.xlu0 %v1338
      %v1340 = vpop.xlane.xlu0 %1339
      %1341 = vst.msk [vmem:[%s281] sm:$0xff] %vm1148, %v1247
      %1342 = vst.msk [vmem:[%s281 + $0x8] sm:$0xff] %vm1148, %v1250
      %1343 = vst.msk [vmem:[%s281 + $0x10] sm:$0xff] %vm1148, %v1253
      %1344 = vst.msk [vmem:[%s281 + $0x18] sm:$0xff] %vm1148, %v1256
      %1345 = vst.msk [vmem:[%s281 + $0x20] sm:$0xff] %vm1148, %v1259
      %1346 = vst.msk [vmem:[%s281 + $0x28] sm:$0xff] %vm1148, %v1262
      %1347 = vst.msk [vmem:[%s281 + $0x30] sm:$0xff] %vm1148, %v1265
      %1348 = vst.msk [vmem:[%s281 + $0x38] sm:$0xff] %vm1148, %v1268
      %1349 = vst.msk [vmem:[%s281 + $0x40] sm:$0xff] %vm1148, %v1271
      %1350 = vst.msk [vmem:[%s281 + $0x48] sm:$0xff] %vm1148, %v1274
      %1351 = vst.msk [vmem:[%s281 + $0x50] sm:$0xff] %vm1148, %v1277
      %1352 = vst.msk [vmem:[%s281 + $0x58] sm:$0xff] %vm1148, %v1280
      %1353 = vst.msk [vmem:[%s281 + $0x60] sm:$0xff] %vm1148, %v1283
      %1354 = vst.msk [vmem:[%s281 + $0x68] sm:$0xff] %vm1148, %v1286
      %1355 = vst.msk [vmem:[%s281 + $0x70] sm:$0xff] %vm1148, %v1289
      %1356 = vst.msk [vmem:[%s281 + $0x78] sm:$0xff] %vm1148, %v1292
      %1357 = vst.msk [vmem:[%s281 + $0x80] sm:$0xff] %vm1148, %v1295
      %1358 = vst.msk [vmem:[%s281 + $0x88] sm:$0xff] %vm1148, %v1298
      %1359 = vst.msk [vmem:[%s281 + $0x90] sm:$0xff] %vm1148, %v1301
      %1360 = vst.msk [vmem:[%s281 + $0x98] sm:$0xff] %vm1148, %v1304
      %1361 = vst.msk [vmem:[%s281 + $0xa0] sm:$0xff] %vm1148, %v1307
      %1362 = vst.msk [vmem:[%s281 + $0xa8] sm:$0xff] %vm1148, %v1310
      %1363 = vst.msk [vmem:[%s281 + $0xb0] sm:$0xff] %vm1148, %v1313
      %1364 = vst.msk [vmem:[%s281 + $0xb8] sm:$0xff] %vm1148, %v1316
      %1365 = vst.msk [vmem:[%s281 + $0xc0] sm:$0xff] %vm1148, %v1319
      %1366 = vst.msk [vmem:[%s281 + $0xc8] sm:$0xff] %vm1148, %v1322
      %1367 = vst.msk [vmem:[%s281 + $0xd0] sm:$0xff] %vm1148, %v1325
      %1368 = vst.msk [vmem:[%s281 + $0xd8] sm:$0xff] %vm1148, %v1328
      %1369 = vst.msk [vmem:[%s281 + $0xe0] sm:$0xff] %vm1148, %v1331
      %1370 = vst.msk [vmem:[%s281 + $0xe8] sm:$0xff] %vm1148, %v1334
      %1371 = vst.msk [vmem:[%s281 + $0xf0] sm:$0xff] %vm1148, %v1337
      %1372 = vst.msk [vmem:[%s281 + $0xf8] sm:$0xff] %vm1148, %v1340
      %s1373 = smul.u32 2, %s21
      %p1374 = scmp.lt.s32.totalorder %s20, 1
      %s1375 = scalar_select %p1374, %s20, 1
      %p1376 = scmp.lt.s32.totalorder %s1373, 1
      %s1377 = scalar_select %p1376, %s1373, 1
      %s1378 = smul.addr %s1375, 64
      %s1379 = sadd.s32 %s1377, %s1378
      %s1380 = smul.addr %s1379, 8
      %s1381 = scalar_lea.vmem %s2, %s1380
      %p1382 = scmp.lt.s32.totalorder %s20, 1
      %s1383 = scalar_select %p1382, %s20, 1
      %p1384 = scmp.lt.s32.totalorder %s21, 0
      %s1385 = scalar_select %p1384, %s21, 0
      %s1386 = smul.addr %s1385, 32
      %s1387 = smul.addr %s1383, 32
      %s1388 = sadd.s32 %s1386, %s1387
      %s1389 = smul.addr %s1388, 8
      %s1390 = scalar_lea.vmem %s3, %s1389
      %p1391 = scmp.lt.s32.totalorder %s20, 1
      %s1392 = scalar_select %p1391, %s20, 1
      %p1393 = scmp.lt.s32.totalorder %s21, 0
      %s1394 = scalar_select %p1393, %s21, 0
      %s1395 = smul.addr %s1394, 32
      %s1396 = smul.addr %s1392, 32
      %s1397 = sadd.s32 %s1395, %s1396
      %s1398 = smul.addr %s1397, 8
      %s1399 = scalar_lea.vmem %s4, %s1398
      // Predicated region
      $region29: #{model_forward.3} parent=27 // pred_check
        %p1400 = pneg %p97
      $region30: #{model_forward.3} parent=27 // pred_check_branch
        %1402 = sbr.rel (%p1400) target = $region32
      $region31: #{model_forward.3} parent=27 // pred_region
        %s1403 = smul.u32 2, %s21
      $region32: #{model_forward.3} parent=27 // pred_fallthru
        _
      // Predicated region
      $region33: #{model_forward.3} parent=27 // pred_check
        %p1404 = pneg %p125
      $region34: #{model_forward.3} parent=27 // pred_check_branch
        %1406 = sbr.rel (%p1404) target = $region36
      $region35: #{model_forward.3} parent=27 // pred_region
        _
      $region36: #{model_forward.3} parent=27 // pred_fallthru
        _
      // Predicated region
      $region37: #{model_forward.3} parent=27 // pred_check
        %p1407 = pneg %p153
      $region38: #{model_forward.3} parent=27 // pred_check_branch
        %1409 = sbr.rel (%p1407) target = $region40
      $region39: #{model_forward.3} parent=27 // pred_region
        _
      $region40: #{model_forward.3} parent=27 // pred_fallthru
        _
    $region28: #{model_forward.3} parent=5 // pred_fallthru
      _
    %p1410 = scmp.le.s32.totalorder 2, %s11
    // Predicated region
    $region41: #{model_forward.3} parent=5 // pred_check
      %p1411 = pneg %p1410
    $region42: #{model_forward.3} parent=5 // pred_check_branch
      %1413 = sbr.rel (%p1411) target = $region44
    $region43: #{model_forward.3} parent=5 // pred_region
      %s1414 = ssub.s32 %s11, 2
      // Predicated region
      $region45: #{model_forward.3} parent=43 // pred_check
        %p1415 = pneg %p103
      $region46: #{model_forward.3} parent=43 // pred_check_branch
        %1417 = sbr.rel (%p1415) target = $region48
      $region47: #{model_forward.3} parent=43 // pred_region
        %s1418 = smul.u32 2, %s23
        %p1419 = scmp.lt.s32.totalorder %s22, 1
        %s1420 = scalar_select %p1419, %s22, 1
        %p1421 = scmp.lt.s32.totalorder %s1418, 1
        %s1422 = scalar_select %p1421, %s1418, 1
        %s1423 = smul.addr %s1420, 64
        %s1424 = sadd.s32 %s1422, %s1423
        %s1425 = smul.addr %s1424, 8
        %s1426 = scalar_lea.vmem %s2, %s1425
      $region48: #{model_forward.3} parent=43 // pred_fallthru
        _
      // Predicated region
      $region49: #{model_forward.3} parent=43 // pred_check
        %p1427 = pneg %p131
      $region50: #{model_forward.3} parent=43 // pred_check_branch
        %1429 = sbr.rel (%p1427) target = $region52
      $region51: #{model_forward.3} parent=43 // pred_region
        %p1430 = scmp.lt.s32.totalorder %s22, 1
        %s1431 = scalar_select %p1430, %s22, 1
        %p1432 = scmp.lt.s32.totalorder %s23, 0
        %s1433 = scalar_select %p1432, %s23, 0
        %s1434 = smul.addr %s1433, 32
        %s1435 = smul.addr %s1431, 32
        %s1436 = sadd.s32 %s1434, %s1435
        %s1437 = smul.addr %s1436, 8
        %s1438 = scalar_lea.vmem %s3, %s1437
      $region52: #{model_forward.3} parent=43 // pred_fallthru
        _
      // Predicated region
      $region53: #{model_forward.3} parent=43 // pred_check
        %p1439 = pneg %p159
      $region54: #{model_forward.3} parent=43 // pred_check_branch
        %1441 = sbr.rel (%p1439) target = $region56
      $region55: #{model_forward.3} parent=43 // pred_region
        %p1442 = scmp.lt.s32.totalorder %s22, 1
        %s1443 = scalar_select %p1442, %s22, 1
        %p1444 = scmp.lt.s32.totalorder %s23, 0
        %s1445 = scalar_select %p1444, %s23, 0
        %s1446 = smul.addr %s1445, 32
        %s1447 = smul.addr %s1443, 32
        %s1448 = sadd.s32 %s1446, %s1447
        %s1449 = smul.addr %s1448, 8
        %s1450 = scalar_lea.vmem %s4, %s1449
      $region56: #{model_forward.3} parent=43 // pred_fallthru
        _
    $region44: #{model_forward.3} parent=5 // pred_fallthru
      _
  $region6: #{model_forward.3} parent=0 // loop_footer
    %s15 = sadd.s32 1, %s11
  $region7: #{model_forward.3} parent=0 // loop_footer_branch
    %10 = sbr.rel target = $region3
  $region8: #{model_forward.3} parent=0 // loop_exit
    _

// kernel: model_forward.4
$region0: #{model_forward.4}
  #allocation0 [shape = 'u32[]', space=smem, size = 0x4, offset = 0x4, fixed_abs, tag = 'smem constant byte address 0x4 - core index']
  #allocation1 [shape = 'u32[144,128]{1,0:T(1,128)}', space=vmem, size = 0x12000, scoped, tag = 'internal scratch']
  %s0 = inlined_call_operand.vmem [shape: f32[2,256,256], index: 0, kind: input, shape index: {}]
  %s1 = inlined_call_operand.vmem [shape: f32[256,1], index: 1, kind: input, shape index: {}]
  %s2 = inlined_call_operand.vmem [shape: f32[256,1], index: 2, kind: input, shape index: {}]
  %s3 = inlined_call_operand.vmem [shape: f32[256,256], index: 3, kind: input, shape index: {}]
  %s4 = inlined_call_operand.vmem [shape: f32[2,256,256], index: 4, kind: output, shape index: {0}]
  %s5 = inlined_call_operand.vmem [shape: f32[2,1,256,1], index: 5, kind: output, shape index: {1}]
  %s6 = inlined_call_operand.vmem [shape: f32[2,1,256,1], index: 6, kind: output, shape index: {2}]
  %7 = xla_tuple %s4, %s5, %s6
  %s8 = sld [smem:[#allocation0]]
  $region65: #{model_forward.4} parent=0
    _
  %s10 = ssub.s32 1, %s8
  %s11 = scalar_select 0, %s10, %s8
  loop: start=0, step=1, limit=4
  $region2: #{model_forward.4} parent=0 // loop_pre_header
    _
  $region3: #{model_forward.4} parent=0 // loop_header
    %s13 = sphi 0, %s17
    %p14 = scmp.ge.s32.totalorder %s13, 4
    %s20 = sphi 0, %s32
    %s21 = sphi 0, %s28
    %s22 = sphi 0, %s20
    %s23 = sphi 0, %s21
    %s24 = sphi 0, %s22
    %s25 = sphi 0, %s23
    %s37 = sphi 0, %s39
    %s40 = sphi 0, %s37
    %s41 = sphi 0, %s40
    %s57 = sphi 0, %s41
    %s61 = sphi 0, %s61
    %s63 = sphi 0, %s61
    %s64 = sphi 0, %s63
    %s78 = sphi 0, %s64
    %s82 = sphi 0, %s82
    %s84 = sphi 0, %s82
    %s85 = sphi 0, %s84
    %s99 = sphi 0, %s85
    %s103 = sphi 0, %s103
    %s105 = sphi 0, %s103
    %s106 = sphi 0, %s105
    %s120 = sphi 0, %s106
    %s128 = sphi 0, %s130
    %s131 = sphi 0, %s128
    %s132 = sphi 0, %s131
    %s148 = sphi 0, %s132
    %s156 = sphi 0, %s158
    %s159 = sphi 0, %s156
    %s160 = sphi 0, %s159
    %s176 = sphi 0, %s160
    %s184 = sphi 0, %s186
    %s187 = sphi 0, %s184
    %s188 = sphi 0, %s187
    %s204 = sphi 0, %s188
  $region4: #{model_forward.4} parent=0 // loop_header_branch
    %16 = sbr.rel (%p14) target = $region8
  $region5: #{model_forward.4} parent=0 // loop_body
    %s18 = ssub.s32 %s13, 1
    %s19 = ssub.s32 %s13, 2
    %s26 = sadd.s32 1, %s21
    %p27 = scmp.ge.s32.totalorder %s26, 1
    %s28 = scalar_select %p27, 0, %s26
    %s29 = sadd.s32 1, %s20
    %s30 = scalar_select %p27, %s29, %s20
    %p31 = scmp.ge.s32.totalorder %s30, 2
    %s32 = scalar_select %p31, 0, %s30
    %s33 = ssub.s32 %s20, %s32
    %s34 = ssub.s32 %s21, %s28
    %s35 = sor.u32 %s33, %s34
    %p36 = scmp.eq.s32.totalorder %s35, 0
    %s38 = sadd.s32 %s37, 1
    %s39 = scalar_select %p36, %s37, %s38
    %p42 = pneg %p36
    %p43 = scmp.eq.s32.totalorder %s13, 1
    %p44 = por %p42, %p43
    %p45 = scmp.ne.s32.totalorder %s37, %s40
    %p46 = scmp.eq.s32.totalorder %s13, 0
    %p47 = por %p45, %p46
    %p48 = scmp.ne.s32.totalorder %s37, %s40
    %p49 = scmp.eq.s32.totalorder %s18, 1
    %p50 = por %p48, %p49
    %p51 = scmp.ne.s32.totalorder %s40, %s41
    %p52 = scmp.eq.s32.totalorder %s18, 0
    %p53 = por %p51, %p52
    %p54 = scmp.ne.s32.totalorder %s40, %s41
    %p55 = scmp.eq.s32.totalorder %s19, 1
    %p56 = por %p54, %p55
    %p58 = scmp.ne.s32.totalorder %s41, %s57
    %p59 = scmp.eq.s32.totalorder %s19, 0
    %p60 = por %p58, %p59
    %s62 = sadd.s32 %s61, 1
    %p65 = scmp.eq.s32.totalorder %s13, 1
    %p66 = scmp.ne.s32.totalorder %s61, %s63
    %p67 = scmp.eq.s32.totalorder %s13, 0
    %p68 = por %p66, %p67
    %p69 = scmp.ne.s32.totalorder %s61, %s63
    %p70 = scmp.eq.s32.totalorder %s18, 1
    %p71 = por %p69, %p70
    %p72 = scmp.ne.s32.totalorder %s63, %s64
    %p73 = scmp.eq.s32.totalorder %s18, 0
    %p74 = por %p72, %p73
    %p75 = scmp.ne.s32.totalorder %s63, %s64
    %p76 = scmp.eq.s32.totalorder %s19, 1
    %p77 = por %p75, %p76
    %p79 = scmp.ne.s32.totalorder %s64, %s78
    %p80 = scmp.eq.s32.totalorder %s19, 0
    %p81 = por %p79, %p80
    %s83 = sadd.s32 %s82, 1
    %p86 = scmp.eq.s32.totalorder %s13, 1
    %p87 = scmp.ne.s32.totalorder %s82, %s84
    %p88 = scmp.eq.s32.totalorder %s13, 0
    %p89 = por %p87, %p88
    %p90 = scmp.ne.s32.totalorder %s82, %s84
    %p91 = scmp.eq.s32.totalorder %s18, 1
    %p92 = por %p90, %p91
    %p93 = scmp.ne.s32.totalorder %s84, %s85
    %p94 = scmp.eq.s32.totalorder %s18, 0
    %p95 = por %p93, %p94
    %p96 = scmp.ne.s32.totalorder %s84, %s85
    %p97 = scmp.eq.s32.totalorder %s19, 1
    %p98 = por %p96, %p97
    %p100 = scmp.ne.s32.totalorder %s85, %s99
    %p101 = scmp.eq.s32.totalorder %s19, 0
    %p102 = por %p100, %p101
    %s104 = sadd.s32 %s103, 1
    %p107 = scmp.eq.s32.totalorder %s13, 1
    %p108 = scmp.ne.s32.totalorder %s103, %s105
    %p109 = scmp.eq.s32.totalorder %s13, 0
    %p110 = por %p108, %p109
    %p111 = scmp.ne.s32.totalorder %s103, %s105
    %p112 = scmp.eq.s32.totalorder %s18, 1
    %p113 = por %p111, %p112
    %p114 = scmp.ne.s32.totalorder %s105, %s106
    %p115 = scmp.eq.s32.totalorder %s18, 0
    %p116 = por %p114, %p115
    %p117 = scmp.ne.s32.totalorder %s105, %s106
    %p118 = scmp.eq.s32.totalorder %s19, 1
    %p119 = por %p117, %p118
    %p121 = scmp.ne.s32.totalorder %s106, %s120
    %p122 = scmp.eq.s32.totalorder %s19, 0
    %p123 = por %p121, %p122
    %s124 = ssub.s32 %s20, %s32
    %s125 = ssub.s32 %s21, %s28
    %s126 = sor.u32 %s124, %s125
    %p127 = scmp.eq.s32.totalorder %s126, 0
    %s129 = sadd.s32 %s128, 1
    %s130 = scalar_select %p127, %s128, %s129
    %p133 = pneg %p127
    %p134 = scmp.eq.s32.totalorder %s13, 1
    %p135 = por %p133, %p134
    %p136 = scmp.ne.s32.totalorder %s128, %s131
    %p137 = scmp.eq.s32.totalorder %s13, 0
    %p138 = por %p136, %p137
    %p139 = scmp.ne.s32.totalorder %s128, %s131
    %p140 = scmp.eq.s32.totalorder %s18, 1
    %p141 = por %p139, %p140
    %p142 = scmp.ne.s32.totalorder %s131, %s132
    %p143 = scmp.eq.s32.totalorder %s18, 0
    %p144 = por %p142, %p143
    %p145 = scmp.ne.s32.totalorder %s131, %s132
    %p146 = scmp.eq.s32.totalorder %s19, 1
    %p147 = por %p145, %p146
    %p149 = scmp.ne.s32.totalorder %s132, %s148
    %p150 = scmp.eq.s32.totalorder %s19, 0
    %p151 = por %p149, %p150
    %s152 = ssub.s32 %s20, %s32
    %s153 = ssub.s32 %s21, %s28
    %s154 = sor.u32 %s152, %s153
    %p155 = scmp.eq.s32.totalorder %s154, 0
    %s157 = sadd.s32 %s156, 1
    %s158 = scalar_select %p155, %s156, %s157
    %p161 = pneg %p155
    %p162 = scmp.eq.s32.totalorder %s13, 1
    %p163 = por %p161, %p162
    %p164 = scmp.ne.s32.totalorder %s156, %s159
    %p165 = scmp.eq.s32.totalorder %s13, 0
    %p166 = por %p164, %p165
    %p167 = scmp.ne.s32.totalorder %s156, %s159
    %p168 = scmp.eq.s32.totalorder %s18, 1
    %p169 = por %p167, %p168
    %p170 = scmp.ne.s32.totalorder %s159, %s160
    %p171 = scmp.eq.s32.totalorder %s18, 0
    %p172 = por %p170, %p171
    %p173 = scmp.ne.s32.totalorder %s159, %s160
    %p174 = scmp.eq.s32.totalorder %s19, 1
    %p175 = por %p173, %p174
    %p177 = scmp.ne.s32.totalorder %s160, %s176
    %p178 = scmp.eq.s32.totalorder %s19, 0
    %p179 = por %p177, %p178
    %s180 = ssub.s32 %s20, %s32
    %s181 = ssub.s32 %s21, %s28
    %s182 = sor.u32 %s180, %s181
    %p183 = scmp.eq.s32.totalorder %s182, 0
    %s185 = sadd.s32 %s184, 1
    %s186 = scalar_select %p183, %s184, %s185
    %p189 = pneg %p183
    %p190 = scmp.eq.s32.totalorder %s13, 1
    %p191 = por %p189, %p190
    %p192 = scmp.ne.s32.totalorder %s184, %s187
    %p193 = scmp.eq.s32.totalorder %s13, 0
    %p194 = por %p192, %p193
    %p195 = scmp.ne.s32.totalorder %s184, %s187
    %p196 = scmp.eq.s32.totalorder %s18, 1
    %p197 = por %p195, %p196
    %p198 = scmp.ne.s32.totalorder %s187, %s188
    %p199 = scmp.eq.s32.totalorder %s18, 0
    %p200 = por %p198, %p199
    %p201 = scmp.ne.s32.totalorder %s187, %s188
    %p202 = scmp.eq.s32.totalorder %s19, 1
    %p203 = por %p201, %p202
    %p205 = scmp.ne.s32.totalorder %s188, %s204
    %p206 = scmp.eq.s32.totalorder %s19, 0
    %p207 = por %p205, %p206
    %p208 = scmp.le.s32.totalorder 1, %s13
    %p209 = scmp.lt.s32.totalorder %s13, 3
    %p210 = pnand %p208, %p209
    %p211 = pneg %p210
    // Predicated region
    $region9: #{model_forward.4} parent=5 // pred_check
      _
    $region10: #{model_forward.4} parent=5 // pred_check_branch
      %213 = sbr.rel (%p210) target = $region12
    $region11: #{model_forward.4} parent=5 // pred_region
      %s214 = ssub.s32 %s13, 1
      // Predicated region
      $region13: #{model_forward.4} parent=11 // pred_check
        %p215 = pneg %p74
      $region14: #{model_forward.4} parent=11 // pred_check_branch
        %217 = sbr.rel (%p215) target = $region16
      $region15: #{model_forward.4} parent=11 // pred_region
        _
      $region16: #{model_forward.4} parent=11 // pred_fallthru
        _
      // Predicated region
      $region17: #{model_forward.4} parent=11 // pred_check
        %p218 = pneg %p95
      $region18: #{model_forward.4} parent=11 // pred_check_branch
        %220 = sbr.rel (%p218) target = $region20
      $region19: #{model_forward.4} parent=11 // pred_region
        _
      $region20: #{model_forward.4} parent=11 // pred_fallthru
        _
      // Predicated region
      $region21: #{model_forward.4} parent=11 // pred_check
        %p221 = pneg %p116
      $region22: #{model_forward.4} parent=11 // pred_check_branch
        %223 = sbr.rel (%p221) target = $region24
      $region23: #{model_forward.4} parent=11 // pred_region
        _
      $region24: #{model_forward.4} parent=11 // pred_fallthru
        _
    $region12: #{model_forward.4} parent=5 // pred_fallthru
      _
    %p224 = scmp.lt.s32.totalorder %s13, 2
    // Predicated region
    $region25: #{model_forward.4} parent=5 // pred_check
      %p225 = pneg %p224
    $region26: #{model_forward.4} parent=5 // pred_check_branch
      %227 = sbr.rel (%p225) target = $region28
    $region27: #{model_forward.4} parent=5 // pred_region
      // Predicated region
      $region29: #{model_forward.4} parent=27 // pred_check
        %p228 = pneg %p47
      $region30: #{model_forward.4} parent=27 // pred_check_branch
        %230 = sbr.rel (%p228) target = $region32
      $region31: #{model_forward.4} parent=27 // pred_region
        %s231 = smul.u32 2, %s21
        %p232 = scmp.lt.s32.totalorder %s20, 1
        %s233 = scalar_select %p232, %s20, 1
        %p234 = scmp.lt.s32.totalorder %s231, 1
        %s235 = scalar_select %p234, %s231, 1
        %s236 = smul.addr %s233, 64
        %s237 = sadd.s32 %s235, %s236
        %s238 = smul.addr %s237, 8
        %s239 = scalar_lea.vmem %s0, %s238
        %s240 = smul.u32 2, %s21
      $region32: #{model_forward.4} parent=27 // pred_fallthru
        _
    $region28: #{model_forward.4} parent=5 // pred_fallthru
      _
    %p241 = scmp.le.s32.totalorder 1, %s13
    %p242 = scmp.lt.s32.totalorder %s13, 3
    %p243 = pnand %p241, %p242
    %p244 = pneg %p243
    // Predicated region
    $region33: #{model_forward.4} parent=5 // pred_check
      _
    $region34: #{model_forward.4} parent=5 // pred_check_branch
      %246 = sbr.rel (%p243) target = $region36
    $region35: #{model_forward.4} parent=5 // pred_region
      %s247 = ssub.s32 %s13, 1
      %s248 = smul.u32 2, %s23
      %p249 = scmp.lt.s32.totalorder %s22, 1
      %s250 = scalar_select %p249, %s22, 1
      %p251 = scmp.lt.s32.totalorder %s248, 1
      %s252 = scalar_select %p251, %s248, 1
      %s253 = smul.addr %s250, 64
      %s254 = sadd.s32 %s252, %s253
      %s255 = smul.addr %s254, 8
      %s256 = scalar_lea.vmem %s0, %s255
      %p257 = pneg %p53
      %p258 = pneg %p50
      %p259 = pneg %p74
      %p260 = pneg %p71
      %p261 = pneg %p95
      %p262 = pneg %p92
      %p263 = pneg %p116
      %p264 = pneg %p113
      %p265 = pneg %p144
      %p266 = pneg %p141
      %s267 = smul.u32 2, %s23
      %p268 = scmp.lt.s32.totalorder %s22, 1
      %s269 = scalar_select %p268, %s22, 1
      %p270 = scmp.lt.s32.totalorder %s267, 1
      %s271 = scalar_select %p270, %s267, 1
      %s272 = smul.addr %s269, 64
      %s273 = sadd.s32 %s271, %s272
      %s274 = smul.addr %s273, 8
      %s275 = scalar_lea.vmem %s4, %s274
      %p276 = pneg %p172
      %p277 = pneg %p169
      %p278 = scmp.lt.s32.totalorder %s22, 1
      %s279 = scalar_select %p278, %s22, 1
      %p280 = scmp.lt.s32.totalorder %s23, 0
      %s281 = scalar_select %p280, %s23, 0
      %s282 = smul.addr %s281, 32
      %s283 = smul.addr %s279, 32
      %s284 = sadd.s32 %s282, %s283
      %s285 = smul.addr %s284, 8
      %s286 = scalar_lea.vmem %s5, %s285
      %p287 = pneg %p200
      %p288 = pneg %p197
      %p289 = scmp.lt.s32.totalorder %s22, 1
      %s290 = scalar_select %p289, %s22, 1
      %p291 = scmp.lt.s32.totalorder %s23, 0
      %s292 = scalar_select %p291, %s23, 0
      %s293 = smul.addr %s292, 32
      %s294 = smul.addr %s290, 32
      %s295 = sadd.s32 %s293, %s294
      %s296 = smul.addr %s295, 8
      %s297 = scalar_lea.vmem %s6, %s296
      %s298 = smul.u32 2, %s23
      %p299 = scmp.lt.s32.totalorder %s22, 1
      %s300 = scalar_select %p299, %s22, 1
      %p301 = scmp.lt.s32.totalorder %s298, 1
      %s302 = scalar_select %p301, %s298, 1
      %s303 = smul.addr %s300, 64
      %s304 = sadd.s32 %s302, %s303
      %s305 = smul.addr %s304, 8
      %s306 = scalar_lea.vmem %s0, %s305
      %s307 = smul.u32 2, %s23
      %s308 = smul.u32 2, %s23
      %p309 = scmp.lt.s32.totalorder %s22, 1
      %s310 = scalar_select %p309, %s22, 1
      %p311 = scmp.lt.s32.totalorder %s308, 1
      %s312 = scalar_select %p311, %s308, 1
      %s313 = smul.addr %s310, 64
      %s314 = sadd.s32 %s312, %s313
      %s315 = smul.addr %s314, 8
      %s316 = scalar_lea.vmem %s4, %s315
      %s317 = smul.u32 2, %s23
      %p318 = scmp.lt.s32.totalorder %s22, 1
      %s319 = scalar_select %p318, %s22, 1
      %p320 = scmp.lt.s32.totalorder %s23, 0
      %s321 = scalar_select %p320, %s23, 0
      %s322 = smul.addr %s321, 32
      %s323 = smul.addr %s319, 32
      %s324 = sadd.s32 %s322, %s323
      %s325 = smul.addr %s324, 8
      %s326 = scalar_lea.vmem %s5, %s325
      %p327 = scmp.lt.s32.totalorder %s22, 1
      %s328 = scalar_select %p327, %s22, 1
      %p329 = scmp.lt.s32.totalorder %s23, 0
      %s330 = scalar_select %p329, %s23, 0
      %s331 = smul.addr %s330, 32
      %s332 = smul.addr %s328, 32
      %s333 = sadd.s32 %s331, %s332
      %s334 = smul.addr %s333, 8
      %s335 = scalar_lea.vmem %s6, %s334
      %v336 = vld [vmem:[%s306] sm:$0xff]
      %v337 = vld [vmem:[%s306 + $0x8] sm:$0xff]
      %v338 = vld [vmem:[%s306 + $0x10] sm:$0xff]
      %v339 = vld [vmem:[%s306 + $0x18] sm:$0xff]
      %v340 = vld [vmem:[%s306 + $0x20] sm:$0xff]
      %v341 = vld [vmem:[%s306 + $0x28] sm:$0xff]
      %v342 = vld [vmem:[%s306 + $0x30] sm:$0xff]
      %v343 = vld [vmem:[%s306 + $0x38] sm:$0xff]
      %v344 = vld [vmem:[%s306 + $0x40] sm:$0xff]
      %v345 = vld [vmem:[%s306 + $0x48] sm:$0xff]
      %v346 = vld [vmem:[%s306 + $0x50] sm:$0xff]
      %v347 = vld [vmem:[%s306 + $0x58] sm:$0xff]
      %v348 = vld [vmem:[%s306 + $0x60] sm:$0xff]
      %v349 = vld [vmem:[%s306 + $0x68] sm:$0xff]
      %v350 = vld [vmem:[%s306 + $0x70] sm:$0xff]
      %v351 = vld [vmem:[%s306 + $0x78] sm:$0xff]
      %v352 = vld [vmem:[%s306 + $0x80] sm:$0xff]
      %v353 = vld [vmem:[%s306 + $0x88] sm:$0xff]
      %v354 = vld [vmem:[%s306 + $0x90] sm:$0xff]
      %v355 = vld [vmem:[%s306 + $0x98] sm:$0xff]
      %v356 = vld [vmem:[%s306 + $0xa0] sm:$0xff]
      %v357 = vld [vmem:[%s306 + $0xa8] sm:$0xff]
      %v358 = vld [vmem:[%s306 + $0xb0] sm:$0xff]
      %v359 = vld [vmem:[%s306 + $0xb8] sm:$0xff]
      %v360 = vld [vmem:[%s306 + $0xc0] sm:$0xff]
      %v361 = vld [vmem:[%s306 + $0xc8] sm:$0xff]
      %v362 = vld [vmem:[%s306 + $0xd0] sm:$0xff]
      %v363 = vld [vmem:[%s306 + $0xd8] sm:$0xff]
      %v364 = vld [vmem:[%s306 + $0xe0] sm:$0xff]
      %v365 = vld [vmem:[%s306 + $0xe8] sm:$0xff]
      %v366 = vld [vmem:[%s306 + $0xf0] sm:$0xff]
      %v367 = vld [vmem:[%s306 + $0xf8] sm:$0xff]
      %v368 = vld [vmem:[%s306 + $0x100] sm:$0xff]
      %v369 = vld [vmem:[%s306 + $0x108] sm:$0xff]
      %v370 = vld [vmem:[%s306 + $0x110] sm:$0xff]
      %v371 = vld [vmem:[%s306 + $0x118] sm:$0xff]
      %v372 = vld [vmem:[%s306 + $0x120] sm:$0xff]
      %v373 = vld [vmem:[%s306 + $0x128] sm:$0xff]
      %v374 = vld [vmem:[%s306 + $0x130] sm:$0xff]
      %v375 = vld [vmem:[%s306 + $0x138] sm:$0xff]
      %v376 = vld [vmem:[%s306 + $0x140] sm:$0xff]
      %v377 = vld [vmem:[%s306 + $0x148] sm:$0xff]
      %v378 = vld [vmem:[%s306 + $0x150] sm:$0xff]
      %v379 = vld [vmem:[%s306 + $0x158] sm:$0xff]
      %v380 = vld [vmem:[%s306 + $0x160] sm:$0xff]
      %v381 = vld [vmem:[%s306 + $0x168] sm:$0xff]
      %v382 = vld [vmem:[%s306 + $0x170] sm:$0xff]
      %v383 = vld [vmem:[%s306 + $0x178] sm:$0xff]
      %v384 = vld [vmem:[%s306 + $0x180] sm:$0xff]
      %v385 = vld [vmem:[%s306 + $0x188] sm:$0xff]
      %v386 = vld [vmem:[%s306 + $0x190] sm:$0xff]
      %v387 = vld [vmem:[%s306 + $0x198] sm:$0xff]
      %v388 = vld [vmem:[%s306 + $0x1a0] sm:$0xff]
      %v389 = vld [vmem:[%s306 + $0x1a8] sm:$0xff]
      %v390 = vld [vmem:[%s306 + $0x1b0] sm:$0xff]
      %v391 = vld [vmem:[%s306 + $0x1b8] sm:$0xff]
      %v392 = vld [vmem:[%s306 + $0x1c0] sm:$0xff]
      %v393 = vld [vmem:[%s306 + $0x1c8] sm:$0xff]
      %v394 = vld [vmem:[%s306 + $0x1d0] sm:$0xff]
      %v395 = vld [vmem:[%s306 + $0x1d8] sm:$0xff]
      %v396 = vld [vmem:[%s306 + $0x1e0] sm:$0xff]
      %v397 = vld [vmem:[%s306 + $0x1e8] sm:$0xff]
      %v398 = vld [vmem:[%s306 + $0x1f0] sm:$0xff]
      %v399 = vld [vmem:[%s306 + $0x1f8] sm:$0xff]
      %v400 = vld [vmem:[%s1] sm:$0xff]
      %v401 = vld [vmem:[%s1 + $0x8] sm:$0xff]
      %v402 = vld [vmem:[%s1 + $0x10] sm:$0xff]
      %v403 = vld [vmem:[%s1 + $0x18] sm:$0xff]
      %v404 = vld [vmem:[%s1 + $0x20] sm:$0xff]
      %v405 = vld [vmem:[%s1 + $0x28] sm:$0xff]
      %v406 = vld [vmem:[%s1 + $0x30] sm:$0xff]
      %v407 = vld [vmem:[%s1 + $0x38] sm:$0xff]
      %v408 = vld [vmem:[%s1 + $0x40] sm:$0xff]
      %v409 = vld [vmem:[%s1 + $0x48] sm:$0xff]
      %v410 = vld [vmem:[%s1 + $0x50] sm:$0xff]
      %v411 = vld [vmem:[%s1 + $0x58] sm:$0xff]
      %v412 = vld [vmem:[%s1 + $0x60] sm:$0xff]
      %v413 = vld [vmem:[%s1 + $0x68] sm:$0xff]
      %v414 = vld [vmem:[%s1 + $0x70] sm:$0xff]
      %v415 = vld [vmem:[%s1 + $0x78] sm:$0xff]
      %v416 = vld [vmem:[%s1 + $0x80] sm:$0xff]
      %v417 = vld [vmem:[%s1 + $0x88] sm:$0xff]
      %v418 = vld [vmem:[%s1 + $0x90] sm:$0xff]
      %v419 = vld [vmem:[%s1 + $0x98] sm:$0xff]
      %v420 = vld [vmem:[%s1 + $0xa0] sm:$0xff]
      %v421 = vld [vmem:[%s1 + $0xa8] sm:$0xff]
      %v422 = vld [vmem:[%s1 + $0xb0] sm:$0xff]
      %v423 = vld [vmem:[%s1 + $0xb8] sm:$0xff]
      %v424 = vld [vmem:[%s1 + $0xc0] sm:$0xff]
      %v425 = vld [vmem:[%s1 + $0xc8] sm:$0xff]
      %v426 = vld [vmem:[%s1 + $0xd0] sm:$0xff]
      %v427 = vld [vmem:[%s1 + $0xd8] sm:$0xff]
      %v428 = vld [vmem:[%s1 + $0xe0] sm:$0xff]
      %v429 = vld [vmem:[%s1 + $0xe8] sm:$0xff]
      %v430 = vld [vmem:[%s1 + $0xf0] sm:$0xff]
      %v431 = vld [vmem:[%s1 + $0xf8] sm:$0xff]
      %433 = vset.pattern.permute.xlu0 0
      %434 = vperm.xlu0 %433, %v400
      %v435 = vpop.permute.xlu0 %434
      %438 = vset.pattern.permute.xlu0 0
      %439 = vperm.xlu0 %438, %v401
      %v440 = vpop.permute.xlu0 %439
      %443 = vset.pattern.permute.xlu0 0
      %444 = vperm.xlu0 %443, %v402
      %v445 = vpop.permute.xlu0 %444
      %448 = vset.pattern.permute.xlu0 0
      %449 = vperm.xlu0 %448, %v403
      %v450 = vpop.permute.xlu0 %449
      %453 = vset.pattern.permute.xlu0 0
      %454 = vperm.xlu0 %453, %v404
      %v455 = vpop.permute.xlu0 %454
      %458 = vset.pattern.permute.xlu0 0
      %459 = vperm.xlu0 %458, %v405
      %v460 = vpop.permute.xlu0 %459
      %463 = vset.pattern.permute.xlu0 0
      %464 = vperm.xlu0 %463, %v406
      %v465 = vpop.permute.xlu0 %464
      %468 = vset.pattern.permute.xlu0 0
      %469 = vperm.xlu0 %468, %v407
      %v470 = vpop.permute.xlu0 %469
      %473 = vset.pattern.permute.xlu0 0
      %474 = vperm.xlu0 %473, %v408
      %v475 = vpop.permute.xlu0 %474
      %478 = vset.pattern.permute.xlu0 0
      %479 = vperm.xlu0 %478, %v409
      %v480 = vpop.permute.xlu0 %479
      %483 = vset.pattern.permute.xlu0 0
      %484 = vperm.xlu0 %483, %v410
      %v485 = vpop.permute.xlu0 %484
      %488 = vset.pattern.permute.xlu0 0
      %489 = vperm.xlu0 %488, %v411
      %v490 = vpop.permute.xlu0 %489
      %493 = vset.pattern.permute.xlu0 0
      %494 = vperm.xlu0 %493, %v412
      %v495 = vpop.permute.xlu0 %494
      %498 = vset.pattern.permute.xlu0 0
      %499 = vperm.xlu0 %498, %v413
      %v500 = vpop.permute.xlu0 %499
      %503 = vset.pattern.permute.xlu0 0
      %504 = vperm.xlu0 %503, %v414
      %v505 = vpop.permute.xlu0 %504
      %508 = vset.pattern.permute.xlu0 0
      %509 = vperm.xlu0 %508, %v415
      %v510 = vpop.permute.xlu0 %509
      %513 = vset.pattern.permute.xlu0 0
      %514 = vperm.xlu0 %513, %v416
      %v515 = vpop.permute.xlu0 %514
      %518 = vset.pattern.permute.xlu0 0
      %519 = vperm.xlu0 %518, %v417
      %v520 = vpop.permute.xlu0 %519
      %523 = vset.pattern.permute.xlu0 0
      %524 = vperm.xlu0 %523, %v418
      %v525 = vpop.permute.xlu0 %524
      %528 = vset.pattern.permute.xlu0 0
      %529 = vperm.xlu0 %528, %v419
      %v530 = vpop.permute.xlu0 %529
      %533 = vset.pattern.permute.xlu0 0
      %534 = vperm.xlu0 %533, %v420
      %v535 = vpop.permute.xlu0 %534
      %538 = vset.pattern.permute.xlu0 0
      %539 = vperm.xlu0 %538, %v421
      %v540 = vpop.permute.xlu0 %539
      %543 = vset.pattern.permute.xlu0 0
      %544 = vperm.xlu0 %543, %v422
      %v545 = vpop.permute.xlu0 %544
      %548 = vset.pattern.permute.xlu0 0
      %549 = vperm.xlu0 %548, %v423
      %v550 = vpop.permute.xlu0 %549
      %553 = vset.pattern.permute.xlu0 0
      %554 = vperm.xlu0 %553, %v424
      %v555 = vpop.permute.xlu0 %554
      %558 = vset.pattern.permute.xlu0 0
      %559 = vperm.xlu0 %558, %v425
      %v560 = vpop.permute.xlu0 %559
      %563 = vset.pattern.permute.xlu0 0
      %564 = vperm.xlu0 %563, %v426
      %v565 = vpop.permute.xlu0 %564
      %568 = vset.pattern.permute.xlu0 0
      %569 = vperm.xlu0 %568, %v427
      %v570 = vpop.permute.xlu0 %569
      %573 = vset.pattern.permute.xlu0 0
      %574 = vperm.xlu0 %573, %v428
      %v575 = vpop.permute.xlu0 %574
      %578 = vset.pattern.permute.xlu0 0
      %579 = vperm.xlu0 %578, %v429
      %v580 = vpop.permute.xlu0 %579
      %583 = vset.pattern.permute.xlu0 0
      %584 = vperm.xlu0 %583, %v430
      %v585 = vpop.permute.xlu0 %584
      %588 = vset.pattern.permute.xlu0 0
      %589 = vperm.xlu0 %588, %v431
      %v590 = vpop.permute.xlu0 %589
      %v592 = vmul.f32 %v336, %v435
      %v593 = vmul.f32 %v337, %v435
      %v594 = vmul.f32 %v338, %v440
      %v595 = vmul.f32 %v339, %v440
      %v596 = vmul.f32 %v340, %v445
      %v597 = vmul.f32 %v341, %v445
      %v598 = vmul.f32 %v342, %v450
      %v599 = vmul.f32 %v343, %v450
      %v600 = vmul.f32 %v344, %v455
      %v601 = vmul.f32 %v345, %v455
      %v602 = vmul.f32 %v346, %v460
      %v603 = vmul.f32 %v347, %v460
      %v604 = vmul.f32 %v348, %v465
      %v605 = vmul.f32 %v349, %v465
      %v606 = vmul.f32 %v350, %v470
      %v607 = vmul.f32 %v351, %v470
      %v608 = vmul.f32 %v352, %v475
      %v609 = vmul.f32 %v353, %v475
      %v610 = vmul.f32 %v354, %v480
      %v611 = vmul.f32 %v355, %v480
      %v612 = vmul.f32 %v356, %v485
      %v613 = vmul.f32 %v357, %v485
      %v614 = vmul.f32 %v358, %v490
      %v615 = vmul.f32 %v359, %v490
      %v616 = vmul.f32 %v360, %v495
      %v617 = vmul.f32 %v361, %v495
      %v618 = vmul.f32 %v362, %v500
      %v619 = vmul.f32 %v363, %v500
      %v620 = vmul.f32 %v364, %v505
      %v621 = vmul.f32 %v365, %v505
      %v622 = vmul.f32 %v366, %v510
      %v623 = vmul.f32 %v367, %v510
      %v624 = vmul.f32 %v368, %v515
      %v625 = vmul.f32 %v369, %v515
      %v626 = vmul.f32 %v370, %v520
      %v627 = vmul.f32 %v371, %v520
      %v628 = vmul.f32 %v372, %v525
      %v629 = vmul.f32 %v373, %v525
      %v630 = vmul.f32 %v374, %v530
      %v631 = vmul.f32 %v375, %v530
      %v632 = vmul.f32 %v376, %v535
      %v633 = vmul.f32 %v377, %v535
      %v634 = vmul.f32 %v378, %v540
      %v635 = vmul.f32 %v379, %v540
      %v636 = vmul.f32 %v380, %v545
      %v637 = vmul.f32 %v381, %v545
      %v638 = vmul.f32 %v382, %v550
      %v639 = vmul.f32 %v383, %v550
      %v640 = vmul.f32 %v384, %v555
      %v641 = vmul.f32 %v385, %v555
      %v642 = vmul.f32 %v386, %v560
      %v643 = vmul.f32 %v387, %v560
      %v644 = vmul.f32 %v388, %v565
      %v645 = vmul.f32 %v389, %v565
      %v646 = vmul.f32 %v390, %v570
      %v647 = vmul.f32 %v391, %v570
      %v648 = vmul.f32 %v392, %v575
      %v649 = vmul.f32 %v393, %v575
      %v650 = vmul.f32 %v394, %v580
      %v651 = vmul.f32 %v395, %v580
      %v652 = vmul.f32 %v396, %v585
      %v653 = vmul.f32 %v397, %v585
      %v654 = vmul.f32 %v398, %v590
      %v655 = vmul.f32 %v399, %v590
      %v656 = vld [vmem:[%s2] sm:$0xff]
      %v657 = vld [vmem:[%s2 + $0x8] sm:$0xff]
      %v658 = vld [vmem:[%s2 + $0x10] sm:$0xff]
      %v659 = vld [vmem:[%s2 + $0x18] sm:$0xff]
      %v660 = vld [vmem:[%s2 + $0x20] sm:$0xff]
      %v661 = vld [vmem:[%s2 + $0x28] sm:$0xff]
      %v662 = vld [vmem:[%s2 + $0x30] sm:$0xff]
      %v663 = vld [vmem:[%s2 + $0x38] sm:$0xff]
      %v664 = vld [vmem:[%s2 + $0x40] sm:$0xff]
      %v665 = vld [vmem:[%s2 + $0x48] sm:$0xff]
      %v666 = vld [vmem:[%s2 + $0x50] sm:$0xff]
      %v667 = vld [vmem:[%s2 + $0x58] sm:$0xff]
      %v668 = vld [vmem:[%s2 + $0x60] sm:$0xff]
      %v669 = vld [vmem:[%s2 + $0x68] sm:$0xff]
      %v670 = vld [vmem:[%s2 + $0x70] sm:$0xff]
      %v671 = vld [vmem:[%s2 + $0x78] sm:$0xff]
      %v672 = vld [vmem:[%s2 + $0x80] sm:$0xff]
      %v673 = vld [vmem:[%s2 + $0x88] sm:$0xff]
      %v674 = vld [vmem:[%s2 + $0x90] sm:$0xff]
      %v675 = vld [vmem:[%s2 + $0x98] sm:$0xff]
      %v676 = vld [vmem:[%s2 + $0xa0] sm:$0xff]
      %v677 = vld [vmem:[%s2 + $0xa8] sm:$0xff]
      %v678 = vld [vmem:[%s2 + $0xb0] sm:$0xff]
      %v679 = vld [vmem:[%s2 + $0xb8] sm:$0xff]
      %v680 = vld [vmem:[%s2 + $0xc0] sm:$0xff]
      %v681 = vld [vmem:[%s2 + $0xc8] sm:$0xff]
      %v682 = vld [vmem:[%s2 + $0xd0] sm:$0xff]
      %v683 = vld [vmem:[%s2 + $0xd8] sm:$0xff]
      %v684 = vld [vmem:[%s2 + $0xe0] sm:$0xff]
      %v685 = vld [vmem:[%s2 + $0xe8] sm:$0xff]
      %v686 = vld [vmem:[%s2 + $0xf0] sm:$0xff]
      %v687 = vld [vmem:[%s2 + $0xf8] sm:$0xff]
      %689 = vset.pattern.permute.xlu0 0
      %690 = vperm.xlu0 %689, %v656
      %v691 = vpop.permute.xlu0 %690
      %694 = vset.pattern.permute.xlu0 0
      %695 = vperm.xlu0 %694, %v657
      %v696 = vpop.permute.xlu0 %695
      %699 = vset.pattern.permute.xlu0 0
      %700 = vperm.xlu0 %699, %v658
      %v701 = vpop.permute.xlu0 %700
      %704 = vset.pattern.permute.xlu0 0
      %705 = vperm.xlu0 %704, %v659
      %v706 = vpop.permute.xlu0 %705
      %709 = vset.pattern.permute.xlu0 0
      %710 = vperm.xlu0 %709, %v660
      %v711 = vpop.permute.xlu0 %710
      %714 = vset.pattern.permute.xlu0 0
      %715 = vperm.xlu0 %714, %v661
      %v716 = vpop.permute.xlu0 %715
      %719 = vset.pattern.permute.xlu0 0
      %720 = vperm.xlu0 %719, %v662
      %v721 = vpop.permute.xlu0 %720
      %724 = vset.pattern.permute.xlu0 0
      %725 = vperm.xlu0 %724, %v663
      %v726 = vpop.permute.xlu0 %725
      %729 = vset.pattern.permute.xlu0 0
      %730 = vperm.xlu0 %729, %v664
      %v731 = vpop.permute.xlu0 %730
      %734 = vset.pattern.permute.xlu0 0
      %735 = vperm.xlu0 %734, %v665
      %v736 = vpop.permute.xlu0 %735
      %739 = vset.pattern.permute.xlu0 0
      %740 = vperm.xlu0 %739, %v666
      %v741 = vpop.permute.xlu0 %740
      %744 = vset.pattern.permute.xlu0 0
      %745 = vperm.xlu0 %744, %v667
      %v746 = vpop.permute.xlu0 %745
      %749 = vset.pattern.permute.xlu0 0
      %750 = vperm.xlu0 %749, %v668
      %v751 = vpop.permute.xlu0 %750
      %754 = vset.pattern.permute.xlu0 0
      %755 = vperm.xlu0 %754, %v669
      %v756 = vpop.permute.xlu0 %755
      %759 = vset.pattern.permute.xlu0 0
      %760 = vperm.xlu0 %759, %v670
      %v761 = vpop.permute.xlu0 %760
      %764 = vset.pattern.permute.xlu0 0
      %765 = vperm.xlu0 %764, %v671
      %v766 = vpop.permute.xlu0 %765
      %769 = vset.pattern.permute.xlu0 0
      %770 = vperm.xlu0 %769, %v672
      %v771 = vpop.permute.xlu0 %770
      %774 = vset.pattern.permute.xlu0 0
      %775 = vperm.xlu0 %774, %v673
      %v776 = vpop.permute.xlu0 %775
      %779 = vset.pattern.permute.xlu0 0
      %780 = vperm.xlu0 %779, %v674
      %v781 = vpop.permute.xlu0 %780
      %784 = vset.pattern.permute.xlu0 0
      %785 = vperm.xlu0 %784, %v675
      %v786 = vpop.permute.xlu0 %785
      %789 = vset.pattern.permute.xlu0 0
      %790 = vperm.xlu0 %789, %v676
      %v791 = vpop.permute.xlu0 %790
      %794 = vset.pattern.permute.xlu0 0
      %795 = vperm.xlu0 %794, %v677
      %v796 = vpop.permute.xlu0 %795
      %799 = vset.pattern.permute.xlu0 0
      %800 = vperm.xlu0 %799, %v678
      %v801 = vpop.permute.xlu0 %800
      %804 = vset.pattern.permute.xlu0 0
      %805 = vperm.xlu0 %804, %v679
      %v806 = vpop.permute.xlu0 %805
      %809 = vset.pattern.permute.xlu0 0
      %810 = vperm.xlu0 %809, %v680
      %v811 = vpop.permute.xlu0 %810
      %814 = vset.pattern.permute.xlu0 0
      %815 = vperm.xlu0 %814, %v681
      %v816 = vpop.permute.xlu0 %815
      %819 = vset.pattern.permute.xlu0 0
      %820 = vperm.xlu0 %819, %v682
      %v821 = vpop.permute.xlu0 %820
      %824 = vset.pattern.permute.xlu0 0
      %825 = vperm.xlu0 %824, %v683
      %v826 = vpop.permute.xlu0 %825
      %829 = vset.pattern.permute.xlu0 0
      %830 = vperm.xlu0 %829, %v684
      %v831 = vpop.permute.xlu0 %830
      %834 = vset.pattern.permute.xlu0 0
      %835 = vperm.xlu0 %834, %v685
      %v836 = vpop.permute.xlu0 %835
      %839 = vset.pattern.permute.xlu0 0
      %840 = vperm.xlu0 %839, %v686
      %v841 = vpop.permute.xlu0 %840
      %844 = vset.pattern.permute.xlu0 0
      %845 = vperm.xlu0 %844, %v687
      %v846 = vpop.permute.xlu0 %845
      %v848 = vadd.f32 %v592, %v691
      %v849 = vadd.f32 %v593, %v691
      %v850 = vadd.f32 %v594, %v696
      %v851 = vadd.f32 %v595, %v696
      %v852 = vadd.f32 %v596, %v701
      %v853 = vadd.f32 %v597, %v701
      %v854 = vadd.f32 %v598, %v706
      %v855 = vadd.f32 %v599, %v706
      %v856 = vadd.f32 %v600, %v711
      %v857 = vadd.f32 %v601, %v711
      %v858 = vadd.f32 %v602, %v716
      %v859 = vadd.f32 %v603, %v716
      %v860 = vadd.f32 %v604, %v721
      %v861 = vadd.f32 %v605, %v721
      %v862 = vadd.f32 %v606, %v726
      %v863 = vadd.f32 %v607, %v726
      %v864 = vadd.f32 %v608, %v731
      %v865 = vadd.f32 %v609, %v731
      %v866 = vadd.f32 %v610, %v736
      %v867 = vadd.f32 %v611, %v736
      %v868 = vadd.f32 %v612, %v741
      %v869 = vadd.f32 %v613, %v741
      %v870 = vadd.f32 %v614, %v746
      %v871 = vadd.f32 %v615, %v746
      %v872 = vadd.f32 %v616, %v751
      %v873 = vadd.f32 %v617, %v751
      %v874 = vadd.f32 %v618, %v756
      %v875 = vadd.f32 %v619, %v756
      %v876 = vadd.f32 %v620, %v761
      %v877 = vadd.f32 %v621, %v761
      %v878 = vadd.f32 %v622, %v766
      %v879 = vadd.f32 %v623, %v766
      %v880 = vadd.f32 %v624, %v771
      %v881 = vadd.f32 %v625, %v771
      %v882 = vadd.f32 %v626, %v776
      %v883 = vadd.f32 %v627, %v776
      %v884 = vadd.f32 %v628, %v781
      %v885 = vadd.f32 %v629, %v781
      %v886 = vadd.f32 %v630, %v786
      %v887 = vadd.f32 %v631, %v786
      %v888 = vadd.f32 %v632, %v791
      %v889 = vadd.f32 %v633, %v791
      %v890 = vadd.f32 %v634, %v796
      %v891 = vadd.f32 %v635, %v796
      %v892 = vadd.f32 %v636, %v801
      %v893 = vadd.f32 %v637, %v801
      %v894 = vadd.f32 %v638, %v806
      %v895 = vadd.f32 %v639, %v806
      %v896 = vadd.f32 %v640, %v811
      %v897 = vadd.f32 %v641, %v811
      %v898 = vadd.f32 %v642, %v816
      %v899 = vadd.f32 %v643, %v816
      %v900 = vadd.f32 %v644, %v821
      %v901 = vadd.f32 %v645, %v821
      %v902 = vadd.f32 %v646, %v826
      %v903 = vadd.f32 %v647, %v826
      %v904 = vadd.f32 %v648, %v831
      %v905 = vadd.f32 %v649, %v831
      %v906 = vadd.f32 %v650, %v836
      %v907 = vadd.f32 %v651, %v836
      %v908 = vadd.f32 %v652, %v841
      %v909 = vadd.f32 %v653, %v841
      %v910 = vadd.f32 %v654, %v846
      %v911 = vadd.f32 %v655, %v846
      %v912 = vmax.f32 %v848, 0.0
      %v913 = vmax.f32 %v849, 0.0
      %v914 = vmax.f32 %v850, 0.0
      %v915 = vmax.f32 %v851, 0.0
      %v916 = vmax.f32 %v852, 0.0
      %v917 = vmax.f32 %v853, 0.0
      %v918 = vmax.f32 %v854, 0.0
      %v919 = vmax.f32 %v855, 0.0
      %v920 = vmax.f32 %v856, 0.0
      %v921 = vmax.f32 %v857, 0.0
      %v922 = vmax.f32 %v858, 0.0
      %v923 = vmax.f32 %v859, 0.0
      %v924 = vmax.f32 %v860, 0.0
      %v925 = vmax.f32 %v861, 0.0
      %v926 = vmax.f32 %v862, 0.0
      %v927 = vmax.f32 %v863, 0.0
      %v928 = vmax.f32 %v864, 0.0
      %v929 = vmax.f32 %v865, 0.0
      %v930 = vmax.f32 %v866, 0.0
      %v931 = vmax.f32 %v867, 0.0
      %v932 = vmax.f32 %v868, 0.0
      %v933 = vmax.f32 %v869, 0.0
      %v934 = vmax.f32 %v870, 0.0
      %v935 = vmax.f32 %v871, 0.0
      %v936 = vmax.f32 %v872, 0.0
      %v937 = vmax.f32 %v873, 0.0
      %v938 = vmax.f32 %v874, 0.0
      %v939 = vmax.f32 %v875, 0.0
      %v940 = vmax.f32 %v876, 0.0
      %v941 = vmax.f32 %v877, 0.0
      %v942 = vmax.f32 %v878, 0.0
      %v943 = vmax.f32 %v879, 0.0
      %v944 = vmax.f32 %v880, 0.0
      %v945 = vmax.f32 %v881, 0.0
      %v946 = vmax.f32 %v882, 0.0
      %v947 = vmax.f32 %v883, 0.0
      %v948 = vmax.f32 %v884, 0.0
      %v949 = vmax.f32 %v885, 0.0
      %v950 = vmax.f32 %v886, 0.0
      %v951 = vmax.f32 %v887, 0.0
      %v952 = vmax.f32 %v888, 0.0
      %v953 = vmax.f32 %v889, 0.0
      %v954 = vmax.f32 %v890, 0.0
      %v955 = vmax.f32 %v891, 0.0
      %v956 = vmax.f32 %v892, 0.0
      %v957 = vmax.f32 %v893, 0.0
      %v958 = vmax.f32 %v894, 0.0
      %v959 = vmax.f32 %v895, 0.0
      %v960 = vmax.f32 %v896, 0.0
      %v961 = vmax.f32 %v897, 0.0
      %v962 = vmax.f32 %v898, 0.0
      %v963 = vmax.f32 %v899, 0.0
      %v964 = vmax.f32 %v900, 0.0
      %v965 = vmax.f32 %v901, 0.0
      %v966 = vmax.f32 %v902, 0.0
      %v967 = vmax.f32 %v903, 0.0
      %v968 = vmax.f32 %v904, 0.0
      %v969 = vmax.f32 %v905, 0.0
      %v970 = vmax.f32 %v906, 0.0
      %v971 = vmax.f32 %v907, 0.0
      %v972 = vmax.f32 %v908, 0.0
      %v973 = vmax.f32 %v909, 0.0
      %v974 = vmax.f32 %v910, 0.0
      %v975 = vmax.f32 %v911, 0.0
      %v976 = vld [vmem:[%s3] sm:$0xff]
      %v977 = vld [vmem:[%s3 + $0x8] sm:$0xff]
      %v978 = vld [vmem:[%s3 + $0x10] sm:$0xff]
      %v979 = vld [vmem:[%s3 + $0x18] sm:$0xff]
      %v980 = vld [vmem:[%s3 + $0x20] sm:$0xff]
      %v981 = vld [vmem:[%s3 + $0x28] sm:$0xff]
      %v982 = vld [vmem:[%s3 + $0x30] sm:$0xff]
      %v983 = vld [vmem:[%s3 + $0x38] sm:$0xff]
      %v984 = vld [vmem:[%s3 + $0x40] sm:$0xff]
      %v985 = vld [vmem:[%s3 + $0x48] sm:$0xff]
      %v986 = vld [vmem:[%s3 + $0x50] sm:$0xff]
      %v987 = vld [vmem:[%s3 + $0x58] sm:$0xff]
      %v988 = vld [vmem:[%s3 + $0x60] sm:$0xff]
      %v989 = vld [vmem:[%s3 + $0x68] sm:$0xff]
      %v990 = vld [vmem:[%s3 + $0x70] sm:$0xff]
      %v991 = vld [vmem:[%s3 + $0x78] sm:$0xff]
      %v992 = vld [vmem:[%s3 + $0x80] sm:$0xff]
      %v993 = vld [vmem:[%s3 + $0x88] sm:$0xff]
      %v994 = vld [vmem:[%s3 + $0x90] sm:$0xff]
      %v995 = vld [vmem:[%s3 + $0x98] sm:$0xff]
      %v996 = vld [vmem:[%s3 + $0xa0] sm:$0xff]
      %v997 = vld [vmem:[%s3 + $0xa8] sm:$0xff]
      %v998 = vld [vmem:[%s3 + $0xb0] sm:$0xff]
      %v999 = vld [vmem:[%s3 + $0xb8] sm:$0xff]
      %v1000 = vld [vmem:[%s3 + $0xc0] sm:$0xff]
      %v1001 = vld [vmem:[%s3 + $0xc8] sm:$0xff]
      %v1002 = vld [vmem:[%s3 + $0xd0] sm:$0xff]
      %v1003 = vld [vmem:[%s3 + $0xd8] sm:$0xff]
      %v1004 = vld [vmem:[%s3 + $0xe0] sm:$0xff]
      %v1005 = vld [vmem:[%s3 + $0xe8] sm:$0xff]
      %v1006 = vld [vmem:[%s3 + $0xf0] sm:$0xff]
      %v1007 = vld [vmem:[%s3 + $0xf8] sm:$0xff]
      %v1008 = vld [vmem:[%s3 + $0x100] sm:$0xff]
      %v1009 = vld [vmem:[%s3 + $0x108] sm:$0xff]
      %v1010 = vld [vmem:[%s3 + $0x110] sm:$0xff]
      %v1011 = vld [vmem:[%s3 + $0x118] sm:$0xff]
      %v1012 = vld [vmem:[%s3 + $0x120] sm:$0xff]
      %v1013 = vld [vmem:[%s3 + $0x128] sm:$0xff]
      %v1014 = vld [vmem:[%s3 + $0x130] sm:$0xff]
      %v1015 = vld [vmem:[%s3 + $0x138] sm:$0xff]
      %v1016 = vld [vmem:[%s3 + $0x140] sm:$0xff]
      %v1017 = vld [vmem:[%s3 + $0x148] sm:$0xff]
      %v1018 = vld [vmem:[%s3 + $0x150] sm:$0xff]
      %v1019 = vld [vmem:[%s3 + $0x158] sm:$0xff]
      %v1020 = vld [vmem:[%s3 + $0x160] sm:$0xff]
      %v1021 = vld [vmem:[%s3 + $0x168] sm:$0xff]
      %v1022 = vld [vmem:[%s3 + $0x170] sm:$0xff]
      %v1023 = vld [vmem:[%s3 + $0x178] sm:$0xff]
      %v1024 = vld [vmem:[%s3 + $0x180] sm:$0xff]
      %v1025 = vld [vmem:[%s3 + $0x188] sm:$0xff]
      %v1026 = vld [vmem:[%s3 + $0x190] sm:$0xff]
      %v1027 = vld [vmem:[%s3 + $0x198] sm:$0xff]
      %v1028 = vld [vmem:[%s3 + $0x1a0] sm:$0xff]
      %v1029 = vld [vmem:[%s3 + $0x1a8] sm:$0xff]
      %v1030 = vld [vmem:[%s3 + $0x1b0] sm:$0xff]
      %v1031 = vld [vmem:[%s3 + $0x1b8] sm:$0xff]
      %v1032 = vld [vmem:[%s3 + $0x1c0] sm:$0xff]
      %v1033 = vld [vmem:[%s3 + $0x1c8] sm:$0xff]
      %v1034 = vld [vmem:[%s3 + $0x1d0] sm:$0xff]
      %v1035 = vld [vmem:[%s3 + $0x1d8] sm:$0xff]
      %v1036 = vld [vmem:[%s3 + $0x1e0] sm:$0xff]
      %v1037 = vld [vmem:[%s3 + $0x1e8] sm:$0xff]
      %v1038 = vld [vmem:[%s3 + $0x1f0] sm:$0xff]
      %v1039 = vld [vmem:[%s3 + $0x1f8] sm:$0xff]
      %1040 = vmatprep.subr.mxu0 %v913
      %1041 = vmatpush1.msra.mxu0 %v912
      %1042 = vmatprep.subr.mxu0 %v915
      %1043 = vmatpush1.msra.mxu0 %v914
      %1044 = vmatprep.subr.mxu0 %v917
      %1045 = vmatpush1.msra.mxu0 %v916
      %1046 = vmatprep.subr.mxu0 %v919
      %1047 = vmatpush1.msra.mxu0 %v918
      %1048 = vmatprep.subr.mxu0 %v921
      %1049 = vmatpush1.msra.mxu0 %v920
      %1050 = vmatprep.subr.mxu0 %v923
      %1051 = vmatpush1.msra.mxu0 %v922
      %1052 = vmatprep.subr.mxu0 %v925
      %1053 = vmatpush1.msra.mxu0 %v924
      %1054 = vmatprep.subr.mxu0 %v927
      %1055 = vmatpush1.msra.mxu0 %v926
      %1056 = vmatprep.subr.mxu0 %v929
      %1057 = vmatpush1.msra.mxu0 %v928
      %1058 = vmatprep.subr.mxu0 %v931
      %1059 = vmatpush1.msra.mxu0 %v930
      %1060 = vmatprep.subr.mxu0 %v933
      %1061 = vmatpush1.msra.mxu0 %v932
      %1062 = vmatprep.subr.mxu0 %v935
      %1063 = vmatpush1.msra.mxu0 %v934
      %1064 = vmatprep.subr.mxu0 %v937
      %1065 = vmatpush1.msra.mxu0 %v936
      %1066 = vmatprep.subr.mxu0 %v939
      %1067 = vmatpush1.msra.mxu0 %v938
      %1068 = vmatprep.subr.mxu0 %v941
      %1069 = vmatpush1.msra.mxu0 %v940
      %1070 = vmatprep.subr.mxu0 %v943
      %1071 = vmatpush1.msra.mxu0 %v942
      %1072 = vmatprep.subr.mxu0 %v945
      %1073 = vmatpush1.msra.mxu0 %v944
      %1074 = vmatprep.subr.mxu0 %v947
      %1075 = vmatpush1.msra.mxu0 %v946
      %1076 = vmatprep.subr.mxu0 %v949
      %1077 = vmatpush1.msra.mxu0 %v948
      %1078 = vmatprep.subr.mxu0 %v951
      %1079 = vmatpush1.msra.mxu0 %v950
      %1080 = vmatprep.subr.mxu0 %v953
      %1081 = vmatpush1.msra.mxu0 %v952
      %1082 = vmatprep.subr.mxu0 %v955
      %1083 = vmatpush1.msra.mxu0 %v954
      %1084 = vmatprep.subr.mxu0 %v957
      %1085 = vmatpush1.msra.mxu0 %v956
      %1086 = vmatprep.subr.mxu0 %v959
      %1087 = vmatpush1.msra.mxu0 %v958
      %1088 = vmatprep.subr.mxu0 %v961
      %1089 = vmatpush1.msra.mxu0 %v960
      %1090 = vmatprep.subr.mxu0 %v963
      %1091 = vmatpush1.msra.mxu0 %v962
      %1092 = vmatprep.subr.mxu0 %v965
      %1093 = vmatpush1.msra.mxu0 %v964
      %1094 = vmatprep.subr.mxu0 %v967
      %1095 = vmatpush1.msra.mxu0 %v966
      %1096 = vmatprep.subr.mxu0 %v969
      %1097 = vmatpush1.msra.mxu0 %v968
      %1098 = vmatprep.subr.mxu0 %v971
      %1099 = vmatpush1.msra.mxu0 %v970
      %1100 = vmatprep.subr.mxu0 %v973
      %1101 = vmatpush1.msra.mxu0 %v972
      %1102 = vmatprep.subr.mxu0 %v975
      %1103 = vmatpush1.msra.mxu0 %v974
      %1104 = vmatprep.mubr.f32.mxu0 %v977
      %1105 = vmatmul.mubr.f32.gmra.mrb[0].mxu0 %v976
      %v1106 = vpop.f32.mrb[0].mxu0
      %v1107 = vadd.f32 0.0, %v1106
      %v1108 = vpop.f32.mrb[0].mxu0
      %v1109 = vadd.f32 0.0, %v1108
      %1110 = vmatprep.mubr.f32.mxu0 %v979
      %1111 = vmatmul.mubr.f32.gmra.mrb[0].mxu0 %v978
      %v1112 = vpop.f32.mrb[0].mxu0
      %v1113 = vadd.f32 0.0, %v1112
      %v1114 = vpop.f32.mrb[0].mxu0
      %v1115 = vadd.f32 0.0, %v1114
      %1116 = vmatprep.mubr.f32.mxu0 %v981
      %1117 = vmatmul.mubr.f32.gmra.mrb[0].mxu0 %v980
      %v1118 = vpop.f32.mrb[0].mxu0
      %v1119 = vadd.f32 0.0, %v1118
      %v1120 = vpop.f32.mrb[0].mxu0
      %v1121 = vadd.f32 0.0, %v1120
      %1122 = vmatprep.mubr.f32.mxu0 %v983
      %1123 = vmatmul.mubr.f32.gmra.mrb[0].mxu0 %v982
      %v1124 = vpop.f32.mrb[0].mxu0
      %v1125 = vadd.f32 0.0, %v1124
      %v1126 = vpop.f32.mrb[0].mxu0
      %v1127 = vadd.f32 0.0, %v1126
      %1128 = vmatprep.mubr.f32.mxu0 %v985
      %1129 = vmatmul.mubr.f32.gmra.mrb[0].mxu0 %v984
      %v1130 = vpop.f32.mrb[0].mxu0
      %v1131 = vadd.f32 0.0, %v1130
      %v1132 = vpop.f32.mrb[0].mxu0
      %v1133 = vadd.f32 0.0, %v1132
      %1134 = vmatprep.mubr.f32.mxu0 %v987
      %1135 = vmatmul.mubr.f32.gmra.mrb[0].mxu0 %v986
      %v1136 = vpop.f32.mrb[0].mxu0
      %v1137 = vadd.f32 0.0, %v1136
      %v1138 = vpop.f32.mrb[0].mxu0
      %v1139 = vadd.f32 0.0, %v1138
      %1140 = vmatprep.mubr.f32.mxu0 %v989
      %1141 = vmatmul.mubr.f32.gmra.mrb[0].mxu0 %v988
      %v1142 = vpop.f32.mrb[0].mxu0
      %v1143 = vadd.f32 0.0, %v1142
      %v1144 = vpop.f32.mrb[0].mxu0
      %v1145 = vadd.f32 0.0, %v1144
      %1146 = vmatprep.mubr.f32.mxu0 %v991
      %1147 = vmatmul.mubr.f32.gmra.mrb[0].mxu0 %v990
      %v1148 = vpop.f32.mrb[0].mxu0
      %v1149 = vadd.f32 0.0, %v1148
      %v1150 = vpop.f32.mrb[0].mxu0
      %v1151 = vadd.f32 0.0, %v1150
      %1152 = vmatprep.mubr.f32.mxu0 %v993
      %1153 = vmatmul.mubr.f32.gmra.mrb[0].mxu0 %v992
      %v1154 = vpop.f32.mrb[0].mxu0
      %v1155 = vadd.f32 0.0, %v1154
      %v1156 = vpop.f32.mrb[0].mxu0
      %v1157 = vadd.f32 0.0, %v1156
      %1158 = vmatprep.mubr.f32.mxu0 %v995
      %1159 = vmatmul.mubr.f32.gmra.mrb[0].mxu0 %v994
      %v1160 = vpop.f32.mrb[0].mxu0
      %v1161 = vadd.f32 0.0, %v1160
      %v1162 = vpop.f32.mrb[0].mxu0
      %v1163 = vadd.f32 0.0, %v1162
      %1164 = vmatprep.mubr.f32.mxu0 %v997
      %1165 = vmatmul.mubr.f32.gmra.mrb[0].mxu0 %v996
      %v1166 = vpop.f32.mrb[0].mxu0
      %v1167 = vadd.f32 0.0, %v1166
      %v1168 = vpop.f32.mrb[0].mxu0
      %v1169 = vadd.f32 0.0, %v1168
      %1170 = vmatprep.mubr.f32.mxu0 %v999
      %1171 = vmatmul.mubr.f32.gmra.mrb[0].mxu0 %v998
      %v1172 = vpop.f32.mrb[0].mxu0
      %v1173 = vadd.f32 0.0, %v1172
      %v1174 = vpop.f32.mrb[0].mxu0
      %v1175 = vadd.f32 0.0, %v1174
      %1176 = vmatprep.mubr.f32.mxu0 %v1001
      %1177 = vmatmul.mubr.f32.gmra.mrb[0].mxu0 %v1000
      %v1178 = vpop.f32.mrb[0].mxu0
      %v1179 = vadd.f32 0.0, %v1178
      %v1180 = vpop.f32.mrb[0].mxu0
      %v1181 = vadd.f32 0.0, %v1180
      %1182 = vmatprep.mubr.f32.mxu0 %v1003
      %1183 = vmatmul.mubr.f32.gmra.mrb[0].mxu0 %v1002
      %v1184 = vpop.f32.mrb[0].mxu0
      %v1185 = vadd.f32 0.0, %v1184
      %v1186 = vpop.f32.mrb[0].mxu0
      %v1187 = vadd.f32 0.0, %v1186
      %1188 = vmatprep.mubr.f32.mxu0 %v1005
      %1189 = vmatmul.mubr.f32.gmra.mrb[0].mxu0 %v1004
      %v1190 = vpop.f32.mrb[0].mxu0
      %v1191 = vadd.f32 0.0, %v1190
      %v1192 = vpop.f32.mrb[0].mxu0
      %v1193 = vadd.f32 0.0, %v1192
      %1194 = vmatprep.mubr.f32.mxu0 %v1007
      %1195 = vmatmul.mubr.f32.gmra.mrb[0].mxu0 %v1006
      %v1196 = vpop.f32.mrb[0].mxu0
      %v1197 = vadd.f32 0.0, %v1196
      %v1198 = vpop.f32.mrb[0].mxu0
      %v1199 = vadd.f32 0.0, %v1198
      %1200 = vmatprep.mubr.f32.mxu0 %v1009
      %1201 = vmatmul.mubr.f32.gmra.mrb[0].mxu0 %v1008
      %v1202 = vpop.f32.mrb[0].mxu0
      %v1203 = vadd.f32 0.0, %v1202
      %v1204 = vpop.f32.mrb[0].mxu0
      %v1205 = vadd.f32 0.0, %v1204
      %1206 = vmatprep.mubr.f32.mxu0 %v1011
      %1207 = vmatmul.mubr.f32.gmra.mrb[0].mxu0 %v1010
      %v1208 = vpop.f32.mrb[0].mxu0
      %v1209 = vadd.f32 0.0, %v1208
      %v1210 = vpop.f32.mrb[0].mxu0
      %v1211 = vadd.f32 0.0, %v1210
      %1212 = vmatprep.mubr.f32.mxu0 %v1013
      %1213 = vmatmul.mubr.f32.gmra.mrb[0].mxu0 %v1012
      %v1214 = vpop.f32.mrb[0].mxu0
      %v1215 = vadd.f32 0.0, %v1214
      %v1216 = vpop.f32.mrb[0].mxu0
      %v1217 = vadd.f32 0.0, %v1216
      %1218 = vmatprep.mubr.f32.mxu0 %v1015
      %1219 = vmatmul.mubr.f32.gmra.mrb[0].mxu0 %v1014
      %v1220 = vpop.f32.mrb[0].mxu0
      %v1221 = vadd.f32 0.0, %v1220
      %v1222 = vpop.f32.mrb[0].mxu0
      %v1223 = vadd.f32 0.0, %v1222
      %1224 = vmatprep.mubr.f32.mxu0 %v1017
      %1225 = vmatmul.mubr.f32.gmra.mrb[0].mxu0 %v1016
      %v1226 = vpop.f32.mrb[0].mxu0
      %v1227 = vadd.f32 0.0, %v1226
      %v1228 = vpop.f32.mrb[0].mxu0
      %v1229 = vadd.f32 0.0, %v1228
      %1230 = vmatprep.mubr.f32.mxu0 %v1019
      %1231 = vmatmul.mubr.f32.gmra.mrb[0].mxu0 %v1018
      %v1232 = vpop.f32.mrb[0].mxu0
      %v1233 = vadd.f32 0.0, %v1232
      %v1234 = vpop.f32.mrb[0].mxu0
      %v1235 = vadd.f32 0.0, %v1234
      %1236 = vmatprep.mubr.f32.mxu0 %v1021
      %1237 = vmatmul.mubr.f32.gmra.mrb[0].mxu0 %v1020
      %v1238 = vpop.f32.mrb[0].mxu0
      %v1239 = vadd.f32 0.0, %v1238
      %v1240 = vpop.f32.mrb[0].mxu0
      %v1241 = vadd.f32 0.0, %v1240
      %1242 = vmatprep.mubr.f32.mxu0 %v1023
      %1243 = vmatmul.mubr.f32.gmra.mrb[0].mxu0 %v1022
      %v1244 = vpop.f32.mrb[0].mxu0
      %v1245 = vadd.f32 0.0, %v1244
      %v1246 = vpop.f32.mrb[0].mxu0
      %v1247 = vadd.f32 0.0, %v1246
      %1248 = vmatprep.mubr.f32.mxu0 %v1025
      %1249 = vmatmul.mubr.f32.gmra.mrb[0].mxu0 %v1024
      %v1250 = vpop.f32.mrb[0].mxu0
      %v1251 = vadd.f32 0.0, %v1250
      %v1252 = vpop.f32.mrb[0].mxu0
      %v1253 = vadd.f32 0.0, %v1252
      %1254 = vmatprep.mubr.f32.mxu0 %v1027
      %1255 = vmatmul.mubr.f32.gmra.mrb[0].mxu0 %v1026
      %v1256 = vpop.f32.mrb[0].mxu0
      %v1257 = vadd.f32 0.0, %v1256
      %v1258 = vpop.f32.mrb[0].mxu0
      %v1259 = vadd.f32 0.0, %v1258
      %1260 = vmatprep.mubr.f32.mxu0 %v1029
      %1261 = vmatmul.mubr.f32.gmra.mrb[0].mxu0 %v1028
      %v1262 = vpop.f32.mrb[0].mxu0
      %v1263 = vadd.f32 0.0, %v1262
      %v1264 = vpop.f32.mrb[0].mxu0
      %v1265 = vadd.f32 0.0, %v1264
      %1266 = vmatprep.mubr.f32.mxu0 %v1031
      %1267 = vmatmul.mubr.f32.gmra.mrb[0].mxu0 %v1030
      %v1268 = vpop.f32.mrb[0].mxu0
      %v1269 = vadd.f32 0.0, %v1268
      %v1270 = vpop.f32.mrb[0].mxu0
      %v1271 = vadd.f32 0.0, %v1270
      %1272 = vmatprep.mubr.f32.mxu0 %v1033
      %1273 = vmatmul.mubr.f32.gmra.mrb[0].mxu0 %v1032
      %v1274 = vpop.f32.mrb[0].mxu0
      %v1275 = vadd.f32 0.0, %v1274
      %v1276 = vpop.f32.mrb[0].mxu0
      %v1277 = vadd.f32 0.0, %v1276
      %1278 = vmatprep.mubr.f32.mxu0 %v1035
      %1279 = vmatmul.mubr.f32.gmra.mrb[0].mxu0 %v1034
      %v1280 = vpop.f32.mrb[0].mxu0
      %v1281 = vadd.f32 0.0, %v1280
      %v1282 = vpop.f32.mrb[0].mxu0
      %v1283 = vadd.f32 0.0, %v1282
      %1284 = vmatprep.mubr.f32.mxu0 %v1037
      %1285 = vmatmul.mubr.f32.gmra.mrb[0].mxu0 %v1036
      %v1286 = vpop.f32.mrb[0].mxu0
      %v1287 = vadd.f32 0.0, %v1286
      %v1288 = vpop.f32.mrb[0].mxu0
      %v1289 = vadd.f32 0.0, %v1288
      %1290 = vmatprep.mubr.f32.mxu0 %v1039
      %1291 = vmatmul.mubr.f32.gmra.mrb[0].mxu0 %v1038
      %v1292 = vpop.f32.mrb[0].mxu0
      %v1293 = vadd.f32 0.0, %v1292
      %v1294 = vpop.f32.mrb[0].mxu0
      %v1295 = vadd.f32 0.0, %v1294
      %1296 = vdwg.mxu0
      %1297 = vst [vmem:[%s316] sm:$0xff] %v1107
      %1298 = vst [vmem:[%s316 + $0x8] sm:$0xff] %v1109
      %1299 = vst [vmem:[%s316 + $0x10] sm:$0xff] %v1113
      %1300 = vst [vmem:[%s316 + $0x18] sm:$0xff] %v1115
      %1301 = vst [vmem:[%s316 + $0x20] sm:$0xff] %v1119
      %1302 = vst [vmem:[%s316 + $0x28] sm:$0xff] %v1121
      %1303 = vst [vmem:[%s316 + $0x30] sm:$0xff] %v1125
      %1304 = vst [vmem:[%s316 + $0x38] sm:$0xff] %v1127
      %1305 = vst [vmem:[%s316 + $0x40] sm:$0xff] %v1131
      %1306 = vst [vmem:[%s316 + $0x48] sm:$0xff] %v1133
      %1307 = vst [vmem:[%s316 + $0x50] sm:$0xff] %v1137
      %1308 = vst [vmem:[%s316 + $0x58] sm:$0xff] %v1139
      %1309 = vst [vmem:[%s316 + $0x60] sm:$0xff] %v1143
      %1310 = vst [vmem:[%s316 + $0x68] sm:$0xff] %v1145
      %1311 = vst [vmem:[%s316 + $0x70] sm:$0xff] %v1149
      %1312 = vst [vmem:[%s316 + $0x78] sm:$0xff] %v1151
      %1313 = vst [vmem:[%s316 + $0x80] sm:$0xff] %v1155
      %1314 = vst [vmem:[%s316 + $0x88] sm:$0xff] %v1157
      %1315 = vst [vmem:[%s316 + $0x90] sm:$0xff] %v1161
      %1316 = vst [vmem:[%s316 + $0x98] sm:$0xff] %v1163
      %1317 = vst [vmem:[%s316 + $0xa0] sm:$0xff] %v1167
      %1318 = vst [vmem:[%s316 + $0xa8] sm:$0xff] %v1169
      %1319 = vst [vmem:[%s316 + $0xb0] sm:$0xff] %v1173
      %1320 = vst [vmem:[%s316 + $0xb8] sm:$0xff] %v1175
      %1321 = vst [vmem:[%s316 + $0xc0] sm:$0xff] %v1179
      %1322 = vst [vmem:[%s316 + $0xc8] sm:$0xff] %v1181
      %1323 = vst [vmem:[%s316 + $0xd0] sm:$0xff] %v1185
      %1324 = vst [vmem:[%s316 + $0xd8] sm:$0xff] %v1187
      %1325 = vst [vmem:[%s316 + $0xe0] sm:$0xff] %v1191
      %1326 = vst [vmem:[%s316 + $0xe8] sm:$0xff] %v1193
      %1327 = vst [vmem:[%s316 + $0xf0] sm:$0xff] %v1197
      %1328 = vst [vmem:[%s316 + $0xf8] sm:$0xff] %v1199
      %1329 = vst [vmem:[%s316 + $0x100] sm:$0xff] %v1203
      %1330 = vst [vmem:[%s316 + $0x108] sm:$0xff] %v1205
      %1331 = vst [vmem:[%s316 + $0x110] sm:$0xff] %v1209
      %1332 = vst [vmem:[%s316 + $0x118] sm:$0xff] %v1211
      %1333 = vst [vmem:[%s316 + $0x120] sm:$0xff] %v1215
      %1334 = vst [vmem:[%s316 + $0x128] sm:$0xff] %v1217
      %1335 = vst [vmem:[%s316 + $0x130] sm:$0xff] %v1221
      %1336 = vst [vmem:[%s316 + $0x138] sm:$0xff] %v1223
      %1337 = vst [vmem:[%s316 + $0x140] sm:$0xff] %v1227
      %1338 = vst [vmem:[%s316 + $0x148] sm:$0xff] %v1229
      %1339 = vst [vmem:[%s316 + $0x150] sm:$0xff] %v1233
      %1340 = vst [vmem:[%s316 + $0x158] sm:$0xff] %v1235
      %1341 = vst [vmem:[%s316 + $0x160] sm:$0xff] %v1239
      %1342 = vst [vmem:[%s316 + $0x168] sm:$0xff] %v1241
      %1343 = vst [vmem:[%s316 + $0x170] sm:$0xff] %v1245
      %1344 = vst [vmem:[%s316 + $0x178] sm:$0xff] %v1247
      %1345 = vst [vmem:[%s316 + $0x180] sm:$0xff] %v1251
      %1346 = vst [vmem:[%s316 + $0x188] sm:$0xff] %v1253
      %1347 = vst [vmem:[%s316 + $0x190] sm:$0xff] %v1257
      %1348 = vst [vmem:[%s316 + $0x198] sm:$0xff] %v1259
      %1349 = vst [vmem:[%s316 + $0x1a0] sm:$0xff] %v1263
      %1350 = vst [vmem:[%s316 + $0x1a8] sm:$0xff] %v1265
      %1351 = vst [vmem:[%s316 + $0x1b0] sm:$0xff] %v1269
      %1352 = vst [vmem:[%s316 + $0x1b8] sm:$0xff] %v1271
      %1353 = vst [vmem:[%s316 + $0x1c0] sm:$0xff] %v1275
      %1354 = vst [vmem:[%s316 + $0x1c8] sm:$0xff] %v1277
      %1355 = vst [vmem:[%s316 + $0x1d0] sm:$0xff] %v1281
      %1356 = vst [vmem:[%s316 + $0x1d8] sm:$0xff] %v1283
      %1357 = vst [vmem:[%s316 + $0x1e0] sm:$0xff] %v1287
      %1358 = vst [vmem:[%s316 + $0x1e8] sm:$0xff] %v1289
      %1359 = vst [vmem:[%s316 + $0x1f0] sm:$0xff] %v1293
      %1360 = vst [vmem:[%s316 + $0x1f8] sm:$0xff] %v1295
      %v1361 = vadd.f32 %v1107, %v1109
      %1362 = vadd.xlane.f32.xlu0 %v1361
      %v1363 = vpop.xlane.xlu0 %1362
      %v1364 = vadd.f32 %v1113, %v1115
      %1365 = vadd.xlane.f32.xlu0 %v1364
      %v1366 = vpop.xlane.xlu0 %1365
      %v1367 = vadd.f32 %v1119, %v1121
      %1368 = vadd.xlane.f32.xlu0 %v1367
      %v1369 = vpop.xlane.xlu0 %1368
      %v1370 = vadd.f32 %v1125, %v1127
      %1371 = vadd.xlane.f32.xlu0 %v1370
      %v1372 = vpop.xlane.xlu0 %1371
      %v1373 = vadd.f32 %v1131, %v1133
      %1374 = vadd.xlane.f32.xlu0 %v1373
      %v1375 = vpop.xlane.xlu0 %1374
      %v1376 = vadd.f32 %v1137, %v1139
      %1377 = vadd.xlane.f32.xlu0 %v1376
      %v1378 = vpop.xlane.xlu0 %1377
      %v1379 = vadd.f32 %v1143, %v1145
      %1380 = vadd.xlane.f32.xlu0 %v1379
      %v1381 = vpop.xlane.xlu0 %1380
      %v1382 = vadd.f32 %v1149, %v1151
      %1383 = vadd.xlane.f32.xlu0 %v1382
      %v1384 = vpop.xlane.xlu0 %1383
      %v1385 = vadd.f32 %v1155, %v1157
      %1386 = vadd.xlane.f32.xlu0 %v1385
      %v1387 = vpop.xlane.xlu0 %1386
      %v1388 = vadd.f32 %v1161, %v1163
      %1389 = vadd.xlane.f32.xlu0 %v1388
      %v1390 = vpop.xlane.xlu0 %1389
      %v1391 = vadd.f32 %v1167, %v1169
      %1392 = vadd.xlane.f32.xlu0 %v1391
      %v1393 = vpop.xlane.xlu0 %1392
      %v1394 = vadd.f32 %v1173, %v1175
      %1395 = vadd.xlane.f32.xlu0 %v1394
      %v1396 = vpop.xlane.xlu0 %1395
      %v1397 = vadd.f32 %v1179, %v1181
      %1398 = vadd.xlane.f32.xlu0 %v1397
      %v1399 = vpop.xlane.xlu0 %1398
      %v1400 = vadd.f32 %v1185, %v1187
      %1401 = vadd.xlane.f32.xlu0 %v1400
      %v1402 = vpop.xlane.xlu0 %1401
      %v1403 = vadd.f32 %v1191, %v1193
      %1404 = vadd.xlane.f32.xlu0 %v1403
      %v1405 = vpop.xlane.xlu0 %1404
      %v1406 = vadd.f32 %v1197, %v1199
      %1407 = vadd.xlane.f32.xlu0 %v1406
      %v1408 = vpop.xlane.xlu0 %1407
      %v1409 = vadd.f32 %v1203, %v1205
      %1410 = vadd.xlane.f32.xlu0 %v1409
      %v1411 = vpop.xlane.xlu0 %1410
      %v1412 = vadd.f32 %v1209, %v1211
      %1413 = vadd.xlane.f32.xlu0 %v1412
      %v1414 = vpop.xlane.xlu0 %1413
      %v1415 = vadd.f32 %v1215, %v1217
      %1416 = vadd.xlane.f32.xlu0 %v1415
      %v1417 = vpop.xlane.xlu0 %1416
      %v1418 = vadd.f32 %v1221, %v1223
      %1419 = vadd.xlane.f32.xlu0 %v1418
      %v1420 = vpop.xlane.xlu0 %1419
      %v1421 = vadd.f32 %v1227, %v1229
      %1422 = vadd.xlane.f32.xlu0 %v1421
      %v1423 = vpop.xlane.xlu0 %1422
      %v1424 = vadd.f32 %v1233, %v1235
      %1425 = vadd.xlane.f32.xlu0 %v1424
      %v1426 = vpop.xlane.xlu0 %1425
      %v1427 = vadd.f32 %v1239, %v1241
      %1428 = vadd.xlane.f32.xlu0 %v1427
      %v1429 = vpop.xlane.xlu0 %1428
      %v1430 = vadd.f32 %v1245, %v1247
      %1431 = vadd.xlane.f32.xlu0 %v1430
      %v1432 = vpop.xlane.xlu0 %1431
      %v1433 = vadd.f32 %v1251, %v1253
      %1434 = vadd.xlane.f32.xlu0 %v1433
      %v1435 = vpop.xlane.xlu0 %1434
      %v1436 = vadd.f32 %v1257, %v1259
      %1437 = vadd.xlane.f32.xlu0 %v1436
      %v1438 = vpop.xlane.xlu0 %1437
      %v1439 = vadd.f32 %v1263, %v1265
      %1440 = vadd.xlane.f32.xlu0 %v1439
      %v1441 = vpop.xlane.xlu0 %1440
      %v1442 = vadd.f32 %v1269, %v1271
      %1443 = vadd.xlane.f32.xlu0 %v1442
      %v1444 = vpop.xlane.xlu0 %1443
      %v1445 = vadd.f32 %v1275, %v1277
      %1446 = vadd.xlane.f32.xlu0 %v1445
      %v1447 = vpop.xlane.xlu0 %1446
      %v1448 = vadd.f32 %v1281, %v1283
      %1449 = vadd.xlane.f32.xlu0 %v1448
      %v1450 = vpop.xlane.xlu0 %1449
      %v1451 = vadd.f32 %v1287, %v1289
      %1452 = vadd.xlane.f32.xlu0 %v1451
      %v1453 = vpop.xlane.xlu0 %1452
      %v1454 = vadd.f32 %v1293, %v1295
      %1455 = vadd.xlane.f32.xlu0 %v1454
      %v1456 = vpop.xlane.xlu0 %1455
      %vm1457 = vcmask 7168
      %1458 = vst.msk [vmem:[%s326] sm:$0xff] %vm1457, %v1363
      %1459 = vst.msk [vmem:[%s326 + $0x8] sm:$0xff] %vm1457, %v1366
      %1460 = vst.msk [vmem:[%s326 + $0x10] sm:$0xff] %vm1457, %v1369
      %1461 = vst.msk [vmem:[%s326 + $0x18] sm:$0xff] %vm1457, %v1372
      %1462 = vst.msk [vmem:[%s326 + $0x20] sm:$0xff] %vm1457, %v1375
      %1463 = vst.msk [vmem:[%s326 + $0x28] sm:$0xff] %vm1457, %v1378
      %1464 = vst.msk [vmem:[%s326 + $0x30] sm:$0xff] %vm1457, %v1381
      %1465 = vst.msk [vmem:[%s326 + $0x38] sm:$0xff] %vm1457, %v1384
      %1466 = vst.msk [vmem:[%s326 + $0x40] sm:$0xff] %vm1457, %v1387
      %1467 = vst.msk [vmem:[%s326 + $0x48] sm:$0xff] %vm1457, %v1390
      %1468 = vst.msk [vmem:[%s326 + $0x50] sm:$0xff] %vm1457, %v1393
      %1469 = vst.msk [vmem:[%s326 + $0x58] sm:$0xff] %vm1457, %v1396
      %1470 = vst.msk [vmem:[%s326 + $0x60] sm:$0xff] %vm1457, %v1399
      %1471 = vst.msk [vmem:[%s326 + $0x68] sm:$0xff] %vm1457, %v1402
      %1472 = vst.msk [vmem:[%s326 + $0x70] sm:$0xff] %vm1457, %v1405
      %1473 = vst.msk [vmem:[%s326 + $0x78] sm:$0xff] %vm1457, %v1408
      %1474 = vst.msk [vmem:[%s326 + $0x80] sm:$0xff] %vm1457, %v1411
      %1475 = vst.msk [vmem:[%s326 + $0x88] sm:$0xff] %vm1457, %v1414
      %1476 = vst.msk [vmem:[%s326 + $0x90] sm:$0xff] %vm1457, %v1417
      %1477 = vst.msk [vmem:[%s326 + $0x98] sm:$0xff] %vm1457, %v1420
      %1478 = vst.msk [vmem:[%s326 + $0xa0] sm:$0xff] %vm1457, %v1423
      %1479 = vst.msk [vmem:[%s326 + $0xa8] sm:$0xff] %vm1457, %v1426
      %1480 = vst.msk [vmem:[%s326 + $0xb0] sm:$0xff] %vm1457, %v1429
      %1481 = vst.msk [vmem:[%s326 + $0xb8] sm:$0xff] %vm1457, %v1432
      %1482 = vst.msk [vmem:[%s326 + $0xc0] sm:$0xff] %vm1457, %v1435
      %1483 = vst.msk [vmem:[%s326 + $0xc8] sm:$0xff] %vm1457, %v1438
      %1484 = vst.msk [vmem:[%s326 + $0xd0] sm:$0xff] %vm1457, %v1441
      %1485 = vst.msk [vmem:[%s326 + $0xd8] sm:$0xff] %vm1457, %v1444
      %1486 = vst.msk [vmem:[%s326 + $0xe0] sm:$0xff] %vm1457, %v1447
      %1487 = vst.msk [vmem:[%s326 + $0xe8] sm:$0xff] %vm1457, %v1450
      %1488 = vst.msk [vmem:[%s326 + $0xf0] sm:$0xff] %vm1457, %v1453
      %1489 = vst.msk [vmem:[%s326 + $0xf8] sm:$0xff] %vm1457, %v1456
      %v1490 = vmul.f32 %v1107, %v1107
      %v1491 = vmul.f32 %v1109, %v1109
      %v1492 = vmul.f32 %v1113, %v1113
      %v1493 = vmul.f32 %v1115, %v1115
      %v1494 = vmul.f32 %v1119, %v1119
      %v1495 = vmul.f32 %v1121, %v1121
      %v1496 = vmul.f32 %v1125, %v1125
      %v1497 = vmul.f32 %v1127, %v1127
      %v1498 = vmul.f32 %v1131, %v1131
      %v1499 = vmul.f32 %v1133, %v1133
      %v1500 = vmul.f32 %v1137, %v1137
      %v1501 = vmul.f32 %v1139, %v1139
      %v1502 = vmul.f32 %v1143, %v1143
      %v1503 = vmul.f32 %v1145, %v1145
      %v1504 = vmul.f32 %v1149, %v1149
      %v1505 = vmul.f32 %v1151, %v1151
      %v1506 = vmul.f32 %v1155, %v1155
      %v1507 = vmul.f32 %v1157, %v1157
      %v1508 = vmul.f32 %v1161, %v1161
      %v1509 = vmul.f32 %v1163, %v1163
      %v1510 = vmul.f32 %v1167, %v1167
      %v1511 = vmul.f32 %v1169, %v1169
      %v1512 = vmul.f32 %v1173, %v1173
      %v1513 = vmul.f32 %v1175, %v1175
      %v1514 = vmul.f32 %v1179, %v1179
      %v1515 = vmul.f32 %v1181, %v1181
      %v1516 = vmul.f32 %v1185, %v1185
      %v1517 = vmul.f32 %v1187, %v1187
      %v1518 = vmul.f32 %v1191, %v1191
      %v1519 = vmul.f32 %v1193, %v1193
      %v1520 = vmul.f32 %v1197, %v1197
      %v1521 = vmul.f32 %v1199, %v1199
      %v1522 = vmul.f32 %v1203, %v1203
      %v1523 = vmul.f32 %v1205, %v1205
      %v1524 = vmul.f32 %v1209, %v1209
      %v1525 = vmul.f32 %v1211, %v1211
      %v1526 = vmul.f32 %v1215, %v1215
      %v1527 = vmul.f32 %v1217, %v1217
      %v1528 = vmul.f32 %v1221, %v1221
      %v1529 = vmul.f32 %v1223, %v1223
      %v1530 = vmul.f32 %v1227, %v1227
      %v1531 = vmul.f32 %v1229, %v1229
      %v1532 = vmul.f32 %v1233, %v1233
      %v1533 = vmul.f32 %v1235, %v1235
      %v1534 = vmul.f32 %v1239, %v1239
      %v1535 = vmul.f32 %v1241, %v1241
      %v1536 = vmul.f32 %v1245, %v1245
      %v1537 = vmul.f32 %v1247, %v1247
      %v1538 = vmul.f32 %v1251, %v1251
      %v1539 = vmul.f32 %v1253, %v1253
      %v1540 = vmul.f32 %v1257, %v1257
      %v1541 = vmul.f32 %v1259, %v1259
      %v1542 = vmul.f32 %v1263, %v1263
      %v1543 = vmul.f32 %v1265, %v1265
      %v1544 = vmul.f32 %v1269, %v1269
      %v1545 = vmul.f32 %v1271, %v1271
      %v1546 = vmul.f32 %v1275, %v1275
      %v1547 = vmul.f32 %v1277, %v1277
      %v1548 = vmul.f32 %v1281, %v1281
      %v1549 = vmul.f32 %v1283, %v1283
      %v1550 = vmul.f32 %v1287, %v1287
      %v1551 = vmul.f32 %v1289, %v1289
      %v1552 = vmul.f32 %v1293, %v1293
      %v1553 = vmul.f32 %v1295, %v1295
      %v1554 = vadd.f32 %v1490, %v1491
      %1555 = vadd.xlane.f32.xlu0 %v1554
      %v1556 = vpop.xlane.xlu0 %1555
      %v1557 = vadd.f32 %v1492, %v1493
      %1558 = vadd.xlane.f32.xlu0 %v1557
      %v1559 = vpop.xlane.xlu0 %1558
      %v1560 = vadd.f32 %v1494, %v1495
      %1561 = vadd.xlane.f32.xlu0 %v1560
      %v1562 = vpop.xlane.xlu0 %1561
      %v1563 = vadd.f32 %v1496, %v1497
      %1564 = vadd.xlane.f32.xlu0 %v1563
      %v1565 = vpop.xlane.xlu0 %1564
      %v1566 = vadd.f32 %v1498, %v1499
      %1567 = vadd.xlane.f32.xlu0 %v1566
      %v1568 = vpop.xlane.xlu0 %1567
      %v1569 = vadd.f32 %v1500, %v1501
      %1570 = vadd.xlane.f32.xlu0 %v1569
      %v1571 = vpop.xlane.xlu0 %1570
      %v1572 = vadd.f32 %v1502, %v1503
      %1573 = vadd.xlane.f32.xlu0 %v1572
      %v1574 = vpop.xlane.xlu0 %1573
      %v1575 = vadd.f32 %v1504, %v1505
      %1576 = vadd.xlane.f32.xlu0 %v1575
      %v1577 = vpop.xlane.xlu0 %1576
      %v1578 = vadd.f32 %v1506, %v1507
      %1579 = vadd.xlane.f32.xlu0 %v1578
      %v1580 = vpop.xlane.xlu0 %1579
      %v1581 = vadd.f32 %v1508, %v1509
      %1582 = vadd.xlane.f32.xlu0 %v1581
      %v1583 = vpop.xlane.xlu0 %1582
      %v1584 = vadd.f32 %v1510, %v1511
      %1585 = vadd.xlane.f32.xlu0 %v1584
      %v1586 = vpop.xlane.xlu0 %1585
      %v1587 = vadd.f32 %v1512, %v1513
      %1588 = vadd.xlane.f32.xlu0 %v1587
      %v1589 = vpop.xlane.xlu0 %1588
      %v1590 = vadd.f32 %v1514, %v1515
      %1591 = vadd.xlane.f32.xlu0 %v1590
      %v1592 = vpop.xlane.xlu0 %1591
      %v1593 = vadd.f32 %v1516, %v1517
      %1594 = vadd.xlane.f32.xlu0 %v1593
      %v1595 = vpop.xlane.xlu0 %1594
      %v1596 = vadd.f32 %v1518, %v1519
      %1597 = vadd.xlane.f32.xlu0 %v1596
      %v1598 = vpop.xlane.xlu0 %1597
      %v1599 = vadd.f32 %v1520, %v1521
      %1600 = vadd.xlane.f32.xlu0 %v1599
      %v1601 = vpop.xlane.xlu0 %1600
      %v1602 = vadd.f32 %v1522, %v1523
      %1603 = vadd.xlane.f32.xlu0 %v1602
      %v1604 = vpop.xlane.xlu0 %1603
      %v1605 = vadd.f32 %v1524, %v1525
      %1606 = vadd.xlane.f32.xlu0 %v1605
      %v1607 = vpop.xlane.xlu0 %1606
      %v1608 = vadd.f32 %v1526, %v1527
      %1609 = vadd.xlane.f32.xlu0 %v1608
      %v1610 = vpop.xlane.xlu0 %1609
      %v1611 = vadd.f32 %v1528, %v1529
      %1612 = vadd.xlane.f32.xlu0 %v1611
      %v1613 = vpop.xlane.xlu0 %1612
      %v1614 = vadd.f32 %v1530, %v1531
      %1615 = vadd.xlane.f32.xlu0 %v1614
      %v1616 = vpop.xlane.xlu0 %1615
      %v1617 = vadd.f32 %v1532, %v1533
      %1618 = vadd.xlane.f32.xlu0 %v1617
      %v1619 = vpop.xlane.xlu0 %1618
      %v1620 = vadd.f32 %v1534, %v1535
      %1621 = vadd.xlane.f32.xlu0 %v1620
      %v1622 = vpop.xlane.xlu0 %1621
      %v1623 = vadd.f32 %v1536, %v1537
      %1624 = vadd.xlane.f32.xlu0 %v1623
      %v1625 = vpop.xlane.xlu0 %1624
      %v1626 = vadd.f32 %v1538, %v1539
      %1627 = vadd.xlane.f32.xlu0 %v1626
      %v1628 = vpop.xlane.xlu0 %1627
      %v1629 = vadd.f32 %v1540, %v1541
      %1630 = vadd.xlane.f32.xlu0 %v1629
      %v1631 = vpop.xlane.xlu0 %1630
      %v1632 = vadd.f32 %v1542, %v1543
      %1633 = vadd.xlane.f32.xlu0 %v1632
      %v1634 = vpop.xlane.xlu0 %1633
      %v1635 = vadd.f32 %v1544, %v1545
      %1636 = vadd.xlane.f32.xlu0 %v1635
      %v1637 = vpop.xlane.xlu0 %1636
      %v1638 = vadd.f32 %v1546, %v1547
      %1639 = vadd.xlane.f32.xlu0 %v1638
      %v1640 = vpop.xlane.xlu0 %1639
      %v1641 = vadd.f32 %v1548, %v1549
      %1642 = vadd.xlane.f32.xlu0 %v1641
      %v1643 = vpop.xlane.xlu0 %1642
      %v1644 = vadd.f32 %v1550, %v1551
      %1645 = vadd.xlane.f32.xlu0 %v1644
      %v1646 = vpop.xlane.xlu0 %1645
      %v1647 = vadd.f32 %v1552, %v1553
      %1648 = vadd.xlane.f32.xlu0 %v1647
      %v1649 = vpop.xlane.xlu0 %1648
      %1650 = vst.msk [vmem:[%s335] sm:$0xff] %vm1457, %v1556
      %1651 = vst.msk [vmem:[%s335 + $0x8] sm:$0xff] %vm1457, %v1559
      %1652 = vst.msk [vmem:[%s335 + $0x10] sm:$0xff] %vm1457, %v1562
      %1653 = vst.msk [vmem:[%s335 + $0x18] sm:$0xff] %vm1457, %v1565
      %1654 = vst.msk [vmem:[%s335 + $0x20] sm:$0xff] %vm1457, %v1568
      %1655 = vst.msk [vmem:[%s335 + $0x28] sm:$0xff] %vm1457, %v1571
      %1656 = vst.msk [vmem:[%s335 + $0x30] sm:$0xff] %vm1457, %v1574
      %1657 = vst.msk [vmem:[%s335 + $0x38] sm:$0xff] %vm1457, %v1577
      %1658 = vst.msk [vmem:[%s335 + $0x40] sm:$0xff] %vm1457, %v1580
      %1659 = vst.msk [vmem:[%s335 + $0x48] sm:$0xff] %vm1457, %v1583
      %1660 = vst.msk [vmem:[%s335 + $0x50] sm:$0xff] %vm1457, %v1586
      %1661 = vst.msk [vmem:[%s335 + $0x58] sm:$0xff] %vm1457, %v1589
      %1662 = vst.msk [vmem:[%s335 + $0x60] sm:$0xff] %vm1457, %v1592
      %1663 = vst.msk [vmem:[%s335 + $0x68] sm:$0xff] %vm1457, %v1595
      %1664 = vst.msk [vmem:[%s335 + $0x70] sm:$0xff] %vm1457, %v1598
      %1665 = vst.msk [vmem:[%s335 + $0x78] sm:$0xff] %vm1457, %v1601
      %1666 = vst.msk [vmem:[%s335 + $0x80] sm:$0xff] %vm1457, %v1604
      %1667 = vst.msk [vmem:[%s335 + $0x88] sm:$0xff] %vm1457, %v1607
      %1668 = vst.msk [vmem:[%s335 + $0x90] sm:$0xff] %vm1457, %v1610
      %1669 = vst.msk [vmem:[%s335 + $0x98] sm:$0xff] %vm1457, %v1613
      %1670 = vst.msk [vmem:[%s335 + $0xa0] sm:$0xff] %vm1457, %v1616
      %1671 = vst.msk [vmem:[%s335 + $0xa8] sm:$0xff] %vm1457, %v1619
      %1672 = vst.msk [vmem:[%s335 + $0xb0] sm:$0xff] %vm1457, %v1622
      %1673 = vst.msk [vmem:[%s335 + $0xb8] sm:$0xff] %vm1457, %v1625
      %1674 = vst.msk [vmem:[%s335 + $0xc0] sm:$0xff] %vm1457, %v1628
      %1675 = vst.msk [vmem:[%s335 + $0xc8] sm:$0xff] %vm1457, %v1631
      %1676 = vst.msk [vmem:[%s335 + $0xd0] sm:$0xff] %vm1457, %v1634
      %1677 = vst.msk [vmem:[%s335 + $0xd8] sm:$0xff] %vm1457, %v1637
      %1678 = vst.msk [vmem:[%s335 + $0xe0] sm:$0xff] %vm1457, %v1640
      %1679 = vst.msk [vmem:[%s335 + $0xe8] sm:$0xff] %vm1457, %v1643
      %1680 = vst.msk [vmem:[%s335 + $0xf0] sm:$0xff] %vm1457, %v1646
      %1681 = vst.msk [vmem:[%s335 + $0xf8] sm:$0xff] %vm1457, %v1649
      %s1682 = smul.u32 2, %s23
      %p1683 = scmp.lt.s32.totalorder %s22, 1
      %s1684 = scalar_select %p1683, %s22, 1
      %p1685 = scmp.lt.s32.totalorder %s1682, 1
      %s1686 = scalar_select %p1685, %s1682, 1
      %s1687 = smul.addr %s1684, 64
      %s1688 = sadd.s32 %s1686, %s1687
      %s1689 = smul.addr %s1688, 8
      %s1690 = scalar_lea.vmem %s4, %s1689
      %p1691 = scmp.lt.s32.totalorder %s22, 1
      %s1692 = scalar_select %p1691, %s22, 1
      %p1693 = scmp.lt.s32.totalorder %s23, 0
      %s1694 = scalar_select %p1693, %s23, 0
      %s1695 = smul.addr %s1694, 32
      %s1696 = smul.addr %s1692, 32
      %s1697 = sadd.s32 %s1695, %s1696
      %s1698 = smul.addr %s1697, 8
      %s1699 = scalar_lea.vmem %s5, %s1698
      %p1700 = scmp.lt.s32.totalorder %s22, 1
      %s1701 = scalar_select %p1700, %s22, 1
      %p1702 = scmp.lt.s32.totalorder %s23, 0
      %s1703 = scalar_select %p1702, %s23, 0
      %s1704 = smul.addr %s1703, 32
      %s1705 = smul.addr %s1701, 32
      %s1706 = sadd.s32 %s1704, %s1705
      %s1707 = smul.addr %s1706, 8
      %s1708 = scalar_lea.vmem %s6, %s1707
      // Predicated region
      $region37: #{model_forward.4} parent=35 // pred_check
        %p1709 = pneg %p141
      $region38: #{model_forward.4} parent=35 // pred_check_branch
        %1711 = sbr.rel (%p1709) target = $region40
      $region39: #{model_forward.4} parent=35 // pred_region
        %s1712 = smul.u32 2, %s23
      $region40: #{model_forward.4} parent=35 // pred_fallthru
        _
      // Predicated region
      $region41: #{model_forward.4} parent=35 // pred_check
        %p1713 = pneg %p169
      $region42: #{model_forward.4} parent=35 // pred_check_branch
        %1715 = sbr.rel (%p1713) target = $region44
      $region43: #{model_forward.4} parent=35 // pred_region
        _
      $region44: #{model_forward.4} parent=35 // pred_fallthru
        _
      // Predicated region
      $region45: #{model_forward.4} parent=35 // pred_check
        %p1716 = pneg %p197
      $region46: #{model_forward.4} parent=35 // pred_check_branch
        %1718 = sbr.rel (%p1716) target = $region48
      $region47: #{model_forward.4} parent=35 // pred_region
        _
      $region48: #{model_forward.4} parent=35 // pred_fallthru
        _
    $region36: #{model_forward.4} parent=5 // pred_fallthru
      _
    %p1719 = scmp.le.s32.totalorder 2, %s13
    // Predicated region
    $region49: #{model_forward.4} parent=5 // pred_check
      %p1720 = pneg %p1719
    $region50: #{model_forward.4} parent=5 // pred_check_branch
      %1722 = sbr.rel (%p1720) target = $region52
    $region51: #{model_forward.4} parent=5 // pred_region
      %s1723 = ssub.s32 %s13, 2
      // Predicated region
      $region53: #{model_forward.4} parent=51 // pred_check
        %p1724 = pneg %p147
      $region54: #{model_forward.4} parent=51 // pred_check_branch
        %1726 = sbr.rel (%p1724) target = $region56
      $region55: #{model_forward.4} parent=51 // pred_region
        %s1727 = smul.u32 2, %s25
        %p1728 = scmp.lt.s32.totalorder %s24, 1
        %s1729 = scalar_select %p1728, %s24, 1
        %p1730 = scmp.lt.s32.totalorder %s1727, 1
        %s1731 = scalar_select %p1730, %s1727, 1
        %s1732 = smul.addr %s1729, 64
        %s1733 = sadd.s32 %s1731, %s1732
        %s1734 = smul.addr %s1733, 8
        %s1735 = scalar_lea.vmem %s4, %s1734
      $region56: #{model_forward.4} parent=51 // pred_fallthru
        _
      // Predicated region
      $region57: #{model_forward.4} parent=51 // pred_check
        %p1736 = pneg %p175
      $region58: #{model_forward.4} parent=51 // pred_check_branch
        %1738 = sbr.rel (%p1736) target = $region60
      $region59: #{model_forward.4} parent=51 // pred_region
        %p1739 = scmp.lt.s32.totalorder %s24, 1
        %s1740 = scalar_select %p1739, %s24, 1
        %p1741 = scmp.lt.s32.totalorder %s25, 0
        %s1742 = scalar_select %p1741, %s25, 0
        %s1743 = smul.addr %s1742, 32
        %s1744 = smul.addr %s1740, 32
        %s1745 = sadd.s32 %s1743, %s1744
        %s1746 = smul.addr %s1745, 8
        %s1747 = scalar_lea.vmem %s5, %s1746
      $region60: #{model_forward.4} parent=51 // pred_fallthru
        _
      // Predicated region
      $region61: #{model_forward.4} parent=51 // pred_check
        %p1748 = pneg %p203
      $region62: #{model_forward.4} parent=51 // pred_check_branch
        %1750 = sbr.rel (%p1748) target = $region64
      $region63: #{model_forward.4} parent=51 // pred_region
        %p1751 = scmp.lt.s32.totalorder %s24, 1
        %s1752 = scalar_select %p1751, %s24, 1
        %p1753 = scmp.lt.s32.totalorder %s25, 0
        %s1754 = scalar_select %p1753, %s25, 0
        %s1755 = smul.addr %s1754, 32
        %s1756 = smul.addr %s1752, 32
        %s1757 = sadd.s32 %s1755, %s1756
        %s1758 = smul.addr %s1757, 8
        %s1759 = scalar_lea.vmem %s6, %s1758
      $region64: #{model_forward.4} parent=51 // pred_fallthru
        _
    $region52: #{model_forward.4} parent=5 // pred_fallthru
      _
  $region6: #{model_forward.4} parent=0 // loop_footer
    %s17 = sadd.s32 1, %s13
  $region7: #{model_forward.4} parent=0 // loop_footer_branch
    %12 = sbr.rel target = $region3
  $region8: #{model_forward.4} parent=0 // loop_exit
    _

</llo_original>
